<compile_context>
chip_gen: v7x
topology: tpu7x:2x2x1
jax: 0.10.0
libtpu: 0.0.40
codegen_flags: <defaults>
</compile_context>

<pallas_src>
import functools

import jax
import jax.numpy as jnp
from jax.experimental import pallas as pl
from jax.experimental.pallas import tpu as pltpu

LANE = 128  # channel dims are padded to a multiple of the TPU lane width


def _round_up(x, m):
    return (x + m - 1) // m * m


def _vmem_limit_bytes():
    """Chip-aware scoped-VMEM limit: ~48 MiB on 64 MiB parts (v7x), ~96 MiB on
    128 MiB parts (v5e/v6e), leaving headroom for Mosaic-internal scratch."""
    cap = 128 * 1024 * 1024
    try:
        cap = int(getattr(pltpu.get_tpu_info(), "vmem_capacity_bytes", cap))
    except Exception:
        pass
    return min(cap * 3 // 4, 100 * 1024 * 1024)


def _pick_row_tile(h, w, cp_in, cp_out, budget_bytes):
    """Largest row tile (divisor of h) whose per-step VMEM footprint fits."""
    bf = 2

    def est(th):
        io = 2 * th * w * (cp_in + cp_out) * bf            # double-buffered x / out tiles
        halo = 2 * 2 * w * cp_in * bf                      # top / bottom halo rows
        wts = 2 * (cp_in * cp_out + 9 * cp_out * cp_out
                   + (cp_out + cp_in) * cp_out) * bf + 6 * cp_out * 4
        vals = (th + 2) * w * cp_out * (3 * 4 + 3 * bf)    # h1 + shifted taps
        vals += th * w * cp_out * (9 * bf + 2 * 4)         # im2col patch + f32 results
        return io + halo + wts + vals

    best = 1
    for t in range(1, h + 1):
        if h % t == 0 and est(t) <= budget_bytes:
            best = t
    return best


# ------------------------------ fused kernel --------------------------------

def _resnext_fused_kernel(x_ref, xtop_ref, xbot_ref,
                          w1_ref, w2_ref, w3sc_ref,
                          b1_ref, b2_ref, b3_ref,
                          o_ref, *, th, width):
    i = pl.program_id(1)
    n_ht = pl.num_programs(1)
    w = width
    c = b1_ref.shape[1]

    x_cur = x_ref[0]                                     # (th, w, cin) bf16
    cin = x_cur.shape[-1]
    # halo-extended input tile: image rows [start-1, start..start+th-1, start+th]
    x_ext = jnp.concatenate([xtop_ref[0], x_cur, xbot_ref[0]], axis=0)

    # ---- stage 1: conv1 (1x1) + folded BN + ReLU, ONE matmul over the
    #      halo-extended tile (better MXU fill than 3 small matmuls).
    h1 = jnp.dot(x_ext.reshape((th + 2) * w, cin), w1_ref[...],
                 preferred_element_type=jnp.float32)
    h1 = jnp.maximum(h1 + b1_ref[0], 0.0)                # ((th+2)*w, c) f32

    # vertical padding=1 of conv2: zero the halo rows at the image edges
    row = jax.lax.broadcasted_iota(jnp.int32, (th + 2, w, 1), 0)
    row_ok = jnp.logical_and(jnp.logical_or(row > 0, i > 0),
                             jnp.logical_or(row < th + 1, i < n_ht - 1))
    h1_3d = jnp.where(row_ok, h1.reshape(th + 2, w, c), 0.0)
    h1 = h1_3d.reshape((th + 2) * w, c)

    # ---- stage 2: grouped 3x3 conv + BN + ReLU as ONE im2col matmul (K=9c).
    #      Horizontal kx=+-1 taps come from XLU sublane rolls of the flattened
    #      rows + a one-column mask (the wrap-around entries land exactly in
    #      the masked columns, so the roll is exact).
    col = jax.lax.broadcasted_iota(jnp.int32, (th + 2, w, 1), 1)
    left = jnp.where(col == 0, 0.0,
                     pltpu.roll(h1, 1, axis=0).reshape(th + 2, w, c))
    right = jnp.where(col == w - 1, 0.0,
                      pltpu.roll(h1, (th + 2) * w - 1, axis=0).reshape(th + 2, w, c))
    taps = (left.astype(jnp.bfloat16),                   # kx = 0  (x-1)
            h1_3d.astype(jnp.bfloat16),                  # kx = 1  (x)
            right.astype(jnp.bfloat16))                  # kx = 2  (x+1)
    pieces = [taps[kx][ky:ky + th] for ky in range(3) for kx in range(3)]
    patch = jnp.concatenate(pieces, axis=-1).reshape(th * w, 9 * c)
    h2 = jnp.dot(patch, w2_ref[...], preferred_element_type=jnp.float32)
    h2 = jnp.maximum(h2 + b2_ref[0], 0.0).astype(jnp.bfloat16)

    # ---- stage 3: conv3 (1x1)+BN fused with shortcut conv (1x1)+BN as ONE
    #      matmul (K = c + cin); the residual add happens inside the MXU and
    #      the two BN shifts were pre-summed on the host. Final ReLU, bf16 out.
    feat = jnp.concatenate([h2, x_cur.reshape(th * w, cin)], axis=-1)
    out = jnp.dot(feat, w3sc_ref[...], preferred_element_type=jnp.float32)
    out = jnp.maximum(out + b3_ref[0], 0.0)
    o_ref[0] = out.reshape(th, w, c).astype(o_ref.dtype)


# ------------------------------ block wrapper --------------------------------

def resnext_block_forward(x_nchw, kp):
    n, in_ch, h, w = x_nchw.shape
    cp_in, cp_out, out_ch = kp["cp_in"], kp["cp_out"], kp["out_ch"]

    vmem_limit = _vmem_limit_bytes()
    th = _pick_row_tile(h, w, cp_in, cp_out, budget_bytes=(vmem_limit * 4) // 5)
    n_ht = h // th

    # NCHW -> NHWC, pad channels to the lane width, activations in bf16.
    x = jnp.transpose(x_nchw, (0, 2, 3, 1))
    x = jnp.pad(x, ((0, 0), (0, 0), (0, 0), (0, cp_in - in_ch))).astype(jnp.bfloat16)

    kernel = functools.partial(_resnext_fused_kernel, th=th, width=w)

    out = pl.pallas_call(
        kernel,
        out_shape=jax.ShapeDtypeStruct((n, h, w, cp_out), jnp.bfloat16),
        grid_spec=pltpu.PrefetchScalarGridSpec(
            num_scalar_prefetch=0,
            grid=(n, n_ht),
            in_specs=[
                # current row-tile of x plus one-row halos above / below
                pl.BlockSpec((1, th, w, cp_in), lambda ni, ti: (ni, ti, 0, 0)),
                pl.BlockSpec((1, 1, w, cp_in),
                             lambda ni, ti: (ni, jnp.maximum(ti * th - 1, 0), 0, 0)),
                pl.BlockSpec((1, 1, w, cp_in),
                             lambda ni, ti: (ni, jnp.minimum((ti + 1) * th, h - 1), 0, 0)),
                # weights (BN scales pre-folded) and BN shifts
                pl.BlockSpec((cp_in, cp_out), lambda ni, ti: (0, 0)),
                pl.BlockSpec((9 * cp_out, cp_out), lambda ni, ti: (0, 0)),
                pl.BlockSpec((cp_out + cp_in, cp_out), lambda ni, ti: (0, 0)),
                pl.BlockSpec((1, cp_out), lambda ni, ti: (0, 0)),
                pl.BlockSpec((1, cp_out), lambda ni, ti: (0, 0)),
                pl.BlockSpec((1, cp_out), lambda ni, ti: (0, 0)),
            ],
            out_specs=pl.BlockSpec((1, th, w, cp_out), lambda ni, ti: (ni, ti, 0, 0)),
        ),
        compiler_params=pltpu.CompilerParams(
            dimension_semantics=("parallel", "parallel"),
            vmem_limit_bytes=vmem_limit,
        ),
    )(x, x, x, kp["w1"], kp["w2"], kp["w3sc"], kp["b1"], kp["b2"], kp["b3"])

    out = out[..., :out_ch].astype(jnp.float32)   # drop channel padding, back to f32
    return jnp.transpose(out, (0, 3, 1, 2))       # NHWC -> NCHW


# ----------------------------- parameter setup ------------------------------

def init_params(key, in_ch, out_ch, cardinality):
    """Raw PyTorch-convention parameters (conv weights + BN running stats)."""
    ks = jax.random.split(key, 20)
    cpg = out_ch // cardinality
    p = {
        "w1": 0.2 * jax.random.normal(ks[0], (out_ch, in_ch, 1, 1), jnp.float32),
        "w2": 0.2 * jax.random.normal(ks[1], (out_ch, cpg, 3, 3), jnp.float32),
        "w3": 0.2 * jax.random.normal(ks[2], (out_ch, out_ch, 1, 1), jnp.float32),
        "wsc": 0.2 * jax.random.normal(ks[3], (out_ch, in_ch, 1, 1), jnp.float32),
    }
    for idx, name in enumerate(("bn1", "bn2", "bn3", "bnsc")):
        p[name + "_g"] = 1.0 + 0.1 * jax.random.normal(ks[4 + idx], (out_ch,), jnp.float32)
        p[name + "_b"] = 0.1 * jax.random.normal(ks[8 + idx], (out_ch,), jnp.float32)
        p[name + "_m"] = 0.1 * jax.random.normal(ks[12 + idx], (out_ch,), jnp.float32)
        p[name + "_v"] = 1.0 + jax.random.uniform(ks[16 + idx], (out_ch,), jnp.float32)
    return p


def prepare_kernel_params(p, cardinality, eps=1e-5):
    """Host-side precompute: fold BN scales into the weights, pad channels to
    128, lay the grouped 3x3 weight out as an im2col (9c, c) matrix and stack
    the conv3/shortcut weights into one (c+cin, c) matrix. Padded bias entries
    stay exactly zero so padded output lanes remain zero."""
    out_ch, in_ch = p["w1"].shape[0], p["w1"].shape[1]
    cpg = out_ch // cardinality
    cp_in, cp_out = _round_up(in_ch, LANE), _round_up(out_ch, LANE)

    def fold(pre):
        scale = p[pre + "_g"] / jnp.sqrt(p[pre + "_v"] + eps)
        shift = p[pre + "_b"] - p[pre + "_m"] * scale
        return scale, shift

    s1, b1 = fold("bn1")
    s2, b2 = fold("bn2")
    s3, b3 = fold("bn3")
    ssc, bsc = fold("bnsc")

    def pad2(m, rows, cols):
        return jnp.pad(m, ((0, rows - m.shape[0]), (0, cols - m.shape[1])))

    # 1x1 convs in matmul form (Cin, Cout), BN scale folded into output columns.
    w1 = pad2(p["w1"][:, :, 0, 0].T * s1[None, :], cp_in, cp_out)
    w3 = pad2(p["w3"][:, :, 0, 0].T * s3[None, :], cp_out, cp_out)
    wsc = pad2(p["wsc"][:, :, 0, 0].T * ssc[None, :], cp_in, cp_out)
    w3sc = jnp.concatenate([w3, wsc], axis=0)          # (cp_out+cp_in, cp_out)

    # Grouped 3x3 conv expanded to a dense block-diagonal weight, then laid out
    # as one im2col matrix (9*C, C): row block ky*3+kx holds that tap's weights.
    w2 = jnp.zeros((9, cp_out, cp_out), jnp.float32)
    for g in range(cardinality):
        rows = slice(g * cpg, (g + 1) * cpg)
        for ky in range(3):
            for kx in range(3):
                blk = p["w2"][rows, :, ky, kx].T * s2[rows][None, :]
                w2 = w2.at[ky * 3 + kx, rows, rows].set(blk)
    w2f = w2.reshape(9 * cp_out, cp_out)

    def padb(v):
        return jnp.pad(v, (0, cp_out - out_ch))[None, :].astype(jnp.float32)

    return {
        "w1": w1.astype(jnp.bfloat16),
        "w2": w2f.astype(jnp.bfloat16),
        "w3sc": w3sc.astype(jnp.bfloat16),
        "b1": padb(b1), "b2": padb(b2), "b3": padb(b3 + bsc),
        "cp_in": cp_in, "cp_out": cp_out, "in_ch": in_ch, "out_ch": out_ch,
    }


# --------------------------- pure-JAX reference -----------------------------

def reference_forward(x_nchw, p, cardinality, eps=1e-5):
    high = jax.lax.Precision.HIGHEST

    def conv(x, w, groups=1, pad=0):
        return jax.lax.conv_general_dilated(
            x, w, (1, 1), [(pad, pad), (pad, pad)],
            dimension_numbers=("NCHW", "OIHW", "NCHW"),
            feature_group_count=groups, precision=high)

    def bn(x, pre):
        scale = p[pre + "_g"] / jnp.sqrt(p[pre + "_v"] + eps)
        shift = p[pre + "_b"] - p[pre + "_m"] * scale
        return x * scale[None, :, None, None] + shift[None, :, None, None]

    relu = lambda t: jnp.maximum(t, 0.0)
    h = relu(bn(conv(x_nchw, p["w1"]), "bn1"))
    h = relu(bn(conv(h, p["w2"], groups=cardinality, pad=1), "bn2"))
    h = bn(conv(h, p["w3"]), "bn3")
    s = bn(conv(x_nchw, p["wsc"]), "bnsc")
    return relu(h + s)


# ------------------------------------ main -----------------------------------

if __name__ == "__main__":
    in_ch, out_ch, cardinality = 4, 8, 2
    n, h, w = 2, 16, 16

    key = jax.random.PRNGKey(0)
    k_x, k_p = jax.random.split(key)
    x = jax.random.normal(k_x, (n, in_ch, h, w), jnp.float32)

    params = init_params(k_p, in_ch, out_ch, cardinality)
    kparams = prepare_kernel_params(params, cardinality)

    out = jax.block_until_ready(resnext_block_forward(x, kparams))
    ref = reference_forward(x, params, cardinality)

    assert out.shape == (n, out_ch, h, w), out.shape
    err = float(jnp.max(jnp.abs(out - ref)))
    tol = 0.05 * float(jnp.max(jnp.abs(ref))) + 2e-2   # bf16 weights/activations/output
    assert err < tol, f"max abs error {err} (tol {tol})"
    print("KERNEL_OK")
</pallas_src>

<mosaic_0001>
module attributes {stable_mosaic.version = 11 : i64} {
  func.func @_resnext_fused_kernel(%arg0: i32, %arg1: i32, %arg2: memref<1x16x16x128xbf16, #tpu.memory_space<vmem>>, %arg3: memref<1x1x16x128xbf16, #tpu.memory_space<vmem>>, %arg4: memref<1x1x16x128xbf16, #tpu.memory_space<vmem>>, %arg5: memref<128x128xbf16, #tpu.memory_space<vmem>>, %arg6: memref<1152x128xbf16, #tpu.memory_space<vmem>>, %arg7: memref<256x128xbf16, #tpu.memory_space<vmem>>, %arg8: memref<1x128xf32, #tpu.memory_space<vmem>>, %arg9: memref<1x128xf32, #tpu.memory_space<vmem>>, %arg10: memref<1x128xf32, #tpu.memory_space<vmem>>, %arg11: memref<1x16x16x128xbf16, #tpu.memory_space<vmem>>) attributes {dimension_semantics = [#tpu.dimension_semantics<parallel>, #tpu.dimension_semantics<parallel>], iteration_bounds = array<i64: 2, 1>, scalar_prefetch = 0 : i64, scratch_operands = 0 : i64, tpu.core_type = #tpu.core_type<tc>, window_params = [{transform_indices = @transform_0, window_bounds = array<i64: 1, 16, 16, 128>}, {transform_indices = @transform_1, window_bounds = array<i64: 1, 1, 16, 128>}, {transform_indices = @transform_2, window_bounds = array<i64: 1, 1, 16, 128>}, {pipeline_mode = #tpu.pipeline_mode<synchronous>, transform_indices = @transform_3, window_bounds = array<i64: 128, 128>}, {pipeline_mode = #tpu.pipeline_mode<synchronous>, transform_indices = @transform_4, window_bounds = array<i64: 1152, 128>}, {pipeline_mode = #tpu.pipeline_mode<synchronous>, transform_indices = @transform_5, window_bounds = array<i64: 256, 128>}, {pipeline_mode = #tpu.pipeline_mode<synchronous>, transform_indices = @transform_6, window_bounds = array<i64: 1, 128>}, {pipeline_mode = #tpu.pipeline_mode<synchronous>, transform_indices = @transform_7, window_bounds = array<i64: 1, 128>}, {pipeline_mode = #tpu.pipeline_mode<synchronous>, transform_indices = @transform_8, window_bounds = array<i64: 1, 128>}, {transform_indices = @transform_9, window_bounds = array<i64: 1, 16, 16, 128>}]} {
    %c0 = arith.constant 0 : index
    %c0_0 = arith.constant 0 : index
    %c0_1 = arith.constant 0 : index
    %c0_2 = arith.constant 0 : index
    %0 = vector.load %arg2[%c0, %c0_0, %c0_1, %c0_2] : memref<1x16x16x128xbf16, #tpu.memory_space<vmem>>, vector<1x16x16x128xbf16>
    %1 = vector.shape_cast %0 : vector<1x16x16x128xbf16> to vector<16x16x128xbf16>
    %c0_3 = arith.constant 0 : index
    %c0_4 = arith.constant 0 : index
    %c0_5 = arith.constant 0 : index
    %c0_6 = arith.constant 0 : index
    %2 = vector.load %arg3[%c0_3, %c0_4, %c0_5, %c0_6] : memref<1x1x16x128xbf16, #tpu.memory_space<vmem>>, vector<1x1x16x128xbf16>
    %3 = vector.shape_cast %2 : vector<1x1x16x128xbf16> to vector<1x16x128xbf16>
    %c0_7 = arith.constant 0 : index
    %c0_8 = arith.constant 0 : index
    %c0_9 = arith.constant 0 : index
    %c0_10 = arith.constant 0 : index
    %4 = vector.load %arg4[%c0_7, %c0_8, %c0_9, %c0_10] : memref<1x1x16x128xbf16, #tpu.memory_space<vmem>>, vector<1x1x16x128xbf16>
    %5 = vector.shape_cast %4 : vector<1x1x16x128xbf16> to vector<1x16x128xbf16>
    %6 = tpu.concatenate %3, %1, %5 in 0 : vector<1x16x128xbf16>, vector<16x16x128xbf16>, vector<1x16x128xbf16> -> vector<18x16x128xbf16>
    %7 = vector.shape_cast %6 : vector<18x16x128xbf16> to vector<288x128xbf16>
    %c0_11 = arith.constant 0 : index
    %c0_12 = arith.constant 0 : index
    %8 = vector.load %arg5[%c0_11, %c0_12] : memref<128x128xbf16, #tpu.memory_space<vmem>>, vector<128x128xbf16>
    %cst = arith.constant dense<0.000000e+00> : vector<288x128xf32>
    %9 = tpu.matmul %7, %8, %cst {dimension_numbers = #tpu.dot_dimension_numbers<[1], [0], [0], [1], [0, 0, 1, 1], [], []>} : vector<288x128xbf16>, vector<128x128xbf16>, vector<288x128xf32> -> vector<288x128xf32>
    %c0_13 = arith.constant 0 : index
    %c0_14 = arith.constant 0 : index
    %10 = vector.load %arg8[%c0_13, %c0_14] : memref<1x128xf32, #tpu.memory_space<vmem>>, vector<1x128xf32>
    %11 = vector.shape_cast %10 : vector<1x128xf32> to vector<128xf32>
    %12 = vector.shape_cast %11 : vector<128xf32> to vector<1x128xf32>
    %13 = vector.broadcast %12 : vector<1x128xf32> to vector<288x128xf32>
    %14 = arith.addf %9, %13 : vector<288x128xf32>
    %cst_15 = arith.constant 0.000000e+00 : f32
    %15 = vector.broadcast %cst_15 : f32 to vector<288x128xf32>
    %16 = arith.maximumf %14, %15 : vector<288x128xf32>
    %17 = tpu.iota {dimensions = array<i32: 0>} : vector<18x16x1xi32>
    %c0_i32 = arith.constant 0 : i32
    %18 = vector.broadcast %c0_i32 : i32 to vector<18x16x1xi32>
    %19 = arith.cmpi sgt, %17, %18 : vector<18x16x1xi32>
    %c0_i32_16 = arith.constant 0 : i32
    %20 = arith.cmpi sgt, %arg1, %c0_i32_16 : i32
    %21 = vector.broadcast %20 : i1 to vector<18x16x1xi1>
    %22 = arith.ori %19, %21 : vector<18x16x1xi1>
    %c17_i32 = arith.constant 17 : i32
    %23 = vector.broadcast %c17_i32 : i32 to vector<18x16x1xi32>
    %24 = arith.cmpi slt, %17, %23 : vector<18x16x1xi32>
    %c0_i32_17 = arith.constant 0 : i32
    %25 = arith.cmpi slt, %arg1, %c0_i32_17 : i32
    %26 = vector.broadcast %25 : i1 to vector<18x16x1xi1>
    %27 = arith.ori %24, %26 : vector<18x16x1xi1>
    %28 = arith.andi %22, %27 : vector<18x16x1xi1>
    %29 = vector.shape_cast %16 : vector<288x128xf32> to vector<18x16x128xf32>
    %cst_18 = arith.constant 0.000000e+00 : f32
    %30 = vector.shape_cast %28 : vector<18x16x1xi1> to vector<18x16x1xi1>
    %31 = vector.broadcast %30 : vector<18x16x1xi1> to vector<18x16x128xi1>
    %32 = vector.broadcast %cst_18 : f32 to vector<18x16x128xf32>
    %33 = arith.select %31, %29, %32 : vector<18x16x128xi1>, vector<18x16x128xf32>
    %34 = vector.shape_cast %33 : vector<18x16x128xf32> to vector<288x128xf32>
    %35 = tpu.iota {dimensions = array<i32: 1>} : vector<18x16x1xi32>
    %c0_i32_19 = arith.constant 0 : i32
    %36 = vector.broadcast %c0_i32_19 : i32 to vector<18x16x1xi32>
    %37 = arith.cmpi eq, %35, %36 : vector<18x16x1xi32>
    %c1_i32 = arith.constant 1 : i32
    %38 = tpu.dynamic_rotate %34 by %c1_i32 dim 0 : vector<288x128xf32>, i32 -> vector<288x128xf32>
    %39 = vector.shape_cast %38 : vector<288x128xf32> to vector<18x16x128xf32>
    %cst_20 = arith.constant 0.000000e+00 : f32
    %40 = vector.shape_cast %37 : vector<18x16x1xi1> to vector<18x16x1xi1>
    %41 = vector.broadcast %40 : vector<18x16x1xi1> to vector<18x16x128xi1>
    %42 = vector.broadcast %cst_20 : f32 to vector<18x16x128xf32>
    %43 = arith.select %41, %42, %39 : vector<18x16x128xi1>, vector<18x16x128xf32>
    %c15_i32 = arith.constant 15 : i32
    %44 = vector.broadcast %c15_i32 : i32 to vector<18x16x1xi32>
    %45 = arith.cmpi eq, %35, %44 : vector<18x16x1xi32>
    %c287_i32 = arith.constant 287 : i32
    %46 = tpu.dynamic_rotate %34 by %c287_i32 dim 0 : vector<288x128xf32>, i32 -> vector<288x128xf32>
    %47 = vector.shape_cast %46 : vector<288x128xf32> to vector<18x16x128xf32>
    %cst_21 = arith.constant 0.000000e+00 : f32
    %48 = vector.shape_cast %45 : vector<18x16x1xi1> to vector<18x16x1xi1>
    %49 = vector.broadcast %48 : vector<18x16x1xi1> to vector<18x16x128xi1>
    %50 = vector.broadcast %cst_21 : f32 to vector<18x16x128xf32>
    %51 = arith.select %49, %50, %47 : vector<18x16x128xi1>, vector<18x16x128xf32>
    %52 = arith.truncf %43 : vector<18x16x128xf32> to vector<18x16x128xbf16>
    %53 = arith.truncf %33 : vector<18x16x128xf32> to vector<18x16x128xbf16>
    %54 = arith.truncf %51 : vector<18x16x128xf32> to vector<18x16x128xbf16>
    %55 = vector.extract_strided_slice %52 {offsets = [0, 0, 0], sizes = [16, 16, 128], strides = [1, 1, 1]} : vector<18x16x128xbf16> to vector<16x16x128xbf16>
    %56 = vector.extract_strided_slice %53 {offsets = [0, 0, 0], sizes = [16, 16, 128], strides = [1, 1, 1]} : vector<18x16x128xbf16> to vector<16x16x128xbf16>
    %57 = vector.extract_strided_slice %54 {offsets = [0, 0, 0], sizes = [16, 16, 128], strides = [1, 1, 1]} : vector<18x16x128xbf16> to vector<16x16x128xbf16>
    %58 = vector.extract_strided_slice %52 {offsets = [1, 0, 0], sizes = [16, 16, 128], strides = [1, 1, 1]} : vector<18x16x128xbf16> to vector<16x16x128xbf16>
    %59 = vector.extract_strided_slice %53 {offsets = [1, 0, 0], sizes = [16, 16, 128], strides = [1, 1, 1]} : vector<18x16x128xbf16> to vector<16x16x128xbf16>
    %60 = vector.extract_strided_slice %54 {offsets = [1, 0, 0], sizes = [16, 16, 128], strides = [1, 1, 1]} : vector<18x16x128xbf16> to vector<16x16x128xbf16>
    %61 = vector.extract_strided_slice %52 {offsets = [2, 0, 0], sizes = [16, 16, 128], strides = [1, 1, 1]} : vector<18x16x128xbf16> to vector<16x16x128xbf16>
    %62 = vector.extract_strided_slice %53 {offsets = [2, 0, 0], sizes = [16, 16, 128], strides = [1, 1, 1]} : vector<18x16x128xbf16> to vector<16x16x128xbf16>
    %63 = vector.extract_strided_slice %54 {offsets = [2, 0, 0], sizes = [16, 16, 128], strides = [1, 1, 1]} : vector<18x16x128xbf16> to vector<16x16x128xbf16>
    %64 = tpu.concatenate %55, %56, %57, %58, %59, %60, %61, %62, %63 in 2 : vector<16x16x128xbf16>, vector<16x16x128xbf16>, vector<16x16x128xbf16>, vector<16x16x128xbf16>, vector<16x16x128xbf16>, vector<16x16x128xbf16>, vector<16x16x128xbf16>, vector<16x16x128xbf16>, vector<16x16x128xbf16> -> vector<16x16x1152xbf16>
    %65 = vector.shape_cast %64 : vector<16x16x1152xbf16> to vector<256x1152xbf16>
    %c0_22 = arith.constant 0 : index
    %c0_23 = arith.constant 0 : index
    %66 = vector.load %arg6[%c0_22, %c0_23] : memref<1152x128xbf16, #tpu.memory_space<vmem>>, vector<1152x128xbf16>
    %cst_24 = arith.constant dense<0.000000e+00> : vector<256x128xf32>
    %67 = tpu.matmul %65, %66, %cst_24 {dimension_numbers = #tpu.dot_dimension_numbers<[1], [0], [0], [1], [0, 0, 1, 1], [], []>} : vector<256x1152xbf16>, vector<1152x128xbf16>, vector<256x128xf32> -> vector<256x128xf32>
    %c0_25 = arith.constant 0 : index
    %c0_26 = arith.constant 0 : index
    %68 = vector.load %arg9[%c0_25, %c0_26] : memref<1x128xf32, #tpu.memory_space<vmem>>, vector<1x128xf32>
    %69 = vector.shape_cast %68 : vector<1x128xf32> to vector<128xf32>
    %70 = vector.shape_cast %69 : vector<128xf32> to vector<1x128xf32>
    %71 = vector.broadcast %70 : vector<1x128xf32> to vector<256x128xf32>
    %72 = arith.addf %67, %71 : vector<256x128xf32>
    %cst_27 = arith.constant 0.000000e+00 : f32
    %73 = vector.broadcast %cst_27 : f32 to vector<256x128xf32>
    %74 = arith.maximumf %72, %73 : vector<256x128xf32>
    %75 = arith.truncf %74 : vector<256x128xf32> to vector<256x128xbf16>
    %76 = vector.shape_cast %1 : vector<16x16x128xbf16> to vector<256x128xbf16>
    %77 = tpu.concatenate %75, %76 in 1 : vector<256x128xbf16>, vector<256x128xbf16> -> vector<256x256xbf16>
    %c0_28 = arith.constant 0 : index
    %c0_29 = arith.constant 0 : index
    %78 = vector.load %arg7[%c0_28, %c0_29] : memref<256x128xbf16, #tpu.memory_space<vmem>>, vector<256x128xbf16>
    %cst_30 = arith.constant dense<0.000000e+00> : vector<256x128xf32>
    %79 = tpu.matmul %77, %78, %cst_30 {dimension_numbers = #tpu.dot_dimension_numbers<[1], [0], [0], [1], [0, 0, 1, 1], [], []>} : vector<256x256xbf16>, vector<256x128xbf16>, vector<256x128xf32> -> vector<256x128xf32>
    %c0_31 = arith.constant 0 : index
    %c0_32 = arith.constant 0 : index
    %80 = vector.load %arg10[%c0_31, %c0_32] : memref<1x128xf32, #tpu.memory_space<vmem>>, vector<1x128xf32>
    %81 = vector.shape_cast %80 : vector<1x128xf32> to vector<128xf32>
    %82 = vector.shape_cast %81 : vector<128xf32> to vector<1x128xf32>
    %83 = vector.broadcast %82 : vector<1x128xf32> to vector<256x128xf32>
    %84 = arith.addf %79, %83 : vector<256x128xf32>
    %cst_33 = arith.constant 0.000000e+00 : f32
    %85 = vector.broadcast %cst_33 : f32 to vector<256x128xf32>
    %86 = arith.maximumf %84, %85 : vector<256x128xf32>
    %87 = vector.shape_cast %86 : vector<256x128xf32> to vector<16x16x128xf32>
    %88 = arith.truncf %87 : vector<16x16x128xf32> to vector<16x16x128xbf16>
    %c0_34 = arith.constant 0 : index
    %c0_35 = arith.constant 0 : index
    %c0_36 = arith.constant 0 : index
    %c0_37 = arith.constant 0 : index
    %89 = vector.load %arg11[%c0_34, %c0_35, %c0_36, %c0_37] : memref<1x16x16x128xbf16, #tpu.memory_space<vmem>>, vector<1x16x16x128xbf16>
    %90 = vector.shape_cast %89 : vector<1x16x16x128xbf16> to vector<16x16x128xbf16>
    %91 = vector.shape_cast %88 : vector<16x16x128xbf16> to vector<1x16x16x128xbf16>
    tpu.vector_store %arg11[%c0_34, %c0_35, %c0_36, %c0_37], %91 {strides = array<i32>} : memref<1x16x16x128xbf16, #tpu.memory_space<vmem>>, vector<1x16x16x128xbf16>,
    return
  }
  func.func @transform_0(%arg0: i32, %arg1: i32) -> (i32, i32, i32, i32) {
    %c0_i32 = arith.constant 0 : i32
    %c0_i32_0 = arith.constant 0 : i32
    %c0_i32_1 = arith.constant 0 : i32
    return %arg0, %arg1, %c0_i32, %c0_i32_0 : i32, i32, i32, i32
  }
  func.func @transform_1(%arg0: i32, %arg1: i32) -> (i32, i32, i32, i32) {
    %c16_i32 = arith.constant 16 : i32
    %0 = arith.muli %arg1, %c16_i32 : i32
    %c1_i32 = arith.constant 1 : i32
    %1 = arith.subi %0, %c1_i32 : i32
    %c0_i32 = arith.constant 0 : i32
    %2 = arith.maxsi %1, %c0_i32 : i32
    %c0_i32_0 = arith.constant 0 : i32
    %c0_i32_1 = arith.constant 0 : i32
    %c0_i32_2 = arith.constant 0 : i32
    return %arg0, %2, %c0_i32_0, %c0_i32_1 : i32, i32, i32, i32
  }
  func.func @transform_2(%arg0: i32, %arg1: i32) -> (i32, i32, i32, i32) {
    %c1_i32 = arith.constant 1 : i32
    %0 = arith.addi %arg1, %c1_i32 : i32
    %c16_i32 = arith.constant 16 : i32
    %1 = arith.muli %0, %c16_i32 : i32
    %c15_i32 = arith.constant 15 : i32
    %2 = arith.minsi %1, %c15_i32 : i32
    %c0_i32 = arith.constant 0 : i32
    %c0_i32_0 = arith.constant 0 : i32
    %c0_i32_1 = arith.constant 0 : i32
    return %arg0, %2, %c0_i32, %c0_i32_0 : i32, i32, i32, i32
  }
  func.func @transform_3(%arg0: i32, %arg1: i32) -> (i32, i32) {
    %c0_i32 = arith.constant 0 : i32
    %c0_i32_0 = arith.constant 0 : i32
    %c0_i32_1 = arith.constant 0 : i32
    return %c0_i32, %c0_i32_0 : i32, i32
  }
  func.func @transform_4(%arg0: i32, %arg1: i32) -> (i32, i32) {
    %c0_i32 = arith.constant 0 : i32
    %c0_i32_0 = arith.constant 0 : i32
    %c0_i32_1 = arith.constant 0 : i32
    return %c0_i32, %c0_i32_0 : i32, i32
  }
  func.func @transform_5(%arg0: i32, %arg1: i32) -> (i32, i32) {
    %c0_i32 = arith.constant 0 : i32
    %c0_i32_0 = arith.constant 0 : i32
    %c0_i32_1 = arith.constant 0 : i32
    return %c0_i32, %c0_i32_0 : i32, i32
  }
  func.func @transform_6(%arg0: i32, %arg1: i32) -> (i32, i32) {
    %c0_i32 = arith.constant 0 : i32
    %c0_i32_0 = arith.constant 0 : i32
    %c0_i32_1 = arith.constant 0 : i32
    return %c0_i32, %c0_i32_0 : i32, i32
  }
  func.func @transform_7(%arg0: i32, %arg1: i32) -> (i32, i32) {
    %c0_i32 = arith.constant 0 : i32
    %c0_i32_0 = arith.constant 0 : i32
    %c0_i32_1 = arith.constant 0 : i32
    return %c0_i32, %c0_i32_0 : i32, i32
  }
  func.func @transform_8(%arg0: i32, %arg1: i32) -> (i32, i32) {
    %c0_i32 = arith.constant 0 : i32
    %c0_i32_0 = arith.constant 0 : i32
    %c0_i32_1 = arith.constant 0 : i32
    return %c0_i32, %c0_i32_0 : i32, i32
  }
  func.func @transform_9(%arg0: i32, %arg1: i32) -> (i32, i32, i32, i32) {
    %c0_i32 = arith.constant 0 : i32
    %c0_i32_0 = arith.constant 0 : i32
    %c0_i32_1 = arith.constant 0 : i32
    return %arg0, %arg1, %c0_i32, %c0_i32_0 : i32, i32, i32, i32
  }
}

</mosaic_0001>

<llo_original>
// kernel: tpu_custom_call.1
$region0: #{tpu_custom_call.1}
  #allocation0 [shape = 'u32[]', space=smem, size = 0x4, offset = 0x4, fixed_abs, tag = 'smem constant byte address 0x4 - core index']
  #allocation1 [shape = 'u32[144,128]{1,0:T(1,128)}', space=vmem, size = 0x12000, scoped, tag = 'internal scratch']
  %s0 = inlined_call_operand.hbm [shape: bf16[2,16,16,128], index: 0, kind: input, shape index: {}]
  %s1 = inlined_call_operand.hbm [shape: bf16[2,16,16,128], index: 1, kind: input, shape index: {}]
  %s2 = inlined_call_operand.hbm [shape: bf16[2,16,16,128], index: 2, kind: input, shape index: {}]
  %s3 = inlined_call_operand.hbm [shape: bf16[128,128], index: 3, kind: input, shape index: {}]
  %s4 = inlined_call_operand.hbm [shape: bf16[1152,128], index: 4, kind: input, shape index: {}]
  %s5 = inlined_call_operand.hbm [shape: bf16[256,128], index: 5, kind: input, shape index: {}]
  %s6 = inlined_call_operand.hbm [shape: f32[1,128], index: 6, kind: input, shape index: {}]
  %s7 = inlined_call_operand.hbm [shape: f32[1,128], index: 7, kind: input, shape index: {}]
  %s8 = inlined_call_operand.hbm [shape: f32[1,128], index: 8, kind: input, shape index: {}]
  %s9 = inlined_call_operand.hbm [shape: bf16[2,16,16,128], index: 9, kind: output, shape index: {}]
  %s10 = sld [smem:[#allocation0]]
  $region105: #{tpu_custom_call.1} parent=0
    _
  %s12 = ssub.s32 1, %s10
  %s13 = scalar_select 0, %s12, %s10
  $region1: #{tpu_custom_call.1} parent=0
    #allocation2 [shape = 'u8[131072]{0}', space=vmem, size = 0x20000, scoped, tag = 'input window, operand 0']
    #allocation3 [shape = 's32[2]{0}', space=sflag, size = 0x8, scoped, tag = 'scoped memory for tpu_custom_call.1']
    #allocation4 [shape = 's32[2]{0}', space=sflag, size = 0x8, scoped, tag = 'scoped memory for tpu_custom_call.1']
    #allocation5 [shape = 'u8[8192]{0}', space=vmem, size = 0x2000, scoped, tag = 'input window, operand 1']
    #allocation6 [shape = 's32[2]{0}', space=sflag, size = 0x8, scoped, tag = 'scoped memory for tpu_custom_call.1']
    #allocation7 [shape = 'u8[8192]{0}', space=vmem, size = 0x2000, scoped, tag = 'input window, operand 2']
    #allocation8 [shape = 'u8[32768]{0}', space=vmem, size = 0x8000, scoped, tag = 'input window, operand 3, single buffered']
    #allocation9 [shape = 's32[1]{0}', space=sflag, size = 0x4, scoped, tag = 'scoped memory for tpu_custom_call.1']
    #allocation10 [shape = 'u8[294912]{0}', space=vmem, size = 0x48000, scoped, tag = 'input window, operand 4, single buffered']
    #allocation11 [shape = 'u8[65536]{0}', space=vmem, size = 0x10000, scoped, tag = 'input window, operand 5, single buffered']
    #allocation12 [shape = 's32[1]{0}', space=sflag, size = 0x4, scoped, tag = 'scoped memory for tpu_custom_call.1']
    #allocation13 [shape = 'u8[512]{0}', space=vmem, size = 0x400, scoped, tag = 'input window, operand 6, single buffered']
    #allocation14 [shape = 'u8[512]{0}', space=vmem, size = 0x400, scoped, tag = 'input window, operand 7, single buffered']
    #allocation15 [shape = 's32[1]{0}', space=sflag, size = 0x4, scoped, tag = 'scoped memory for tpu_custom_call.1']
    #allocation16 [shape = 'u8[512]{0}', space=vmem, size = 0x400, scoped, tag = 'input window, operand 8, single buffered']
    #allocation17 [shape = 'u8[131072]{0}', space=vmem, size = 0x20000, scoped, tag = 'output window, operand 0']
    %14 = vsyncpa [#allocation3], 0
    %s15 = scalar_lea.sflag [#allocation3], 1
    %16 = vsyncpa %s15, 0
    %17 = vsyncpa [#allocation6], 0
    %s18 = scalar_lea.sflag [#allocation6], 1
    %19 = vsyncpa %s18, 0
    %20 = vsyncpa [#allocation9], 0
    %21 = vsyncpa [#allocation12], 0
    %22 = vsyncpa [#allocation15], 0
    %23 = vsyncpa [#allocation4], 0
    %s24 = scalar_lea.sflag [#allocation4], 1
    %25 = vsyncpa %s24, 0
    loop: start=0, step=1, limit=4
    $region2: #{tpu_custom_call.1} parent=1 // loop_pre_header
      _
    $region3: #{tpu_custom_call.1} parent=1 // loop_header
      %s27 = sphi 0, %s31
      %p28 = scmp.ge.s32.totalorder %s27, 4
      %s34 = sphi 0, %s46
      %s35 = sphi 0, %s42
      %s36 = sphi 0, %s34
      %s37 = sphi 0, %s35
      %s38 = sphi 0, %s36
      %s39 = sphi 0, %s37
      %s51 = sphi 0, %s53
      %s54 = sphi 0, %s51
      %s55 = sphi 0, %s54
      %s71 = sphi 0, %s55
      %s87 = sphi 0, %s89
      %s90 = sphi 0, %s87
      %s91 = sphi 0, %s90
      %s107 = sphi 0, %s91
      %s123 = sphi 0, %s125
      %s126 = sphi 0, %s123
      %s127 = sphi 0, %s126
      %s143 = sphi 0, %s127
      %s147 = sphi 0, %s147
      %s149 = sphi 0, %s147
      %s150 = sphi 0, %s149
      %s164 = sphi 0, %s150
      %s168 = sphi 0, %s168
      %s170 = sphi 0, %s168
      %s171 = sphi 0, %s170
      %s185 = sphi 0, %s171
      %s189 = sphi 0, %s189
      %s191 = sphi 0, %s189
      %s192 = sphi 0, %s191
      %s206 = sphi 0, %s192
      %s210 = sphi 0, %s210
      %s212 = sphi 0, %s210
      %s213 = sphi 0, %s212
      %s227 = sphi 0, %s213
      %s231 = sphi 0, %s231
      %s233 = sphi 0, %s231
      %s234 = sphi 0, %s233
      %s248 = sphi 0, %s234
      %s252 = sphi 0, %s252
      %s254 = sphi 0, %s252
      %s255 = sphi 0, %s254
      %s269 = sphi 0, %s255
      %s277 = sphi 0, %s279
      %s280 = sphi 0, %s277
      %s281 = sphi 0, %s280
      %s297 = sphi 0, %s281
    $region4: #{tpu_custom_call.1} parent=1 // loop_header_branch
      %30 = sbr.rel (%p28) target = $region8
    $region5: #{tpu_custom_call.1} parent=1 // loop_body
      %s32 = ssub.s32 %s27, 1
      %s33 = ssub.s32 %s27, 2
      %s40 = sadd.s32 1, %s35
      %p41 = scmp.ge.s32.totalorder %s40, 1
      %s42 = scalar_select %p41, 0, %s40
      %s43 = sadd.s32 1, %s34
      %s44 = scalar_select %p41, %s43, %s34
      %p45 = scmp.ge.s32.totalorder %s44, 2
      %s46 = scalar_select %p45, 0, %s44
      %s47 = ssub.s32 %s34, %s46
      %s48 = ssub.s32 %s35, %s42
      %s49 = sor.u32 %s47, %s48
      %p50 = scmp.eq.s32.totalorder %s49, 0
      %s52 = sadd.s32 %s51, 1
      %s53 = scalar_select %p50, %s51, %s52
      %p56 = pneg %p50
      %p57 = scmp.eq.s32.totalorder %s27, 1
      %p58 = por %p56, %p57
      %p59 = scmp.ne.s32.totalorder %s51, %s54
      %p60 = scmp.eq.s32.totalorder %s27, 0
      %p61 = por %p59, %p60
      %p62 = scmp.ne.s32.totalorder %s51, %s54
      %p63 = scmp.eq.s32.totalorder %s32, 1
      %p64 = por %p62, %p63
      %p65 = scmp.ne.s32.totalorder %s54, %s55
      %p66 = scmp.eq.s32.totalorder %s32, 0
      %p67 = por %p65, %p66
      %p68 = scmp.ne.s32.totalorder %s54, %s55
      %p69 = scmp.eq.s32.totalorder %s33, 1
      %p70 = por %p68, %p69
      %p72 = scmp.ne.s32.totalorder %s55, %s71
      %p73 = scmp.eq.s32.totalorder %s33, 0
      %p74 = por %p72, %p73
      %s75 = smul.u32 %s35, 16
      %s76 = ssub.s32 %s75, 1
      %p77 = scmp.gt.s32.totalorder %s76, 0
      %s78 = scalar_select %p77, %s76, 0
      %s79 = smul.u32 %s42, 16
      %s80 = ssub.s32 %s79, 1
      %p81 = scmp.gt.s32.totalorder %s80, 0
      %s82 = scalar_select %p81, %s80, 0
      %s83 = ssub.s32 %s34, %s46
      %s84 = ssub.s32 %s78, %s82
      %s85 = sor.u32 %s83, %s84
      %p86 = scmp.eq.s32.totalorder %s85, 0
      %s88 = sadd.s32 %s87, 1
      %s89 = scalar_select %p86, %s87, %s88
      %p92 = pneg %p86
      %p93 = scmp.eq.s32.totalorder %s27, 1
      %p94 = por %p92, %p93
      %p95 = scmp.ne.s32.totalorder %s87, %s90
      %p96 = scmp.eq.s32.totalorder %s27, 0
      %p97 = por %p95, %p96
      %p98 = scmp.ne.s32.totalorder %s87, %s90
      %p99 = scmp.eq.s32.totalorder %s32, 1
      %p100 = por %p98, %p99
      %p101 = scmp.ne.s32.totalorder %s90, %s91
      %p102 = scmp.eq.s32.totalorder %s32, 0
      %p103 = por %p101, %p102
      %p104 = scmp.ne.s32.totalorder %s90, %s91
      %p105 = scmp.eq.s32.totalorder %s33, 1
      %p106 = por %p104, %p105
      %p108 = scmp.ne.s32.totalorder %s91, %s107
      %p109 = scmp.eq.s32.totalorder %s33, 0
      %p110 = por %p108, %p109
      %s111 = sadd.s32 %s35, 1
      %s112 = smul.u32 %s111, 16
      %p113 = scmp.lt.s32.totalorder %s112, 15
      %s114 = scalar_select %p113, %s112, 15
      %s115 = sadd.s32 %s42, 1
      %s116 = smul.u32 %s115, 16
      %p117 = scmp.lt.s32.totalorder %s116, 15
      %s118 = scalar_select %p117, %s116, 15
      %s119 = ssub.s32 %s34, %s46
      %s120 = ssub.s32 %s114, %s118
      %s121 = sor.u32 %s119, %s120
      %p122 = scmp.eq.s32.totalorder %s121, 0
      %s124 = sadd.s32 %s123, 1
      %s125 = scalar_select %p122, %s123, %s124
      %p128 = pneg %p122
      %p129 = scmp.eq.s32.totalorder %s27, 1
      %p130 = por %p128, %p129
      %p131 = scmp.ne.s32.totalorder %s123, %s126
      %p132 = scmp.eq.s32.totalorder %s27, 0
      %p133 = por %p131, %p132
      %p134 = scmp.ne.s32.totalorder %s123, %s126
      %p135 = scmp.eq.s32.totalorder %s32, 1
      %p136 = por %p134, %p135
      %p137 = scmp.ne.s32.totalorder %s126, %s127
      %p138 = scmp.eq.s32.totalorder %s32, 0
      %p139 = por %p137, %p138
      %p140 = scmp.ne.s32.totalorder %s126, %s127
      %p141 = scmp.eq.s32.totalorder %s33, 1
      %p142 = por %p140, %p141
      %p144 = scmp.ne.s32.totalorder %s127, %s143
      %p145 = scmp.eq.s32.totalorder %s33, 0
      %p146 = por %p144, %p145
      %s148 = sadd.s32 %s147, 1
      %p151 = scmp.eq.s32.totalorder %s27, 1
      %p152 = scmp.ne.s32.totalorder %s147, %s149
      %p153 = scmp.eq.s32.totalorder %s27, 0
      %p154 = por %p152, %p153
      %p155 = scmp.ne.s32.totalorder %s147, %s149
      %p156 = scmp.eq.s32.totalorder %s32, 1
      %p157 = por %p155, %p156
      %p158 = scmp.ne.s32.totalorder %s149, %s150
      %p159 = scmp.eq.s32.totalorder %s32, 0
      %p160 = por %p158, %p159
      %p161 = scmp.ne.s32.totalorder %s149, %s150
      %p162 = scmp.eq.s32.totalorder %s33, 1
      %p163 = por %p161, %p162
      %p165 = scmp.ne.s32.totalorder %s150, %s164
      %p166 = scmp.eq.s32.totalorder %s33, 0
      %p167 = por %p165, %p166
      %s169 = sadd.s32 %s168, 1
      %p172 = scmp.eq.s32.totalorder %s27, 1
      %p173 = scmp.ne.s32.totalorder %s168, %s170
      %p174 = scmp.eq.s32.totalorder %s27, 0
      %p175 = por %p173, %p174
      %p176 = scmp.ne.s32.totalorder %s168, %s170
      %p177 = scmp.eq.s32.totalorder %s32, 1
      %p178 = por %p176, %p177
      %p179 = scmp.ne.s32.totalorder %s170, %s171
      %p180 = scmp.eq.s32.totalorder %s32, 0
      %p181 = por %p179, %p180
      %p182 = scmp.ne.s32.totalorder %s170, %s171
      %p183 = scmp.eq.s32.totalorder %s33, 1
      %p184 = por %p182, %p183
      %p186 = scmp.ne.s32.totalorder %s171, %s185
      %p187 = scmp.eq.s32.totalorder %s33, 0
      %p188 = por %p186, %p187
      %s190 = sadd.s32 %s189, 1
      %p193 = scmp.eq.s32.totalorder %s27, 1
      %p194 = scmp.ne.s32.totalorder %s189, %s191
      %p195 = scmp.eq.s32.totalorder %s27, 0
      %p196 = por %p194, %p195
      %p197 = scmp.ne.s32.totalorder %s189, %s191
      %p198 = scmp.eq.s32.totalorder %s32, 1
      %p199 = por %p197, %p198
      %p200 = scmp.ne.s32.totalorder %s191, %s192
      %p201 = scmp.eq.s32.totalorder %s32, 0
      %p202 = por %p200, %p201
      %p203 = scmp.ne.s32.totalorder %s191, %s192
      %p204 = scmp.eq.s32.totalorder %s33, 1
      %p205 = por %p203, %p204
      %p207 = scmp.ne.s32.totalorder %s192, %s206
      %p208 = scmp.eq.s32.totalorder %s33, 0
      %p209 = por %p207, %p208
      %s211 = sadd.s32 %s210, 1
      %p214 = scmp.eq.s32.totalorder %s27, 1
      %p215 = scmp.ne.s32.totalorder %s210, %s212
      %p216 = scmp.eq.s32.totalorder %s27, 0
      %p217 = por %p215, %p216
      %p218 = scmp.ne.s32.totalorder %s210, %s212
      %p219 = scmp.eq.s32.totalorder %s32, 1
      %p220 = por %p218, %p219
      %p221 = scmp.ne.s32.totalorder %s212, %s213
      %p222 = scmp.eq.s32.totalorder %s32, 0
      %p223 = por %p221, %p222
      %p224 = scmp.ne.s32.totalorder %s212, %s213
      %p225 = scmp.eq.s32.totalorder %s33, 1
      %p226 = por %p224, %p225
      %p228 = scmp.ne.s32.totalorder %s213, %s227
      %p229 = scmp.eq.s32.totalorder %s33, 0
      %p230 = por %p228, %p229
      %s232 = sadd.s32 %s231, 1
      %p235 = scmp.eq.s32.totalorder %s27, 1
      %p236 = scmp.ne.s32.totalorder %s231, %s233
      %p237 = scmp.eq.s32.totalorder %s27, 0
      %p238 = por %p236, %p237
      %p239 = scmp.ne.s32.totalorder %s231, %s233
      %p240 = scmp.eq.s32.totalorder %s32, 1
      %p241 = por %p239, %p240
      %p242 = scmp.ne.s32.totalorder %s233, %s234
      %p243 = scmp.eq.s32.totalorder %s32, 0
      %p244 = por %p242, %p243
      %p245 = scmp.ne.s32.totalorder %s233, %s234
      %p246 = scmp.eq.s32.totalorder %s33, 1
      %p247 = por %p245, %p246
      %p249 = scmp.ne.s32.totalorder %s234, %s248
      %p250 = scmp.eq.s32.totalorder %s33, 0
      %p251 = por %p249, %p250
      %s253 = sadd.s32 %s252, 1
      %p256 = scmp.eq.s32.totalorder %s27, 1
      %p257 = scmp.ne.s32.totalorder %s252, %s254
      %p258 = scmp.eq.s32.totalorder %s27, 0
      %p259 = por %p257, %p258
      %p260 = scmp.ne.s32.totalorder %s252, %s254
      %p261 = scmp.eq.s32.totalorder %s32, 1
      %p262 = por %p260, %p261
      %p263 = scmp.ne.s32.totalorder %s254, %s255
      %p264 = scmp.eq.s32.totalorder %s32, 0
      %p265 = por %p263, %p264
      %p266 = scmp.ne.s32.totalorder %s254, %s255
      %p267 = scmp.eq.s32.totalorder %s33, 1
      %p268 = por %p266, %p267
      %p270 = scmp.ne.s32.totalorder %s255, %s269
      %p271 = scmp.eq.s32.totalorder %s33, 0
      %p272 = por %p270, %p271
      %s273 = ssub.s32 %s34, %s46
      %s274 = ssub.s32 %s35, %s42
      %s275 = sor.u32 %s273, %s274
      %p276 = scmp.eq.s32.totalorder %s275, 0
      %s278 = sadd.s32 %s277, 1
      %s279 = scalar_select %p276, %s277, %s278
      %p282 = pneg %p276
      %p283 = scmp.eq.s32.totalorder %s27, 1
      %p284 = por %p282, %p283
      %p285 = scmp.ne.s32.totalorder %s277, %s280
      %p286 = scmp.eq.s32.totalorder %s27, 0
      %p287 = por %p285, %p286
      %p288 = scmp.ne.s32.totalorder %s277, %s280
      %p289 = scmp.eq.s32.totalorder %s32, 1
      %p290 = por %p288, %p289
      %p291 = scmp.ne.s32.totalorder %s280, %s281
      %p292 = scmp.eq.s32.totalorder %s32, 0
      %p293 = por %p291, %p292
      %p294 = scmp.ne.s32.totalorder %s280, %s281
      %p295 = scmp.eq.s32.totalorder %s33, 1
      %p296 = por %p294, %p295
      %p298 = scmp.ne.s32.totalorder %s281, %s297
      %p299 = scmp.eq.s32.totalorder %s33, 0
      %p300 = por %p298, %p299
      %p301 = scmp.le.s32.totalorder 1, %s27
      %p302 = scmp.lt.s32.totalorder %s27, 3
      %p303 = pnand %p301, %p302
      %p304 = pneg %p303
      // Predicated region
      $region9: #{tpu_custom_call.1} parent=5 // pred_check
        _
      $region10: #{tpu_custom_call.1} parent=5 // pred_check_branch
        %306 = sbr.rel (%p303) target = $region12
      $region11: #{tpu_custom_call.1} parent=5 // pred_region
        %s307 = ssub.s32 %s27, 1
        // Predicated region
        $region13: #{tpu_custom_call.1} parent=11 // pred_check
          %p308 = pneg %p160
        $region14: #{tpu_custom_call.1} parent=11 // pred_check_branch
          %310 = sbr.rel (%p308) target = $region16
        $region15: #{tpu_custom_call.1} parent=11 // pred_region
          %s312 = ssub.s32 1024, 1024
          %313 = vsyncadd [#allocation9], %s312
          %s314 = sshll.u32 [#allocation8], 4
          %s315 = int_to_ptr.vmem [resolvable:$true] %s314
          %320 = dma.hbm_to_vmem [thread:$0]  %s3, 1024, %s315, [#allocation9], 64, 64, 4
        $region16: #{tpu_custom_call.1} parent=11 // pred_fallthru
          _
        // Predicated region
        $region17: #{tpu_custom_call.1} parent=11 // pred_check
          %p321 = pneg %p181
        $region18: #{tpu_custom_call.1} parent=11 // pred_check_branch
          %323 = sbr.rel (%p321) target = $region20
        $region19: #{tpu_custom_call.1} parent=11 // pred_region
          %s325 = ssub.s32 9216, 9216
          %326 = vsyncadd [#allocation9], %s325
          %s327 = sshll.u32 [#allocation10], 4
          %s328 = int_to_ptr.vmem [resolvable:$true] %s327
          %333 = dma.hbm_to_vmem [thread:$0]  %s4, 9216, %s328, [#allocation9], 64, 64, 4
        $region20: #{tpu_custom_call.1} parent=11 // pred_fallthru
          _
        // Predicated region
        $region21: #{tpu_custom_call.1} parent=11 // pred_check
          %p334 = pneg %p202
        $region22: #{tpu_custom_call.1} parent=11 // pred_check_branch
          %336 = sbr.rel (%p334) target = $region24
        $region23: #{tpu_custom_call.1} parent=11 // pred_region
          %s338 = ssub.s32 2048, 2048
          %339 = vsyncadd [#allocation12], %s338
          %s340 = sshll.u32 [#allocation11], 4
          %s341 = int_to_ptr.vmem [resolvable:$true] %s340
          %346 = dma.hbm_to_vmem [thread:$0]  %s5, 2048, %s341, [#allocation12], 64, 64, 4
        $region24: #{tpu_custom_call.1} parent=11 // pred_fallthru
          _
        // Predicated region
        $region25: #{tpu_custom_call.1} parent=11 // pred_check
          %p347 = pneg %p223
        $region26: #{tpu_custom_call.1} parent=11 // pred_check_branch
          %349 = sbr.rel (%p347) target = $region28
        $region27: #{tpu_custom_call.1} parent=11 // pred_region
          %s351 = ssub.s32 16, 16
          %352 = vsyncadd [#allocation12], %s351
          %s354 = sshll.u32 [#allocation13], 4
          %s355 = int_to_ptr.vmem [resolvable:$true] %s354
          %357 = dma.hbm_to_vmem [thread:$0]  %s6, 16, %s355, [#allocation12]
        $region28: #{tpu_custom_call.1} parent=11 // pred_fallthru
          _
        // Predicated region
        $region29: #{tpu_custom_call.1} parent=11 // pred_check
          %p358 = pneg %p244
        $region30: #{tpu_custom_call.1} parent=11 // pred_check_branch
          %360 = sbr.rel (%p358) target = $region32
        $region31: #{tpu_custom_call.1} parent=11 // pred_region
          %s362 = ssub.s32 16, 16
          %363 = vsyncadd [#allocation15], %s362
          %s365 = sshll.u32 [#allocation14], 4
          %s366 = int_to_ptr.vmem [resolvable:$true] %s365
          %368 = dma.hbm_to_vmem [thread:$0]  %s7, 16, %s366, [#allocation15]
        $region32: #{tpu_custom_call.1} parent=11 // pred_fallthru
          _
        // Predicated region
        $region33: #{tpu_custom_call.1} parent=11 // pred_check
          %p369 = pneg %p265
        $region34: #{tpu_custom_call.1} parent=11 // pred_check_branch
          %371 = sbr.rel (%p369) target = $region36
        $region35: #{tpu_custom_call.1} parent=11 // pred_region
          %s373 = ssub.s32 16, 16
          %374 = vsyncadd [#allocation15], %s373
          %s376 = sshll.u32 [#allocation16], 4
          %s377 = int_to_ptr.vmem [resolvable:$true] %s376
          %379 = dma.hbm_to_vmem [thread:$0]  %s8, 16, %s377, [#allocation15]
        $region36: #{tpu_custom_call.1} parent=11 // pred_fallthru
          _
      $region12: #{tpu_custom_call.1} parent=5 // pred_fallthru
        _
      %p380 = scmp.lt.s32.totalorder %s27, 2
      // Predicated region
      $region37: #{tpu_custom_call.1} parent=5 // pred_check
        %p381 = pneg %p380
      $region38: #{tpu_custom_call.1} parent=5 // pred_check_branch
        %383 = sbr.rel (%p381) target = $region40
      $region39: #{tpu_custom_call.1} parent=5 // pred_region
        // Predicated region
        $region41: #{tpu_custom_call.1} parent=39 // pred_check
          %p384 = pneg %p61
        $region42: #{tpu_custom_call.1} parent=39 // pred_check_branch
          %386 = sbr.rel (%p384) target = $region44
        $region43: #{tpu_custom_call.1} parent=39 // pred_region
          %s387 = sand.u32 %s51, 1
          %s388 = scalar_lea.sflag [#allocation3], %s387
          %s389 = sand.u32 %s51, 1
          %s390 = smul.addr %s389, 128
          %s391 = scalar_lea.vmem [#allocation2], %s390
          %s392 = smul.u32 16, %s35
          %s394 = ssub.s32 2048, 2048
          %395 = vsyncadd %s388, %s394
          %s396 = smul.addr %s392, 2
          %s397 = smul.addr %s34, 32
          %s398 = sadd.s32 %s396, %s397
          %s399 = smul.addr %s398, 64
          %s400 = scalar_lea.hbm %s0, %s399
          %s401 = sshll.u32 %s391, 4
          %s402 = int_to_ptr.vmem [resolvable:$true] %s401
          %407 = dma.hbm_to_vmem [thread:$0]  %s400, 2048, %s402, %s388, 64, 64, 4
        $region44: #{tpu_custom_call.1} parent=39 // pred_fallthru
          _
        // Predicated region
        $region45: #{tpu_custom_call.1} parent=39 // pred_check
          %p408 = pneg %p97
        $region46: #{tpu_custom_call.1} parent=39 // pred_check_branch
          %410 = sbr.rel (%p408) target = $region48
        $region47: #{tpu_custom_call.1} parent=39 // pred_region
          %s411 = sand.u32 %s27, 1
          %s412 = scalar_lea.sflag [#allocation6], %s411
          %s413 = sand.u32 %s87, 1
          %s414 = smul.addr %s413, 8
          %s415 = scalar_lea.vmem [#allocation5], %s414
          %s416 = smul.u32 %s35, 16
          %s417 = ssub.s32 %s416, 1
          %p418 = scmp.gt.s32.totalorder %s417, 0
          %s419 = scalar_select %p418, %s417, 0
          %s421 = ssub.s32 128, 128
          %422 = vsyncadd %s412, %s421
          %s423 = smul.addr %s419, 2
          %s424 = smul.addr %s34, 32
          %s425 = sadd.s32 %s423, %s424
          %s426 = smul.addr %s425, 64
          %s427 = scalar_lea.hbm %s1, %s426
          %s428 = sshll.u32 %s415, 4
          %s429 = int_to_ptr.vmem [resolvable:$true] %s428
          %434 = dma.hbm_to_vmem [thread:$0]  %s427, 128, %s429, %s412, 64, 64, 4
        $region48: #{tpu_custom_call.1} parent=39 // pred_fallthru
          _
        // Predicated region
        $region49: #{tpu_custom_call.1} parent=39 // pred_check
          %p435 = pneg %p133
        $region50: #{tpu_custom_call.1} parent=39 // pred_check_branch
          %437 = sbr.rel (%p435) target = $region52
        $region51: #{tpu_custom_call.1} parent=39 // pred_region
          %s438 = sand.u32 %s27, 1
          %s439 = scalar_lea.sflag [#allocation6], %s438
          %s440 = sand.u32 %s123, 1
          %s441 = smul.addr %s440, 8
          %s442 = scalar_lea.vmem [#allocation7], %s441
          %s443 = sadd.s32 %s35, 1
          %s444 = smul.u32 %s443, 16
          %p445 = scmp.lt.s32.totalorder %s444, 15
          %s446 = scalar_select %p445, %s444, 15
          %s448 = ssub.s32 128, 128
          %449 = vsyncadd %s439, %s448
          %s450 = smul.addr %s446, 2
          %s451 = smul.addr %s34, 32
          %s452 = sadd.s32 %s450, %s451
          %s453 = smul.addr %s452, 64
          %s454 = scalar_lea.hbm %s2, %s453
          %s455 = sshll.u32 %s442, 4
          %s456 = int_to_ptr.vmem [resolvable:$true] %s455
          %461 = dma.hbm_to_vmem [thread:$0]  %s454, 128, %s456, %s439, 64, 64, 4
        $region52: #{tpu_custom_call.1} parent=39 // pred_fallthru
          _
      $region40: #{tpu_custom_call.1} parent=5 // pred_fallthru
        _
      %p462 = scmp.le.s32.totalorder 1, %s27
      %p463 = scmp.lt.s32.totalorder %s27, 3
      %p464 = pnand %p462, %p463
      %p465 = pneg %p464
      // Predicated region
      $region53: #{tpu_custom_call.1} parent=5 // pred_check
        _
      $region54: #{tpu_custom_call.1} parent=5 // pred_check_branch
        %467 = sbr.rel (%p464) target = $region56
      $region55: #{tpu_custom_call.1} parent=5 // pred_region
        %s468 = ssub.s32 %s27, 1
        %s469 = sand.u32 %s54, 1
        %s470 = scalar_lea.sflag [#allocation3], %s469
        %s471 = sand.u32 %s54, 1
        %s472 = smul.addr %s471, 128
        %s473 = scalar_lea.vmem [#allocation2], %s472
        // Predicated region
        $region57: #{tpu_custom_call.1} parent=55 // pred_check
          %p474 = pneg %p67
        $region58: #{tpu_custom_call.1} parent=55 // pred_check_branch
          %476 = sbr.rel (%p474) target = $region60
        $region59: #{tpu_custom_call.1} parent=55 // pred_region
          %477 = dma.done %s470, 2048
        $region60: #{tpu_custom_call.1} parent=55 // pred_fallthru
          _
        %s478 = sand.u32 %s32, 1
        %s479 = scalar_lea.sflag [#allocation6], %s478
        %s480 = sand.u32 %s90, 1
        %s481 = smul.addr %s480, 8
        %s482 = scalar_lea.vmem [#allocation5], %s481
        // Predicated region
        $region61: #{tpu_custom_call.1} parent=55 // pred_check
          %p483 = pneg %p103
        $region62: #{tpu_custom_call.1} parent=55 // pred_check_branch
          %485 = sbr.rel (%p483) target = $region64
        $region63: #{tpu_custom_call.1} parent=55 // pred_region
          %486 = dma.done %s479, 128
        $region64: #{tpu_custom_call.1} parent=55 // pred_fallthru
          _
        %s487 = sand.u32 %s32, 1
        %s488 = scalar_lea.sflag [#allocation6], %s487
        %s489 = sand.u32 %s126, 1
        %s490 = smul.addr %s489, 8
        %s491 = scalar_lea.vmem [#allocation7], %s490
        // Predicated region
        $region65: #{tpu_custom_call.1} parent=55 // pred_check
          %p492 = pneg %p139
        $region66: #{tpu_custom_call.1} parent=55 // pred_check_branch
          %494 = sbr.rel (%p492) target = $region68
        $region67: #{tpu_custom_call.1} parent=55 // pred_region
          %495 = dma.done %s488, 128
        $region68: #{tpu_custom_call.1} parent=55 // pred_fallthru
          _
        // Predicated region
        $region69: #{tpu_custom_call.1} parent=55 // pred_check
          %p496 = pneg %p160
        $region70: #{tpu_custom_call.1} parent=55 // pred_check_branch
          %498 = sbr.rel (%p496) target = $region72
        $region71: #{tpu_custom_call.1} parent=55 // pred_region
          %499 = dma.done [#allocation9], 1024
        $region72: #{tpu_custom_call.1} parent=55 // pred_fallthru
          _
        // Predicated region
        $region73: #{tpu_custom_call.1} parent=55 // pred_check
          %p500 = pneg %p181
        $region74: #{tpu_custom_call.1} parent=55 // pred_check_branch
          %502 = sbr.rel (%p500) target = $region76
        $region75: #{tpu_custom_call.1} parent=55 // pred_region
          %503 = dma.done [#allocation9], 9216
        $region76: #{tpu_custom_call.1} parent=55 // pred_fallthru
          _
        // Predicated region
        $region77: #{tpu_custom_call.1} parent=55 // pred_check
          %p504 = pneg %p202
        $region78: #{tpu_custom_call.1} parent=55 // pred_check_branch
          %506 = sbr.rel (%p504) target = $region80
        $region79: #{tpu_custom_call.1} parent=55 // pred_region
          %507 = dma.done [#allocation12], 2048
        $region80: #{tpu_custom_call.1} parent=55 // pred_fallthru
          _
        // Predicated region
        $region81: #{tpu_custom_call.1} parent=55 // pred_check
          %p508 = pneg %p223
        $region82: #{tpu_custom_call.1} parent=55 // pred_check_branch
          %510 = sbr.rel (%p508) target = $region84
        $region83: #{tpu_custom_call.1} parent=55 // pred_region
          %511 = dma.done [#allocation12], 16
        $region84: #{tpu_custom_call.1} parent=55 // pred_fallthru
          _
        // Predicated region
        $region85: #{tpu_custom_call.1} parent=55 // pred_check
          %p512 = pneg %p244
        $region86: #{tpu_custom_call.1} parent=55 // pred_check_branch
          %514 = sbr.rel (%p512) target = $region88
        $region87: #{tpu_custom_call.1} parent=55 // pred_region
          %515 = dma.done [#allocation15], 16
        $region88: #{tpu_custom_call.1} parent=55 // pred_fallthru
          _
        // Predicated region
        $region89: #{tpu_custom_call.1} parent=55 // pred_check
          %p516 = pneg %p265
        $region90: #{tpu_custom_call.1} parent=55 // pred_check_branch
          %518 = sbr.rel (%p516) target = $region92
        $region91: #{tpu_custom_call.1} parent=55 // pred_region
          %519 = dma.done [#allocation15], 16
        $region92: #{tpu_custom_call.1} parent=55 // pred_fallthru
          _
        %s520 = sand.u32 %s54, 1
        %s521 = scalar_lea.sflag [#allocation3], %s520
        %s522 = sand.u32 %s54, 1
        %s523 = smul.addr %s522, 128
        %s524 = scalar_lea.vmem [#allocation2], %s523
        %p525 = pneg %p67
        %p526 = pneg %p64
        %s527 = sand.u32 %s32, 1
        %s528 = scalar_lea.sflag [#allocation6], %s527
        %s529 = sand.u32 %s90, 1
        %s530 = smul.addr %s529, 8
        %s531 = scalar_lea.vmem [#allocation5], %s530
        %p532 = pneg %p103
        %p533 = pneg %p100
        %s534 = sand.u32 %s32, 1
        %s535 = scalar_lea.sflag [#allocation6], %s534
        %s536 = sand.u32 %s126, 1
        %s537 = smul.addr %s536, 8
        %s538 = scalar_lea.vmem [#allocation7], %s537
        %p539 = pneg %p139
        %p540 = pneg %p136
        %p541 = pneg %p160
        %p542 = pneg %p157
        %p543 = pneg %p181
        %p544 = pneg %p178
        %p545 = pneg %p202
        %p546 = pneg %p199
        %p547 = pneg %p223
        %p548 = pneg %p220
        %p549 = pneg %p244
        %p550 = pneg %p241
        %p551 = pneg %p265
        %p552 = pneg %p262
        %p553 = pneg %p293
        %p554 = pneg %p290
        %s555 = sand.u32 %s280, 1
        %s556 = scalar_lea.sflag [#allocation4], %s555
        %s557 = sand.u32 %s280, 1
        %s558 = smul.addr %s557, 128
        %s559 = scalar_lea.vmem [#allocation17], %s558
        %s560 = smul.u32 16, %s37
        %s561 = smul.u32 %s37, 16
        %s562 = ssub.s32 %s561, 1
        %p563 = scmp.gt.s32.totalorder %s562, 0
        %s564 = scalar_select %p563, %s562, 0
        %s565 = sadd.s32 %s37, 1
        %s566 = smul.u32 %s565, 16
        %p567 = scmp.lt.s32.totalorder %s566, 15
        %s568 = scalar_select %p567, %s566, 15
        %s569 = smul.u32 16, %s37
        %v571 = vld [vmem:[%s473] sm:$0xf]
        %v572 = vld [vmem:[%s473 + $0x4] sm:$0xf]
        %v573 = vld [vmem:[%s473 + $0x8] sm:$0xf]
        %v574 = vld [vmem:[%s473 + $0xc] sm:$0xf]
        %v575 = vld [vmem:[%s473 + $0x10] sm:$0xf]
        %v576 = vld [vmem:[%s473 + $0x14] sm:$0xf]
        %v577 = vld [vmem:[%s473 + $0x18] sm:$0xf]
        %v578 = vld [vmem:[%s473 + $0x1c] sm:$0xf]
        %v579 = vld [vmem:[%s473 + $0x20] sm:$0xf]
        %v580 = vld [vmem:[%s473 + $0x24] sm:$0xf]
        %v581 = vld [vmem:[%s473 + $0x28] sm:$0xf]
        %v582 = vld [vmem:[%s473 + $0x2c] sm:$0xf]
        %v583 = vld [vmem:[%s473 + $0x30] sm:$0xf]
        %v584 = vld [vmem:[%s473 + $0x34] sm:$0xf]
        %v585 = vld [vmem:[%s473 + $0x38] sm:$0xf]
        %v586 = vld [vmem:[%s473 + $0x3c] sm:$0xf]
        %v587 = vld [vmem:[%s473 + $0x40] sm:$0xf]
        %v588 = vld [vmem:[%s473 + $0x44] sm:$0xf]
        %v589 = vld [vmem:[%s473 + $0x48] sm:$0xf]
        %v590 = vld [vmem:[%s473 + $0x4c] sm:$0xf]
        %v591 = vld [vmem:[%s473 + $0x50] sm:$0xf]
        %v592 = vld [vmem:[%s473 + $0x54] sm:$0xf]
        %v593 = vld [vmem:[%s473 + $0x58] sm:$0xf]
        %v594 = vld [vmem:[%s473 + $0x5c] sm:$0xf]
        %v595 = vld [vmem:[%s473 + $0x60] sm:$0xf]
        %v596 = vld [vmem:[%s473 + $0x64] sm:$0xf]
        %v597 = vld [vmem:[%s473 + $0x68] sm:$0xf]
        %v598 = vld [vmem:[%s473 + $0x6c] sm:$0xf]
        %v599 = vld [vmem:[%s473 + $0x70] sm:$0xf]
        %v600 = vld [vmem:[%s473 + $0x74] sm:$0xf]
        %v601 = vld [vmem:[%s473 + $0x78] sm:$0xf]
        %v602 = vld [vmem:[%s473 + $0x7c] sm:$0xf]
        %v603 = vld [vmem:[%s482] sm:$0xf]
        %v604 = vld [vmem:[%s482 + $0x4] sm:$0xf]
        %v605 = vld [vmem:[%s491] sm:$0xf]
        %v606 = vld [vmem:[%s491 + $0x4] sm:$0xf]
        %v607 = vld [vmem:[#allocation8] sm:$0xf]
        %v608 = vld [vmem:[#allocation8 + $0x4] sm:$0xf]
        %v609 = vld [vmem:[#allocation8 + $0x8] sm:$0xf]
        %v610 = vld [vmem:[#allocation8 + $0xc] sm:$0xf]
        %v611 = vld [vmem:[#allocation8 + $0x10] sm:$0xf]
        %v612 = vld [vmem:[#allocation8 + $0x14] sm:$0xf]
        %v613 = vld [vmem:[#allocation8 + $0x18] sm:$0xf]
        %v614 = vld [vmem:[#allocation8 + $0x1c] sm:$0xf]
        %v615 = vld [vmem:[#allocation8 + $0x20] sm:$0xf]
        %v616 = vld [vmem:[#allocation8 + $0x24] sm:$0xf]
        %v617 = vld [vmem:[#allocation8 + $0x28] sm:$0xf]
        %v618 = vld [vmem:[#allocation8 + $0x2c] sm:$0xf]
        %v619 = vld [vmem:[#allocation8 + $0x30] sm:$0xf]
        %v620 = vld [vmem:[#allocation8 + $0x34] sm:$0xf]
        %v621 = vld [vmem:[#allocation8 + $0x38] sm:$0xf]
        %v622 = vld [vmem:[#allocation8 + $0x3c] sm:$0xf]
        %v623 = vld [vmem:[#allocation13] sm:$0x1]
        %v625 = vlaneseq
        %v626 = vshrl.u32 %v625, 7
        %v627 = vsub.s32 0, %v626
        %v628 = vrot.slane %v623, %v627
        %v666 = vunpack.c.l.b16 %v603
        %v667 = vunpack.c.l.b16 %v604
        %v668 = vunpack.c.l.b16 %v571
        %v669 = vunpack.c.l.b16 %v572
        %v670 = vunpack.c.l.b16 %v573
        %v671 = vunpack.c.l.b16 %v574
        %v672 = vunpack.c.l.b16 %v575
        %v673 = vunpack.c.l.b16 %v576
        %v674 = vunpack.c.l.b16 %v577
        %v675 = vunpack.c.l.b16 %v578
        %v676 = vunpack.c.l.b16 %v579
        %v677 = vunpack.c.l.b16 %v580
        %v678 = vunpack.c.l.b16 %v581
        %v679 = vunpack.c.l.b16 %v582
        %v680 = vunpack.c.l.b16 %v583
        %v681 = vunpack.c.l.b16 %v584
        %v682 = vunpack.c.l.b16 %v585
        %v683 = vunpack.c.l.b16 %v586
        %v684 = vunpack.c.l.b16 %v587
        %v685 = vunpack.c.l.b16 %v588
        %v686 = vunpack.c.l.b16 %v589
        %v687 = vunpack.c.l.b16 %v590
        %v688 = vunpack.c.l.b16 %v591
        %v689 = vunpack.c.l.b16 %v592
        %v690 = vunpack.c.l.b16 %v593
        %v691 = vunpack.c.l.b16 %v594
        %v692 = vunpack.c.l.b16 %v595
        %v693 = vunpack.c.l.b16 %v596
        %v694 = vunpack.c.l.b16 %v597
        %v695 = vunpack.c.l.b16 %v598
        %v696 = vunpack.c.l.b16 %v599
        %v697 = vunpack.c.l.b16 %v600
        %v698 = vunpack.c.l.b16 %v601
        %v699 = vunpack.c.l.b16 %v602
        %v700 = vunpack.c.l.b16 %v605
        %v701 = vunpack.c.l.b16 %v606
        %v702 = vpack.c.b16 %v667, %v666
        %v703 = vpack.c.b16 %v669, %v668
        %v704 = vpack.c.b16 %v671, %v670
        %v705 = vpack.c.b16 %v673, %v672
        %v706 = vpack.c.b16 %v675, %v674
        %v707 = vpack.c.b16 %v677, %v676
        %v708 = vpack.c.b16 %v679, %v678
        %v709 = vpack.c.b16 %v681, %v680
        %v710 = vpack.c.b16 %v683, %v682
        %v711 = vpack.c.b16 %v685, %v684
        %v712 = vpack.c.b16 %v687, %v686
        %v713 = vpack.c.b16 %v689, %v688
        %v714 = vpack.c.b16 %v691, %v690
        %v715 = vpack.c.b16 %v693, %v692
        %v716 = vpack.c.b16 %v695, %v694
        %v717 = vpack.c.b16 %v697, %v696
        %v718 = vpack.c.b16 %v699, %v698
        %v719 = vpack.c.b16 %v701, %v700
        %v754 = vunpack.c.l.b16 %v607
        %v755 = vunpack.c.l.b16 %v608
        %v756 = vunpack.c.l.b16 %v609
        %v757 = vunpack.c.l.b16 %v610
        %v758 = vunpack.c.l.b16 %v611
        %v759 = vunpack.c.l.b16 %v612
        %v760 = vunpack.c.l.b16 %v613
        %v761 = vunpack.c.l.b16 %v614
        %v762 = vunpack.c.l.b16 %v615
        %v763 = vunpack.c.l.b16 %v616
        %v764 = vunpack.c.l.b16 %v617
        %v765 = vunpack.c.l.b16 %v618
        %v766 = vunpack.c.l.b16 %v619
        %v767 = vunpack.c.l.b16 %v620
        %v768 = vunpack.c.l.b16 %v621
        %v769 = vunpack.c.l.b16 %v622
        %v770 = vpack.c.b16 %v755, %v754
        %v771 = vpack.c.b16 %v757, %v756
        %v772 = vpack.c.b16 %v759, %v758
        %v773 = vpack.c.b16 %v761, %v760
        %v774 = vpack.c.b16 %v763, %v762
        %v775 = vpack.c.b16 %v765, %v764
        %v776 = vpack.c.b16 %v767, %v766
        %v777 = vpack.c.b16 %v769, %v768
        %786 = vmatprep.subr.bf16.mxu0 0
        %787 = vmatpush1.bf16.msra.mxu0 %v770
        %788 = vmatprep.subr.bf16.mxu0 0
        %789 = vmatpush1.bf16.msra.mxu0 %v771
        %790 = vmatprep.subr.bf16.mxu0 0
        %791 = vmatpush1.bf16.msra.mxu0 %v772
        %792 = vmatprep.subr.bf16.mxu0 0
        %793 = vmatpush1.bf16.msra.mxu0 %v773
        %794 = vmatprep.subr.bf16.mxu0 0
        %795 = vmatpush1.bf16.msra.mxu0 %v774
        %796 = vmatprep.subr.bf16.mxu0 0
        %797 = vmatpush1.bf16.msra.mxu0 %v775
        %798 = vmatprep.subr.bf16.mxu0 0
        %799 = vmatpush1.bf16.msra.mxu0 %v776
        %800 = vmatprep.subr.bf16.mxu0 0
        %801 = vmatpush1.bf16.msra.mxu0 %v777
        %802 = vmatprep.subr.bf16.mxu0 0
        %803 = vmatpush1.bf16.msra.mxu0 0
        %804 = vmatprep.subr.bf16.mxu0 0
        %805 = vmatpush1.bf16.msra.mxu0 0
        %806 = vmatprep.subr.bf16.mxu0 0
        %807 = vmatpush1.bf16.msra.mxu0 0
        %808 = vmatprep.subr.bf16.mxu0 0
        %809 = vmatpush1.bf16.msra.mxu0 0
        %810 = vmatprep.subr.bf16.mxu0 0
        %811 = vmatpush1.bf16.msra.mxu0 0
        %812 = vmatprep.subr.bf16.mxu0 0
        %813 = vmatpush1.bf16.msra.mxu0 0
        %814 = vmatprep.subr.bf16.mxu0 0
        %815 = vmatpush1.bf16.msra.mxu0 0
        %816 = vmatprep.subr.bf16.mxu0 0
        %817 = vmatpush1.bf16.msra.mxu0 0
        %818 = vmatprep.mubr.bf16.mxu0 0
        %819 = vmatmul.mubr.bf16.gmra.mrb[0].mxu0 %v702
        %v820 = vpop.f32.mrb[0].mxu0
        %v821 = vadd.f32 %v628, %v820
        %v822 = vpop.f32.mrb[0].mxu0
        %v823 = vpop.f32.mrb[0].mxu0
        %v824 = vadd.f32 %v628, %v823
        %v825 = vpop.f32.mrb[0].mxu0
        %826 = vmatprep.mubr.bf16.mxu0 0
        %827 = vmatmul.mubr.bf16.gmra.mrb[0].mxu0 %v703
        %v828 = vpop.f32.mrb[0].mxu0
        %v829 = vadd.f32 %v628, %v828
        %v830 = vpop.f32.mrb[0].mxu0
        %v831 = vpop.f32.mrb[0].mxu0
        %v832 = vadd.f32 %v628, %v831
        %v833 = vpop.f32.mrb[0].mxu0
        %834 = vmatprep.mubr.bf16.mxu0 0
        %835 = vmatmul.mubr.bf16.gmra.mrb[0].mxu0 %v704
        %v836 = vpop.f32.mrb[0].mxu0
        %v837 = vadd.f32 %v628, %v836
        %v838 = vpop.f32.mrb[0].mxu0
        %v839 = vpop.f32.mrb[0].mxu0
        %v840 = vadd.f32 %v628, %v839
        %v841 = vpop.f32.mrb[0].mxu0
        %842 = vmatprep.mubr.bf16.mxu0 0
        %843 = vmatmul.mubr.bf16.gmra.mrb[0].mxu0 %v705
        %v844 = vpop.f32.mrb[0].mxu0
        %v845 = vadd.f32 %v628, %v844
        %v846 = vpop.f32.mrb[0].mxu0
        %v847 = vpop.f32.mrb[0].mxu0
        %v848 = vadd.f32 %v628, %v847
        %v849 = vpop.f32.mrb[0].mxu0
        %850 = vmatprep.mubr.bf16.mxu0 0
        %851 = vmatmul.mubr.bf16.gmra.mrb[0].mxu0 %v706
        %v852 = vpop.f32.mrb[0].mxu0
        %v853 = vadd.f32 %v628, %v852
        %v854 = vpop.f32.mrb[0].mxu0
        %v855 = vpop.f32.mrb[0].mxu0
        %v856 = vadd.f32 %v628, %v855
        %v857 = vpop.f32.mrb[0].mxu0
        %858 = vmatprep.mubr.bf16.mxu0 0
        %859 = vmatmul.mubr.bf16.gmra.mrb[0].mxu0 %v707
        %v860 = vpop.f32.mrb[0].mxu0
        %v861 = vadd.f32 %v628, %v860
        %v862 = vpop.f32.mrb[0].mxu0
        %v863 = vpop.f32.mrb[0].mxu0
        %v864 = vadd.f32 %v628, %v863
        %v865 = vpop.f32.mrb[0].mxu0
        %866 = vmatprep.mubr.bf16.mxu0 0
        %867 = vmatmul.mubr.bf16.gmra.mrb[0].mxu0 %v708
        %v868 = vpop.f32.mrb[0].mxu0
        %v869 = vadd.f32 %v628, %v868
        %v870 = vpop.f32.mrb[0].mxu0
        %v871 = vpop.f32.mrb[0].mxu0
        %v872 = vadd.f32 %v628, %v871
        %v873 = vpop.f32.mrb[0].mxu0
        %874 = vmatprep.mubr.bf16.mxu0 0
        %875 = vmatmul.mubr.bf16.gmra.mrb[0].mxu0 %v709
        %v876 = vpop.f32.mrb[0].mxu0
        %v877 = vadd.f32 %v628, %v876
        %v878 = vpop.f32.mrb[0].mxu0
        %v879 = vpop.f32.mrb[0].mxu0
        %v880 = vadd.f32 %v628, %v879
        %v881 = vpop.f32.mrb[0].mxu0
        %882 = vmatprep.mubr.bf16.mxu0 0
        %883 = vmatmul.mubr.bf16.gmra.mrb[0].mxu0 %v710
        %v884 = vpop.f32.mrb[0].mxu0
        %v885 = vadd.f32 %v628, %v884
        %v886 = vpop.f32.mrb[0].mxu0
        %v887 = vpop.f32.mrb[0].mxu0
        %v888 = vadd.f32 %v628, %v887
        %v889 = vpop.f32.mrb[0].mxu0
        %890 = vmatprep.mubr.bf16.mxu0 0
        %891 = vmatmul.mubr.bf16.gmra.mrb[0].mxu0 %v711
        %v892 = vpop.f32.mrb[0].mxu0
        %v893 = vadd.f32 %v628, %v892
        %v894 = vpop.f32.mrb[0].mxu0
        %v895 = vpop.f32.mrb[0].mxu0
        %v896 = vadd.f32 %v628, %v895
        %v897 = vpop.f32.mrb[0].mxu0
        %898 = vmatprep.mubr.bf16.mxu0 0
        %899 = vmatmul.mubr.bf16.gmra.mrb[0].mxu0 %v712
        %v900 = vpop.f32.mrb[0].mxu0
        %v901 = vadd.f32 %v628, %v900
        %v902 = vpop.f32.mrb[0].mxu0
        %v903 = vpop.f32.mrb[0].mxu0
        %v904 = vadd.f32 %v628, %v903
        %v905 = vpop.f32.mrb[0].mxu0
        %906 = vmatprep.mubr.bf16.mxu0 0
        %907 = vmatmul.mubr.bf16.gmra.mrb[0].mxu0 %v713
        %v908 = vpop.f32.mrb[0].mxu0
        %v909 = vadd.f32 %v628, %v908
        %v910 = vpop.f32.mrb[0].mxu0
        %v911 = vpop.f32.mrb[0].mxu0
        %v912 = vadd.f32 %v628, %v911
        %v913 = vpop.f32.mrb[0].mxu0
        %914 = vmatprep.mubr.bf16.mxu0 0
        %915 = vmatmul.mubr.bf16.gmra.mrb[0].mxu0 %v714
        %v916 = vpop.f32.mrb[0].mxu0
        %v917 = vadd.f32 %v628, %v916
        %v918 = vpop.f32.mrb[0].mxu0
        %v919 = vpop.f32.mrb[0].mxu0
        %v920 = vadd.f32 %v628, %v919
        %v921 = vpop.f32.mrb[0].mxu0
        %922 = vmatprep.mubr.bf16.mxu0 0
        %923 = vmatmul.mubr.bf16.gmra.mrb[0].mxu0 %v715
        %v924 = vpop.f32.mrb[0].mxu0
        %v925 = vadd.f32 %v628, %v924
        %v926 = vpop.f32.mrb[0].mxu0
        %v927 = vpop.f32.mrb[0].mxu0
        %v928 = vadd.f32 %v628, %v927
        %v929 = vpop.f32.mrb[0].mxu0
        %930 = vmatprep.mubr.bf16.mxu0 0
        %931 = vmatmul.mubr.bf16.gmra.mrb[0].mxu0 %v716
        %v932 = vpop.f32.mrb[0].mxu0
        %v933 = vadd.f32 %v628, %v932
        %v934 = vpop.f32.mrb[0].mxu0
        %v935 = vpop.f32.mrb[0].mxu0
        %v936 = vadd.f32 %v628, %v935
        %v937 = vpop.f32.mrb[0].mxu0
        %938 = vmatprep.mubr.bf16.mxu0 0
        %939 = vmatmul.mubr.bf16.gmra.mrb[0].mxu0 %v717
        %v940 = vpop.f32.mrb[0].mxu0
        %v941 = vadd.f32 %v628, %v940
        %v942 = vpop.f32.mrb[0].mxu0
        %v943 = vpop.f32.mrb[0].mxu0
        %v944 = vadd.f32 %v628, %v943
        %v945 = vpop.f32.mrb[0].mxu0
        %946 = vmatprep.mubr.bf16.mxu0 0
        %947 = vmatmul.mubr.bf16.gmra.mrb[0].mxu0 %v718
        %v948 = vpop.f32.mrb[0].mxu0
        %v949 = vadd.f32 %v628, %v948
        %v950 = vpop.f32.mrb[0].mxu0
        %v951 = vpop.f32.mrb[0].mxu0
        %v952 = vadd.f32 %v628, %v951
        %v953 = vpop.f32.mrb[0].mxu0
        %954 = vmatprep.mubr.bf16.mxu0 0
        %955 = vmatmul.mubr.bf16.gmra.mrb[0].mxu0 %v719
        %v956 = vpop.f32.mrb[0].mxu0
        %v957 = vadd.f32 %v628, %v956
        %v958 = vpop.f32.mrb[0].mxu0
        %v959 = vpop.f32.mrb[0].mxu0
        %v960 = vadd.f32 %v628, %v959
        %v961 = vpop.f32.mrb[0].mxu0
        %962 = vdwg.mxu0
        %v963 = vmax.f32 %v821, 0.0
        %v964 = vmax.f32 %v824, 0.0
        %v965 = vmax.f32 %v829, 0.0
        %v966 = vmax.f32 %v832, 0.0
        %v967 = vmax.f32 %v837, 0.0
        %v968 = vmax.f32 %v840, 0.0
        %v969 = vmax.f32 %v845, 0.0
        %v970 = vmax.f32 %v848, 0.0
        %v971 = vmax.f32 %v853, 0.0
        %v972 = vmax.f32 %v856, 0.0
        %v973 = vmax.f32 %v861, 0.0
        %v974 = vmax.f32 %v864, 0.0
        %v975 = vmax.f32 %v869, 0.0
        %v976 = vmax.f32 %v872, 0.0
        %v977 = vmax.f32 %v877, 0.0
        %v978 = vmax.f32 %v880, 0.0
        %v979 = vmax.f32 %v885, 0.0
        %v980 = vmax.f32 %v888, 0.0
        %v981 = vmax.f32 %v893, 0.0
        %v982 = vmax.f32 %v896, 0.0
        %v983 = vmax.f32 %v901, 0.0
        %v984 = vmax.f32 %v904, 0.0
        %v985 = vmax.f32 %v909, 0.0
        %v986 = vmax.f32 %v912, 0.0
        %v987 = vmax.f32 %v917, 0.0
        %v988 = vmax.f32 %v920, 0.0
        %v989 = vmax.f32 %v925, 0.0
        %v990 = vmax.f32 %v928, 0.0
        %v991 = vmax.f32 %v933, 0.0
        %v992 = vmax.f32 %v936, 0.0
        %v993 = vmax.f32 %v941, 0.0
        %v994 = vmax.f32 %v944, 0.0
        %v995 = vmax.f32 %v949, 0.0
        %v996 = vmax.f32 %v952, 0.0
        %v997 = vmax.f32 %v957, 0.0
        %v998 = vmax.f32 %v960, 0.0
        %p999 = scmp.gt.s32.totalorder %s37, 0
        %s1000 = scalar_select %p999, 1, 0
        %v1001 = vstv %s1000
        %vm1002 = vcmp.eq.s32.totalorder %v1001, 1
        %p1003 = scmp.lt.s32.totalorder %s37, 0
        %s1004 = scalar_select %p1003, 1, 0
        %v1005 = vstv %s1004
        %vm1006 = vcmp.eq.s32.totalorder %v1005, 1
        %v1007 = vsel %vm1002, 1, 0
        %v1008 = vsel %vm1006, 1, 0
        %vm1009 = vcmp.eq.s32.totalorder %v1007, 1
        %vm1010 = vcmp.eq.s32.totalorder %v1008, 1
        %v1011 = vsel %vm1009, %v963, 0.0
        %v1012 = vsel %vm1009, %v964, 0.0
        %v1013 = vsel 1, %v965, 0.0
        %v1014 = vsel 1, %v966, 0.0
        %v1015 = vsel 1, %v967, 0.0
        %v1016 = vsel 1, %v968, 0.0
        %v1017 = vsel 1, %v969, 0.0
        %v1018 = vsel 1, %v970, 0.0
        %v1019 = vsel 1, %v971, 0.0
        %v1020 = vsel 1, %v972, 0.0
        %v1021 = vsel 1, %v973, 0.0
        %v1022 = vsel 1, %v974, 0.0
        %v1023 = vsel 1, %v975, 0.0
        %v1024 = vsel 1, %v976, 0.0
        %v1025 = vsel 1, %v977, 0.0
        %v1026 = vsel 1, %v978, 0.0
        %v1027 = vsel 1, %v979, 0.0
        %v1028 = vsel 1, %v980, 0.0
        %v1029 = vsel 1, %v981, 0.0
        %v1030 = vsel 1, %v982, 0.0
        %v1031 = vsel 1, %v983, 0.0
        %v1032 = vsel 1, %v984, 0.0
        %v1033 = vsel 1, %v985, 0.0
        %v1034 = vsel 1, %v986, 0.0
        %v1035 = vsel 1, %v987, 0.0
        %v1036 = vsel 1, %v988, 0.0
        %v1037 = vsel 1, %v989, 0.0
        %v1038 = vsel 1, %v990, 0.0
        %v1039 = vsel 1, %v991, 0.0
        %v1040 = vsel 1, %v992, 0.0
        %v1041 = vsel 1, %v993, 0.0
        %v1042 = vsel 1, %v994, 0.0
        %v1043 = vsel 1, %v995, 0.0
        %v1044 = vsel 1, %v996, 0.0
        %v1045 = vsel %vm1010, %v997, 0.0
        %v1046 = vsel %vm1010, %v998, 0.0
        %v1047 = vlaneseq
        %v1048 = vshrl.u32 %v1047, 7
        %v1049 = vadd.s32 %v1048, 8
        %vm1050 = vcmp.eq.s32.totalorder %v1048, 0
        %vm1051 = vcmp.eq.s32.totalorder %v1049, 0
        %v1052 = vrot.slane %v1011, 7
        %v1053 = vrot.slane %v1012, 7
        %v1054 = vrot.slane %v1013, 7
        %v1055 = vrot.slane %v1014, 7
        %v1056 = vrot.slane %v1015, 7
        %v1057 = vrot.slane %v1016, 7
        %v1058 = vrot.slane %v1017, 7
        %v1059 = vrot.slane %v1018, 7
        %v1060 = vrot.slane %v1019, 7
        %v1061 = vrot.slane %v1020, 7
        %v1062 = vrot.slane %v1021, 7
        %v1063 = vrot.slane %v1022, 7
        %v1064 = vrot.slane %v1023, 7
        %v1065 = vrot.slane %v1024, 7
        %v1066 = vrot.slane %v1025, 7
        %v1067 = vrot.slane %v1026, 7
        %v1068 = vrot.slane %v1027, 7
        %v1069 = vrot.slane %v1028, 7
        %v1070 = vrot.slane %v1029, 7
        %v1071 = vrot.slane %v1030, 7
        %v1072 = vrot.slane %v1031, 7
        %v1073 = vrot.slane %v1032, 7
        %v1074 = vrot.slane %v1033, 7
        %v1075 = vrot.slane %v1034, 7
        %v1076 = vrot.slane %v1035, 7
        %v1077 = vrot.slane %v1036, 7
        %v1078 = vrot.slane %v1037, 7
        %v1079 = vrot.slane %v1038, 7
        %v1080 = vrot.slane %v1039, 7
        %v1081 = vrot.slane %v1040, 7
        %v1082 = vrot.slane %v1041, 7
        %v1083 = vrot.slane %v1042, 7
        %v1084 = vrot.slane %v1043, 7
        %v1085 = vrot.slane %v1044, 7
        %v1086 = vrot.slane %v1045, 7
        %v1087 = vrot.slane %v1046, 7
        %vm1088 = vcmp.lt.s32.totalorder %v1048, 1
        %v1089 = vsel %vm1088, %v1086, %v1087
        %v1090 = vsel %vm1088, %v1085, %v1086
        %v1091 = vsel %vm1088, %v1084, %v1085
        %v1092 = vsel %vm1088, %v1083, %v1084
        %v1093 = vsel %vm1088, %v1082, %v1083
        %v1094 = vsel %vm1088, %v1081, %v1082
        %v1095 = vsel %vm1088, %v1080, %v1081
        %v1096 = vsel %vm1088, %v1079, %v1080
        %v1097 = vsel %vm1088, %v1078, %v1079
        %v1098 = vsel %vm1088, %v1077, %v1078
        %v1099 = vsel %vm1088, %v1076, %v1077
        %v1100 = vsel %vm1088, %v1075, %v1076
        %v1101 = vsel %vm1088, %v1074, %v1075
        %v1102 = vsel %vm1088, %v1073, %v1074
        %v1103 = vsel %vm1088, %v1072, %v1073
        %v1104 = vsel %vm1088, %v1071, %v1072
        %v1105 = vsel %vm1088, %v1070, %v1071
        %v1106 = vsel %vm1088, %v1069, %v1070
        %v1107 = vsel %vm1088, %v1068, %v1069
        %v1108 = vsel %vm1088, %v1067, %v1068
        %v1109 = vsel %vm1088, %v1066, %v1067
        %v1110 = vsel %vm1088, %v1065, %v1066
        %v1111 = vsel %vm1088, %v1064, %v1065
        %v1112 = vsel %vm1088, %v1063, %v1064
        %v1113 = vsel %vm1088, %v1062, %v1063
        %v1114 = vsel %vm1088, %v1061, %v1062
        %v1115 = vsel %vm1088, %v1060, %v1061
        %v1116 = vsel %vm1088, %v1059, %v1060
        %v1117 = vsel %vm1088, %v1058, %v1059
        %v1118 = vsel %vm1088, %v1057, %v1058
        %v1119 = vsel %vm1088, %v1056, %v1057
        %v1120 = vsel %vm1088, %v1055, %v1056
        %v1121 = vsel %vm1088, %v1054, %v1055
        %v1122 = vsel %vm1088, %v1053, %v1054
        %v1123 = vsel %vm1088, %v1052, %v1053
        %v1124 = vsel %vm1088, %v1087, %v1052
        %v1125 = vsel %vm1050, 1, 0
        %v1126 = vsel %vm1051, 1, 0
        %vm1127 = vcmp.eq.s32.totalorder %v1125, 1
        %vm1128 = vcmp.eq.s32.totalorder %v1126, 1
        %v1129 = vsel %vm1127, 0.0, %v1124
        %v1130 = vsel %vm1128, 0.0, %v1123
        %v1131 = vsel %vm1127, 0.0, %v1122
        %v1132 = vsel %vm1128, 0.0, %v1121
        %v1133 = vsel %vm1127, 0.0, %v1120
        %v1134 = vsel %vm1128, 0.0, %v1119
        %v1135 = vsel %vm1127, 0.0, %v1118
        %v1136 = vsel %vm1128, 0.0, %v1117
        %v1137 = vsel %vm1127, 0.0, %v1116
        %v1138 = vsel %vm1128, 0.0, %v1115
        %v1139 = vsel %vm1127, 0.0, %v1114
        %v1140 = vsel %vm1128, 0.0, %v1113
        %v1141 = vsel %vm1127, 0.0, %v1112
        %v1142 = vsel %vm1128, 0.0, %v1111
        %v1143 = vsel %vm1127, 0.0, %v1110
        %v1144 = vsel %vm1128, 0.0, %v1109
        %v1145 = vsel %vm1127, 0.0, %v1108
        %v1146 = vsel %vm1128, 0.0, %v1107
        %v1147 = vsel %vm1127, 0.0, %v1106
        %v1148 = vsel %vm1128, 0.0, %v1105
        %v1149 = vsel %vm1127, 0.0, %v1104
        %v1150 = vsel %vm1128, 0.0, %v1103
        %v1151 = vsel %vm1127, 0.0, %v1102
        %v1152 = vsel %vm1128, 0.0, %v1101
        %v1153 = vsel %vm1127, 0.0, %v1100
        %v1154 = vsel %vm1128, 0.0, %v1099
        %v1155 = vsel %vm1127, 0.0, %v1098
        %v1156 = vsel %vm1128, 0.0, %v1097
        %v1157 = vsel %vm1127, 0.0, %v1096
        %v1158 = vsel %vm1128, 0.0, %v1095
        %v1159 = vsel %vm1127, 0.0, %v1094
        %v1160 = vsel %vm1128, 0.0, %v1093
        %v1161 = vsel %vm1127, 0.0, %v1092
        %v1162 = vsel %vm1128, 0.0, %v1091
        %v1163 = vsel %vm1127, 0.0, %v1090
        %v1164 = vsel %vm1128, 0.0, %v1089
        %vm1165 = vcmp.eq.s32.totalorder %v1048, 15
        %vm1166 = vcmp.eq.s32.totalorder %v1049, 15
        %v1167 = vrot.slane %v1011, 1
        %v1168 = vrot.slane %v1012, 1
        %v1169 = vrot.slane %v1013, 1
        %v1170 = vrot.slane %v1014, 1
        %v1171 = vrot.slane %v1015, 1
        %v1172 = vrot.slane %v1016, 1
        %v1173 = vrot.slane %v1017, 1
        %v1174 = vrot.slane %v1018, 1
        %v1175 = vrot.slane %v1019, 1
        %v1176 = vrot.slane %v1020, 1
        %v1177 = vrot.slane %v1021, 1
        %v1178 = vrot.slane %v1022, 1
        %v1179 = vrot.slane %v1023, 1
        %v1180 = vrot.slane %v1024, 1
        %v1181 = vrot.slane %v1025, 1
        %v1182 = vrot.slane %v1026, 1
        %v1183 = vrot.slane %v1027, 1
        %v1184 = vrot.slane %v1028, 1
        %v1185 = vrot.slane %v1029, 1
        %v1186 = vrot.slane %v1030, 1
        %v1187 = vrot.slane %v1031, 1
        %v1188 = vrot.slane %v1032, 1
        %v1189 = vrot.slane %v1033, 1
        %v1190 = vrot.slane %v1034, 1
        %v1191 = vrot.slane %v1035, 1
        %v1192 = vrot.slane %v1036, 1
        %v1193 = vrot.slane %v1037, 1
        %v1194 = vrot.slane %v1038, 1
        %v1195 = vrot.slane %v1039, 1
        %v1196 = vrot.slane %v1040, 1
        %v1197 = vrot.slane %v1041, 1
        %v1198 = vrot.slane %v1042, 1
        %v1199 = vrot.slane %v1043, 1
        %v1200 = vrot.slane %v1044, 1
        %v1201 = vrot.slane %v1045, 1
        %v1202 = vrot.slane %v1046, 1
        %vm1203 = vcmp.lt.s32.totalorder %v1048, 7
        %v1204 = vsel %vm1203, %v1201, %v1202
        %v1205 = vsel %vm1203, %v1200, %v1201
        %v1206 = vsel %vm1203, %v1199, %v1200
        %v1207 = vsel %vm1203, %v1198, %v1199
        %v1208 = vsel %vm1203, %v1197, %v1198
        %v1209 = vsel %vm1203, %v1196, %v1197
        %v1210 = vsel %vm1203, %v1195, %v1196
        %v1211 = vsel %vm1203, %v1194, %v1195
        %v1212 = vsel %vm1203, %v1193, %v1194
        %v1213 = vsel %vm1203, %v1192, %v1193
        %v1214 = vsel %vm1203, %v1191, %v1192
        %v1215 = vsel %vm1203, %v1190, %v1191
        %v1216 = vsel %vm1203, %v1189, %v1190
        %v1217 = vsel %vm1203, %v1188, %v1189
        %v1218 = vsel %vm1203, %v1187, %v1188
        %v1219 = vsel %vm1203, %v1186, %v1187
        %v1220 = vsel %vm1203, %v1185, %v1186
        %v1221 = vsel %vm1203, %v1184, %v1185
        %v1222 = vsel %vm1203, %v1183, %v1184
        %v1223 = vsel %vm1203, %v1182, %v1183
        %v1224 = vsel %vm1203, %v1181, %v1182
        %v1225 = vsel %vm1203, %v1180, %v1181
        %v1226 = vsel %vm1203, %v1179, %v1180
        %v1227 = vsel %vm1203, %v1178, %v1179
        %v1228 = vsel %vm1203, %v1177, %v1178
        %v1229 = vsel %vm1203, %v1176, %v1177
        %v1230 = vsel %vm1203, %v1175, %v1176
        %v1231 = vsel %vm1203, %v1174, %v1175
        %v1232 = vsel %vm1203, %v1173, %v1174
        %v1233 = vsel %vm1203, %v1172, %v1173
        %v1234 = vsel %vm1203, %v1171, %v1172
        %v1235 = vsel %vm1203, %v1170, %v1171
        %v1236 = vsel %vm1203, %v1169, %v1170
        %v1237 = vsel %vm1203, %v1168, %v1169
        %v1238 = vsel %vm1203, %v1167, %v1168
        %v1239 = vsel %vm1203, %v1202, %v1167
        %v1240 = vsel %vm1165, 1, 0
        %v1241 = vsel %vm1166, 1, 0
        %vm1242 = vcmp.eq.s32.totalorder %v1240, 1
        %vm1243 = vcmp.eq.s32.totalorder %v1241, 1
        %v1244 = vsel %vm1242, 0.0, %v1238
        %v1245 = vsel %vm1243, 0.0, %v1237
        %v1246 = vsel %vm1242, 0.0, %v1236
        %v1247 = vsel %vm1243, 0.0, %v1235
        %v1248 = vsel %vm1242, 0.0, %v1234
        %v1249 = vsel %vm1243, 0.0, %v1233
        %v1250 = vsel %vm1242, 0.0, %v1232
        %v1251 = vsel %vm1243, 0.0, %v1231
        %v1252 = vsel %vm1242, 0.0, %v1230
        %v1253 = vsel %vm1243, 0.0, %v1229
        %v1254 = vsel %vm1242, 0.0, %v1228
        %v1255 = vsel %vm1243, 0.0, %v1227
        %v1256 = vsel %vm1242, 0.0, %v1226
        %v1257 = vsel %vm1243, 0.0, %v1225
        %v1258 = vsel %vm1242, 0.0, %v1224
        %v1259 = vsel %vm1243, 0.0, %v1223
        %v1260 = vsel %vm1242, 0.0, %v1222
        %v1261 = vsel %vm1243, 0.0, %v1221
        %v1262 = vsel %vm1242, 0.0, %v1220
        %v1263 = vsel %vm1243, 0.0, %v1219
        %v1264 = vsel %vm1242, 0.0, %v1218
        %v1265 = vsel %vm1243, 0.0, %v1217
        %v1266 = vsel %vm1242, 0.0, %v1216
        %v1267 = vsel %vm1243, 0.0, %v1215
        %v1268 = vsel %vm1242, 0.0, %v1214
        %v1269 = vsel %vm1243, 0.0, %v1213
        %v1270 = vsel %vm1242, 0.0, %v1212
        %v1271 = vsel %vm1243, 0.0, %v1211
        %v1272 = vsel %vm1242, 0.0, %v1210
        %v1273 = vsel %vm1243, 0.0, %v1209
        %v1274 = vsel %vm1242, 0.0, %v1208
        %v1275 = vsel %vm1243, 0.0, %v1207
        %v1276 = vsel %vm1242, 0.0, %v1206
        %v1277 = vsel %vm1243, 0.0, %v1205
        %v1278 = vsel %vm1242, 0.0, %v1204
        %v1279 = vsel %vm1243, 0.0, %v1239
        %v1280 = vpack.c.bf16 %v1130, %v1129
        %v1281 = vpack.c.bf16 %v1132, %v1131
        %v1282 = vpack.c.bf16 %v1134, %v1133
        %v1283 = vpack.c.bf16 %v1136, %v1135
        %v1284 = vpack.c.bf16 %v1138, %v1137
        %v1285 = vpack.c.bf16 %v1140, %v1139
        %v1286 = vpack.c.bf16 %v1142, %v1141
        %v1287 = vpack.c.bf16 %v1144, %v1143
        %v1288 = vpack.c.bf16 %v1146, %v1145
        %v1289 = vpack.c.bf16 %v1148, %v1147
        %v1290 = vpack.c.bf16 %v1150, %v1149
        %v1291 = vpack.c.bf16 %v1152, %v1151
        %v1292 = vpack.c.bf16 %v1154, %v1153
        %v1293 = vpack.c.bf16 %v1156, %v1155
        %v1294 = vpack.c.bf16 %v1158, %v1157
        %v1295 = vpack.c.bf16 %v1160, %v1159
        %v1296 = vpack.c.bf16 %v1162, %v1161
        %v1297 = vpack.c.bf16 %v1164, %v1163
        %v1298 = vpack.c.bf16 %v1012, %v1011
        %v1299 = vpack.c.bf16 %v1014, %v1013
        %v1300 = vpack.c.bf16 %v1016, %v1015
        %v1301 = vpack.c.bf16 %v1018, %v1017
        %v1302 = vpack.c.bf16 %v1020, %v1019
        %v1303 = vpack.c.bf16 %v1022, %v1021
        %v1304 = vpack.c.bf16 %v1024, %v1023
        %v1305 = vpack.c.bf16 %v1026, %v1025
        %v1306 = vpack.c.bf16 %v1028, %v1027
        %v1307 = vpack.c.bf16 %v1030, %v1029
        %v1308 = vpack.c.bf16 %v1032, %v1031
        %v1309 = vpack.c.bf16 %v1034, %v1033
        %v1310 = vpack.c.bf16 %v1036, %v1035
        %v1311 = vpack.c.bf16 %v1038, %v1037
        %v1312 = vpack.c.bf16 %v1040, %v1039
        %v1313 = vpack.c.bf16 %v1042, %v1041
        %v1314 = vpack.c.bf16 %v1044, %v1043
        %v1315 = vpack.c.bf16 %v1046, %v1045
        %v1316 = vpack.c.bf16 %v1245, %v1244
        %v1317 = vpack.c.bf16 %v1247, %v1246
        %v1318 = vpack.c.bf16 %v1249, %v1248
        %v1319 = vpack.c.bf16 %v1251, %v1250
        %v1320 = vpack.c.bf16 %v1253, %v1252
        %v1321 = vpack.c.bf16 %v1255, %v1254
        %v1322 = vpack.c.bf16 %v1257, %v1256
        %v1323 = vpack.c.bf16 %v1259, %v1258
        %v1324 = vpack.c.bf16 %v1261, %v1260
        %v1325 = vpack.c.bf16 %v1263, %v1262
        %v1326 = vpack.c.bf16 %v1265, %v1264
        %v1327 = vpack.c.bf16 %v1267, %v1266
        %v1328 = vpack.c.bf16 %v1269, %v1268
        %v1329 = vpack.c.bf16 %v1271, %v1270
        %v1330 = vpack.c.bf16 %v1273, %v1272
        %v1331 = vpack.c.bf16 %v1275, %v1274
        %v1332 = vpack.c.bf16 %v1277, %v1276
        %v1333 = vpack.c.bf16 %v1279, %v1278
        %v1334 = vld [vmem:[#allocation10] sm:$0xf]
        %v1335 = vld [vmem:[#allocation10 + $0x4] sm:$0xf]
        %v1336 = vld [vmem:[#allocation10 + $0x8] sm:$0xf]
        %v1337 = vld [vmem:[#allocation10 + $0xc] sm:$0xf]
        %v1338 = vld [vmem:[#allocation10 + $0x10] sm:$0xf]
        %v1339 = vld [vmem:[#allocation10 + $0x14] sm:$0xf]
        %v1340 = vld [vmem:[#allocation10 + $0x18] sm:$0xf]
        %v1341 = vld [vmem:[#allocation10 + $0x1c] sm:$0xf]
        %v1342 = vld [vmem:[#allocation10 + $0x20] sm:$0xf]
        %v1343 = vld [vmem:[#allocation10 + $0x24] sm:$0xf]
        %v1344 = vld [vmem:[#allocation10 + $0x28] sm:$0xf]
        %v1345 = vld [vmem:[#allocation10 + $0x2c] sm:$0xf]
        %v1346 = vld [vmem:[#allocation10 + $0x30] sm:$0xf]
        %v1347 = vld [vmem:[#allocation10 + $0x34] sm:$0xf]
        %v1348 = vld [vmem:[#allocation10 + $0x38] sm:$0xf]
        %v1349 = vld [vmem:[#allocation10 + $0x3c] sm:$0xf]
        %v1350 = vld [vmem:[#allocation10 + $0x40] sm:$0xf]
        %v1351 = vld [vmem:[#allocation10 + $0x44] sm:$0xf]
        %v1352 = vld [vmem:[#allocation10 + $0x48] sm:$0xf]
        %v1353 = vld [vmem:[#allocation10 + $0x4c] sm:$0xf]
        %v1354 = vld [vmem:[#allocation10 + $0x50] sm:$0xf]
        %v1355 = vld [vmem:[#allocation10 + $0x54] sm:$0xf]
        %v1356 = vld [vmem:[#allocation10 + $0x58] sm:$0xf]
        %v1357 = vld [vmem:[#allocation10 + $0x5c] sm:$0xf]
        %v1358 = vld [vmem:[#allocation10 + $0x60] sm:$0xf]
        %v1359 = vld [vmem:[#allocation10 + $0x64] sm:$0xf]
        %v1360 = vld [vmem:[#allocation10 + $0x68] sm:$0xf]
        %v1361 = vld [vmem:[#allocation10 + $0x6c] sm:$0xf]
        %v1362 = vld [vmem:[#allocation10 + $0x70] sm:$0xf]
        %v1363 = vld [vmem:[#allocation10 + $0x74] sm:$0xf]
        %v1364 = vld [vmem:[#allocation10 + $0x78] sm:$0xf]
        %v1365 = vld [vmem:[#allocation10 + $0x7c] sm:$0xf]
        %v1366 = vld [vmem:[#allocation10 + $0x80] sm:$0xf]
        %v1367 = vld [vmem:[#allocation10 + $0x84] sm:$0xf]
        %v1368 = vld [vmem:[#allocation10 + $0x88] sm:$0xf]
        %v1369 = vld [vmem:[#allocation10 + $0x8c] sm:$0xf]
        %v1370 = vld [vmem:[#allocation10 + $0x90] sm:$0xf]
        %v1371 = vld [vmem:[#allocation10 + $0x94] sm:$0xf]
        %v1372 = vld [vmem:[#allocation10 + $0x98] sm:$0xf]
        %v1373 = vld [vmem:[#allocation10 + $0x9c] sm:$0xf]
        %v1374 = vld [vmem:[#allocation10 + $0xa0] sm:$0xf]
        %v1375 = vld [vmem:[#allocation10 + $0xa4] sm:$0xf]
        %v1376 = vld [vmem:[#allocation10 + $0xa8] sm:$0xf]
        %v1377 = vld [vmem:[#allocation10 + $0xac] sm:$0xf]
        %v1378 = vld [vmem:[#allocation10 + $0xb0] sm:$0xf]
        %v1379 = vld [vmem:[#allocation10 + $0xb4] sm:$0xf]
        %v1380 = vld [vmem:[#allocation10 + $0xb8] sm:$0xf]
        %v1381 = vld [vmem:[#allocation10 + $0xbc] sm:$0xf]
        %v1382 = vld [vmem:[#allocation10 + $0xc0] sm:$0xf]
        %v1383 = vld [vmem:[#allocation10 + $0xc4] sm:$0xf]
        %v1384 = vld [vmem:[#allocation10 + $0xc8] sm:$0xf]
        %v1385 = vld [vmem:[#allocation10 + $0xcc] sm:$0xf]
        %v1386 = vld [vmem:[#allocation10 + $0xd0] sm:$0xf]
        %v1387 = vld [vmem:[#allocation10 + $0xd4] sm:$0xf]
        %v1388 = vld [vmem:[#allocation10 + $0xd8] sm:$0xf]
        %v1389 = vld [vmem:[#allocation10 + $0xdc] sm:$0xf]
        %v1390 = vld [vmem:[#allocation10 + $0xe0] sm:$0xf]
        %v1391 = vld [vmem:[#allocation10 + $0xe4] sm:$0xf]
        %v1392 = vld [vmem:[#allocation10 + $0xe8] sm:$0xf]
        %v1393 = vld [vmem:[#allocation10 + $0xec] sm:$0xf]
        %v1394 = vld [vmem:[#allocation10 + $0xf0] sm:$0xf]
        %v1395 = vld [vmem:[#allocation10 + $0xf4] sm:$0xf]
        %v1396 = vld [vmem:[#allocation10 + $0xf8] sm:$0xf]
        %v1397 = vld [vmem:[#allocation10 + $0xfc] sm:$0xf]
        %v1398 = vld [vmem:[#allocation10 + $0x100] sm:$0xf]
        %v1399 = vld [vmem:[#allocation10 + $0x104] sm:$0xf]
        %v1400 = vld [vmem:[#allocation10 + $0x108] sm:$0xf]
        %v1401 = vld [vmem:[#allocation10 + $0x10c] sm:$0xf]
        %v1402 = vld [vmem:[#allocation10 + $0x110] sm:$0xf]
        %v1403 = vld [vmem:[#allocation10 + $0x114] sm:$0xf]
        %v1404 = vld [vmem:[#allocation10 + $0x118] sm:$0xf]
        %v1405 = vld [vmem:[#allocation10 + $0x11c] sm:$0xf]
        %v1406 = vld [vmem:[#allocation10 + $0x120] sm:$0xf]
        %v1407 = vld [vmem:[#allocation10 + $0x124] sm:$0xf]
        %v1408 = vld [vmem:[#allocation10 + $0x128] sm:$0xf]
        %v1409 = vld [vmem:[#allocation10 + $0x12c] sm:$0xf]
        %v1410 = vld [vmem:[#allocation10 + $0x130] sm:$0xf]
        %v1411 = vld [vmem:[#allocation10 + $0x134] sm:$0xf]
        %v1412 = vld [vmem:[#allocation10 + $0x138] sm:$0xf]
        %v1413 = vld [vmem:[#allocation10 + $0x13c] sm:$0xf]
        %v1414 = vld [vmem:[#allocation10 + $0x140] sm:$0xf]
        %v1415 = vld [vmem:[#allocation10 + $0x144] sm:$0xf]
        %v1416 = vld [vmem:[#allocation10 + $0x148] sm:$0xf]
        %v1417 = vld [vmem:[#allocation10 + $0x14c] sm:$0xf]
        %v1418 = vld [vmem:[#allocation10 + $0x150] sm:$0xf]
        %v1419 = vld [vmem:[#allocation10 + $0x154] sm:$0xf]
        %v1420 = vld [vmem:[#allocation10 + $0x158] sm:$0xf]
        %v1421 = vld [vmem:[#allocation10 + $0x15c] sm:$0xf]
        %v1422 = vld [vmem:[#allocation10 + $0x160] sm:$0xf]
        %v1423 = vld [vmem:[#allocation10 + $0x164] sm:$0xf]
        %v1424 = vld [vmem:[#allocation10 + $0x168] sm:$0xf]
        %v1425 = vld [vmem:[#allocation10 + $0x16c] sm:$0xf]
        %v1426 = vld [vmem:[#allocation10 + $0x170] sm:$0xf]
        %v1427 = vld [vmem:[#allocation10 + $0x174] sm:$0xf]
        %v1428 = vld [vmem:[#allocation10 + $0x178] sm:$0xf]
        %v1429 = vld [vmem:[#allocation10 + $0x17c] sm:$0xf]
        %v1430 = vld [vmem:[#allocation10 + $0x180] sm:$0xf]
        %v1431 = vld [vmem:[#allocation10 + $0x184] sm:$0xf]
        %v1432 = vld [vmem:[#allocation10 + $0x188] sm:$0xf]
        %v1433 = vld [vmem:[#allocation10 + $0x18c] sm:$0xf]
        %v1434 = vld [vmem:[#allocation10 + $0x190] sm:$0xf]
        %v1435 = vld [vmem:[#allocation10 + $0x194] sm:$0xf]
        %v1436 = vld [vmem:[#allocation10 + $0x198] sm:$0xf]
        %v1437 = vld [vmem:[#allocation10 + $0x19c] sm:$0xf]
        %v1438 = vld [vmem:[#allocation10 + $0x1a0] sm:$0xf]
        %v1439 = vld [vmem:[#allocation10 + $0x1a4] sm:$0xf]
        %v1440 = vld [vmem:[#allocation10 + $0x1a8] sm:$0xf]
        %v1441 = vld [vmem:[#allocation10 + $0x1ac] sm:$0xf]
        %v1442 = vld [vmem:[#allocation10 + $0x1b0] sm:$0xf]
        %v1443 = vld [vmem:[#allocation10 + $0x1b4] sm:$0xf]
        %v1444 = vld [vmem:[#allocation10 + $0x1b8] sm:$0xf]
        %v1445 = vld [vmem:[#allocation10 + $0x1bc] sm:$0xf]
        %v1446 = vld [vmem:[#allocation10 + $0x1c0] sm:$0xf]
        %v1447 = vld [vmem:[#allocation10 + $0x1c4] sm:$0xf]
        %v1448 = vld [vmem:[#allocation10 + $0x1c8] sm:$0xf]
        %v1449 = vld [vmem:[#allocation10 + $0x1cc] sm:$0xf]
        %v1450 = vld [vmem:[#allocation10 + $0x1d0] sm:$0xf]
        %v1451 = vld [vmem:[#allocation10 + $0x1d4] sm:$0xf]
        %v1452 = vld [vmem:[#allocation10 + $0x1d8] sm:$0xf]
        %v1453 = vld [vmem:[#allocation10 + $0x1dc] sm:$0xf]
        %v1454 = vld [vmem:[#allocation10 + $0x1e0] sm:$0xf]
        %v1455 = vld [vmem:[#allocation10 + $0x1e4] sm:$0xf]
        %v1456 = vld [vmem:[#allocation10 + $0x1e8] sm:$0xf]
        %v1457 = vld [vmem:[#allocation10 + $0x1ec] sm:$0xf]
        %v1458 = vld [vmem:[#allocation10 + $0x1f0] sm:$0xf]
        %v1459 = vld [vmem:[#allocation10 + $0x1f4] sm:$0xf]
        %v1460 = vld [vmem:[#allocation10 + $0x1f8] sm:$0xf]
        %v1461 = vld [vmem:[#allocation10 + $0x1fc] sm:$0xf]
        %v1462 = vld [vmem:[#allocation10 + $0x200] sm:$0xf]
        %v1463 = vld [vmem:[#allocation10 + $0x204] sm:$0xf]
        %v1464 = vld [vmem:[#allocation10 + $0x208] sm:$0xf]
        %v1465 = vld [vmem:[#allocation10 + $0x20c] sm:$0xf]
        %v1466 = vld [vmem:[#allocation10 + $0x210] sm:$0xf]
        %v1467 = vld [vmem:[#allocation10 + $0x214] sm:$0xf]
        %v1468 = vld [vmem:[#allocation10 + $0x218] sm:$0xf]
        %v1469 = vld [vmem:[#allocation10 + $0x21c] sm:$0xf]
        %v1470 = vld [vmem:[#allocation10 + $0x220] sm:$0xf]
        %v1471 = vld [vmem:[#allocation10 + $0x224] sm:$0xf]
        %v1472 = vld [vmem:[#allocation10 + $0x228] sm:$0xf]
        %v1473 = vld [vmem:[#allocation10 + $0x22c] sm:$0xf]
        %v1474 = vld [vmem:[#allocation10 + $0x230] sm:$0xf]
        %v1475 = vld [vmem:[#allocation10 + $0x234] sm:$0xf]
        %v1476 = vld [vmem:[#allocation10 + $0x238] sm:$0xf]
        %v1477 = vld [vmem:[#allocation10 + $0x23c] sm:$0xf]
        %v1478 = vld [vmem:[#allocation14] sm:$0x1]
        %v1480 = vlaneseq
        %v1481 = vshrl.u32 %v1480, 7
        %v1482 = vsub.s32 0, %v1481
        %v1483 = vrot.slane %v1478, %v1482
        %v1629 = vunpack.c.l.b16 %v1334
        %v1630 = vunpack.c.l.b16 %v1335
        %v1631 = vunpack.c.l.b16 %v1336
        %v1632 = vunpack.c.l.b16 %v1337
        %v1633 = vunpack.c.l.b16 %v1338
        %v1634 = vunpack.c.l.b16 %v1339
        %v1635 = vunpack.c.l.b16 %v1340
        %v1636 = vunpack.c.l.b16 %v1341
        %v1637 = vunpack.c.l.b16 %v1342
        %v1638 = vunpack.c.l.b16 %v1343
        %v1639 = vunpack.c.l.b16 %v1344
        %v1640 = vunpack.c.l.b16 %v1345
        %v1641 = vunpack.c.l.b16 %v1346
        %v1642 = vunpack.c.l.b16 %v1347
        %v1643 = vunpack.c.l.b16 %v1348
        %v1644 = vunpack.c.l.b16 %v1349
        %v1645 = vunpack.c.l.b16 %v1350
        %v1646 = vunpack.c.l.b16 %v1351
        %v1647 = vunpack.c.l.b16 %v1352
        %v1648 = vunpack.c.l.b16 %v1353
        %v1649 = vunpack.c.l.b16 %v1354
        %v1650 = vunpack.c.l.b16 %v1355
        %v1651 = vunpack.c.l.b16 %v1356
        %v1652 = vunpack.c.l.b16 %v1357
        %v1653 = vunpack.c.l.b16 %v1358
        %v1654 = vunpack.c.l.b16 %v1359
        %v1655 = vunpack.c.l.b16 %v1360
        %v1656 = vunpack.c.l.b16 %v1361
        %v1657 = vunpack.c.l.b16 %v1362
        %v1658 = vunpack.c.l.b16 %v1363
        %v1659 = vunpack.c.l.b16 %v1364
        %v1660 = vunpack.c.l.b16 %v1365
        %v1661 = vunpack.c.l.b16 %v1366
        %v1662 = vunpack.c.l.b16 %v1367
        %v1663 = vunpack.c.l.b16 %v1368
        %v1664 = vunpack.c.l.b16 %v1369
        %v1665 = vunpack.c.l.b16 %v1370
        %v1666 = vunpack.c.l.b16 %v1371
        %v1667 = vunpack.c.l.b16 %v1372
        %v1668 = vunpack.c.l.b16 %v1373
        %v1669 = vunpack.c.l.b16 %v1374
        %v1670 = vunpack.c.l.b16 %v1375
        %v1671 = vunpack.c.l.b16 %v1376
        %v1672 = vunpack.c.l.b16 %v1377
        %v1673 = vunpack.c.l.b16 %v1378
        %v1674 = vunpack.c.l.b16 %v1379
        %v1675 = vunpack.c.l.b16 %v1380
        %v1676 = vunpack.c.l.b16 %v1381
        %v1677 = vunpack.c.l.b16 %v1382
        %v1678 = vunpack.c.l.b16 %v1383
        %v1679 = vunpack.c.l.b16 %v1384
        %v1680 = vunpack.c.l.b16 %v1385
        %v1681 = vunpack.c.l.b16 %v1386
        %v1682 = vunpack.c.l.b16 %v1387
        %v1683 = vunpack.c.l.b16 %v1388
        %v1684 = vunpack.c.l.b16 %v1389
        %v1685 = vunpack.c.l.b16 %v1390
        %v1686 = vunpack.c.l.b16 %v1391
        %v1687 = vunpack.c.l.b16 %v1392
        %v1688 = vunpack.c.l.b16 %v1393
        %v1689 = vunpack.c.l.b16 %v1394
        %v1690 = vunpack.c.l.b16 %v1395
        %v1691 = vunpack.c.l.b16 %v1396
        %v1692 = vunpack.c.l.b16 %v1397
        %v1693 = vunpack.c.l.b16 %v1398
        %v1694 = vunpack.c.l.b16 %v1399
        %v1695 = vunpack.c.l.b16 %v1400
        %v1696 = vunpack.c.l.b16 %v1401
        %v1697 = vunpack.c.l.b16 %v1402
        %v1698 = vunpack.c.l.b16 %v1403
        %v1699 = vunpack.c.l.b16 %v1404
        %v1700 = vunpack.c.l.b16 %v1405
        %v1701 = vunpack.c.l.b16 %v1406
        %v1702 = vunpack.c.l.b16 %v1407
        %v1703 = vunpack.c.l.b16 %v1408
        %v1704 = vunpack.c.l.b16 %v1409
        %v1705 = vunpack.c.l.b16 %v1410
        %v1706 = vunpack.c.l.b16 %v1411
        %v1707 = vunpack.c.l.b16 %v1412
        %v1708 = vunpack.c.l.b16 %v1413
        %v1709 = vunpack.c.l.b16 %v1414
        %v1710 = vunpack.c.l.b16 %v1415
        %v1711 = vunpack.c.l.b16 %v1416
        %v1712 = vunpack.c.l.b16 %v1417
        %v1713 = vunpack.c.l.b16 %v1418
        %v1714 = vunpack.c.l.b16 %v1419
        %v1715 = vunpack.c.l.b16 %v1420
        %v1716 = vunpack.c.l.b16 %v1421
        %v1717 = vunpack.c.l.b16 %v1422
        %v1718 = vunpack.c.l.b16 %v1423
        %v1719 = vunpack.c.l.b16 %v1424
        %v1720 = vunpack.c.l.b16 %v1425
        %v1721 = vunpack.c.l.b16 %v1426
        %v1722 = vunpack.c.l.b16 %v1427
        %v1723 = vunpack.c.l.b16 %v1428
        %v1724 = vunpack.c.l.b16 %v1429
        %v1725 = vunpack.c.l.b16 %v1430
        %v1726 = vunpack.c.l.b16 %v1431
        %v1727 = vunpack.c.l.b16 %v1432
        %v1728 = vunpack.c.l.b16 %v1433
        %v1729 = vunpack.c.l.b16 %v1434
        %v1730 = vunpack.c.l.b16 %v1435
        %v1731 = vunpack.c.l.b16 %v1436
        %v1732 = vunpack.c.l.b16 %v1437
        %v1733 = vunpack.c.l.b16 %v1438
        %v1734 = vunpack.c.l.b16 %v1439
        %v1735 = vunpack.c.l.b16 %v1440
        %v1736 = vunpack.c.l.b16 %v1441
        %v1737 = vunpack.c.l.b16 %v1442
        %v1738 = vunpack.c.l.b16 %v1443
        %v1739 = vunpack.c.l.b16 %v1444
        %v1740 = vunpack.c.l.b16 %v1445
        %v1741 = vunpack.c.l.b16 %v1446
        %v1742 = vunpack.c.l.b16 %v1447
        %v1743 = vunpack.c.l.b16 %v1448
        %v1744 = vunpack.c.l.b16 %v1449
        %v1745 = vunpack.c.l.b16 %v1450
        %v1746 = vunpack.c.l.b16 %v1451
        %v1747 = vunpack.c.l.b16 %v1452
        %v1748 = vunpack.c.l.b16 %v1453
        %v1749 = vunpack.c.l.b16 %v1454
        %v1750 = vunpack.c.l.b16 %v1455
        %v1751 = vunpack.c.l.b16 %v1456
        %v1752 = vunpack.c.l.b16 %v1457
        %v1753 = vunpack.c.l.b16 %v1458
        %v1754 = vunpack.c.l.b16 %v1459
        %v1755 = vunpack.c.l.b16 %v1460
        %v1756 = vunpack.c.l.b16 %v1461
        %v1757 = vunpack.c.l.b16 %v1462
        %v1758 = vunpack.c.l.b16 %v1463
        %v1759 = vunpack.c.l.b16 %v1464
        %v1760 = vunpack.c.l.b16 %v1465
        %v1761 = vunpack.c.l.b16 %v1466
        %v1762 = vunpack.c.l.b16 %v1467
        %v1763 = vunpack.c.l.b16 %v1468
        %v1764 = vunpack.c.l.b16 %v1469
        %v1765 = vunpack.c.l.b16 %v1470
        %v1766 = vunpack.c.l.b16 %v1471
        %v1767 = vunpack.c.l.b16 %v1472
        %v1768 = vunpack.c.l.b16 %v1473
        %v1769 = vunpack.c.l.b16 %v1474
        %v1770 = vunpack.c.l.b16 %v1475
        %v1771 = vunpack.c.l.b16 %v1476
        %v1772 = vunpack.c.l.b16 %v1477
        %v1773 = vpack.c.b16 %v1630, %v1629
        %v1774 = vpack.c.b16 %v1632, %v1631
        %v1775 = vpack.c.b16 %v1634, %v1633
        %v1776 = vpack.c.b16 %v1636, %v1635
        %v1777 = vpack.c.b16 %v1638, %v1637
        %v1778 = vpack.c.b16 %v1640, %v1639
        %v1779 = vpack.c.b16 %v1642, %v1641
        %v1780 = vpack.c.b16 %v1644, %v1643
        %v1781 = vpack.c.b16 %v1646, %v1645
        %v1782 = vpack.c.b16 %v1648, %v1647
        %v1783 = vpack.c.b16 %v1650, %v1649
        %v1784 = vpack.c.b16 %v1652, %v1651
        %v1785 = vpack.c.b16 %v1654, %v1653
        %v1786 = vpack.c.b16 %v1656, %v1655
        %v1787 = vpack.c.b16 %v1658, %v1657
        %v1788 = vpack.c.b16 %v1660, %v1659
        %v1789 = vpack.c.b16 %v1662, %v1661
        %v1790 = vpack.c.b16 %v1664, %v1663
        %v1791 = vpack.c.b16 %v1666, %v1665
        %v1792 = vpack.c.b16 %v1668, %v1667
        %v1793 = vpack.c.b16 %v1670, %v1669
        %v1794 = vpack.c.b16 %v1672, %v1671
        %v1795 = vpack.c.b16 %v1674, %v1673
        %v1796 = vpack.c.b16 %v1676, %v1675
        %v1797 = vpack.c.b16 %v1678, %v1677
        %v1798 = vpack.c.b16 %v1680, %v1679
        %v1799 = vpack.c.b16 %v1682, %v1681
        %v1800 = vpack.c.b16 %v1684, %v1683
        %v1801 = vpack.c.b16 %v1686, %v1685
        %v1802 = vpack.c.b16 %v1688, %v1687
        %v1803 = vpack.c.b16 %v1690, %v1689
        %v1804 = vpack.c.b16 %v1692, %v1691
        %v1805 = vpack.c.b16 %v1694, %v1693
        %v1806 = vpack.c.b16 %v1696, %v1695
        %v1807 = vpack.c.b16 %v1698, %v1697
        %v1808 = vpack.c.b16 %v1700, %v1699
        %v1809 = vpack.c.b16 %v1702, %v1701
        %v1810 = vpack.c.b16 %v1704, %v1703
        %v1811 = vpack.c.b16 %v1706, %v1705
        %v1812 = vpack.c.b16 %v1708, %v1707
        %v1813 = vpack.c.b16 %v1710, %v1709
        %v1814 = vpack.c.b16 %v1712, %v1711
        %v1815 = vpack.c.b16 %v1714, %v1713
        %v1816 = vpack.c.b16 %v1716, %v1715
        %v1817 = vpack.c.b16 %v1718, %v1717
        %v1818 = vpack.c.b16 %v1720, %v1719
        %v1819 = vpack.c.b16 %v1722, %v1721
        %v1820 = vpack.c.b16 %v1724, %v1723
        %v1821 = vpack.c.b16 %v1726, %v1725
        %v1822 = vpack.c.b16 %v1728, %v1727
        %v1823 = vpack.c.b16 %v1730, %v1729
        %v1824 = vpack.c.b16 %v1732, %v1731
        %v1825 = vpack.c.b16 %v1734, %v1733
        %v1826 = vpack.c.b16 %v1736, %v1735
        %v1827 = vpack.c.b16 %v1738, %v1737
        %v1828 = vpack.c.b16 %v1740, %v1739
        %v1829 = vpack.c.b16 %v1742, %v1741
        %v1830 = vpack.c.b16 %v1744, %v1743
        %v1831 = vpack.c.b16 %v1746, %v1745
        %v1832 = vpack.c.b16 %v1748, %v1747
        %v1833 = vpack.c.b16 %v1750, %v1749
        %v1834 = vpack.c.b16 %v1752, %v1751
        %v1835 = vpack.c.b16 %v1754, %v1753
        %v1836 = vpack.c.b16 %v1756, %v1755
        %v1837 = vpack.c.b16 %v1758, %v1757
        %v1838 = vpack.c.b16 %v1760, %v1759
        %v1839 = vpack.c.b16 %v1762, %v1761
        %v1840 = vpack.c.b16 %v1764, %v1763
        %v1841 = vpack.c.b16 %v1766, %v1765
        %v1842 = vpack.c.b16 %v1768, %v1767
        %v1843 = vpack.c.b16 %v1770, %v1769
        %v1844 = vpack.c.b16 %v1772, %v1771
        %1917 = vmatprep.subr.bf16.mxu0 0
        %1918 = vmatpush1.bf16.msra.mxu0 %v1773
        %1919 = vmatprep.subr.bf16.mxu0 0
        %1920 = vmatpush1.bf16.msra.mxu0 %v1774
        %1921 = vmatprep.subr.bf16.mxu0 0
        %1922 = vmatpush1.bf16.msra.mxu0 %v1775
        %1923 = vmatprep.subr.bf16.mxu0 0
        %1924 = vmatpush1.bf16.msra.mxu0 %v1776
        %1925 = vmatprep.subr.bf16.mxu0 0
        %1926 = vmatpush1.bf16.msra.mxu0 %v1777
        %1927 = vmatprep.subr.bf16.mxu0 0
        %1928 = vmatpush1.bf16.msra.mxu0 %v1778
        %1929 = vmatprep.subr.bf16.mxu0 0
        %1930 = vmatpush1.bf16.msra.mxu0 %v1779
        %1931 = vmatprep.subr.bf16.mxu0 0
        %1932 = vmatpush1.bf16.msra.mxu0 %v1780
        %1933 = vmatprep.subr.bf16.mxu0 0
        %1934 = vmatpush1.bf16.msra.mxu0 %v1781
        %1935 = vmatprep.subr.bf16.mxu0 0
        %1936 = vmatpush1.bf16.msra.mxu0 %v1782
        %1937 = vmatprep.subr.bf16.mxu0 0
        %1938 = vmatpush1.bf16.msra.mxu0 %v1783
        %1939 = vmatprep.subr.bf16.mxu0 0
        %1940 = vmatpush1.bf16.msra.mxu0 %v1784
        %1941 = vmatprep.subr.bf16.mxu0 0
        %1942 = vmatpush1.bf16.msra.mxu0 %v1785
        %1943 = vmatprep.subr.bf16.mxu0 0
        %1944 = vmatpush1.bf16.msra.mxu0 %v1786
        %1945 = vmatprep.subr.bf16.mxu0 0
        %1946 = vmatpush1.bf16.msra.mxu0 %v1787
        %1947 = vmatprep.subr.bf16.mxu0 0
        %1948 = vmatpush1.bf16.msra.mxu0 %v1788
        %1949 = vmatprep.mubr.bf16.mxu0 %v1298
        %1950 = vmatmul.mubr.bf16.gmra.mrb[0].mxu0 %v1280
        %v1951 = vpop.f32.mrb[0].mxu0
        %v1952 = vadd.f32 %v1483, %v1951
        %v1953 = vpop.f32.mrb[0].mxu0
        %v1954 = vpop.f32.mrb[0].mxu0
        %v1955 = vadd.f32 %v1483, %v1954
        %v1956 = vpop.f32.mrb[0].mxu0
        %1957 = vmatprep.mubr.bf16.mxu0 %v1299
        %1958 = vmatmul.mubr.bf16.gmra.mrb[0].mxu0 %v1281
        %v1959 = vpop.f32.mrb[0].mxu0
        %v1960 = vadd.f32 %v1483, %v1959
        %v1961 = vpop.f32.mrb[0].mxu0
        %v1962 = vpop.f32.mrb[0].mxu0
        %v1963 = vadd.f32 %v1483, %v1962
        %v1964 = vpop.f32.mrb[0].mxu0
        %1965 = vmatprep.mubr.bf16.mxu0 %v1300
        %1966 = vmatmul.mubr.bf16.gmra.mrb[0].mxu0 %v1282
        %v1967 = vpop.f32.mrb[0].mxu0
        %v1968 = vadd.f32 %v1483, %v1967
        %v1969 = vpop.f32.mrb[0].mxu0
        %v1970 = vpop.f32.mrb[0].mxu0
        %v1971 = vadd.f32 %v1483, %v1970
        %v1972 = vpop.f32.mrb[0].mxu0
        %1973 = vmatprep.mubr.bf16.mxu0 %v1301
        %1974 = vmatmul.mubr.bf16.gmra.mrb[0].mxu0 %v1283
        %v1975 = vpop.f32.mrb[0].mxu0
        %v1976 = vadd.f32 %v1483, %v1975
        %v1977 = vpop.f32.mrb[0].mxu0
        %v1978 = vpop.f32.mrb[0].mxu0
        %v1979 = vadd.f32 %v1483, %v1978
        %v1980 = vpop.f32.mrb[0].mxu0
        %1981 = vmatprep.mubr.bf16.mxu0 %v1302
        %1982 = vmatmul.mubr.bf16.gmra.mrb[0].mxu0 %v1284
        %v1983 = vpop.f32.mrb[0].mxu0
        %v1984 = vadd.f32 %v1483, %v1983
        %v1985 = vpop.f32.mrb[0].mxu0
        %v1986 = vpop.f32.mrb[0].mxu0
        %v1987 = vadd.f32 %v1483, %v1986
        %v1988 = vpop.f32.mrb[0].mxu0
        %1989 = vmatprep.mubr.bf16.mxu0 %v1303
        %1990 = vmatmul.mubr.bf16.gmra.mrb[0].mxu0 %v1285
        %v1991 = vpop.f32.mrb[0].mxu0
        %v1992 = vadd.f32 %v1483, %v1991
        %v1993 = vpop.f32.mrb[0].mxu0
        %v1994 = vpop.f32.mrb[0].mxu0
        %v1995 = vadd.f32 %v1483, %v1994
        %v1996 = vpop.f32.mrb[0].mxu0
        %1997 = vmatprep.mubr.bf16.mxu0 %v1304
        %1998 = vmatmul.mubr.bf16.gmra.mrb[0].mxu0 %v1286
        %v1999 = vpop.f32.mrb[0].mxu0
        %v2000 = vadd.f32 %v1483, %v1999
        %v2001 = vpop.f32.mrb[0].mxu0
        %v2002 = vpop.f32.mrb[0].mxu0
        %v2003 = vadd.f32 %v1483, %v2002
        %v2004 = vpop.f32.mrb[0].mxu0
        %2005 = vmatprep.mubr.bf16.mxu0 %v1305
        %2006 = vmatmul.mubr.bf16.gmra.mrb[0].mxu0 %v1287
        %v2007 = vpop.f32.mrb[0].mxu0
        %v2008 = vadd.f32 %v1483, %v2007
        %v2009 = vpop.f32.mrb[0].mxu0
        %v2010 = vpop.f32.mrb[0].mxu0
        %v2011 = vadd.f32 %v1483, %v2010
        %v2012 = vpop.f32.mrb[0].mxu0
        %2013 = vmatprep.mubr.bf16.mxu0 %v1306
        %2014 = vmatmul.mubr.bf16.gmra.mrb[0].mxu0 %v1288
        %v2015 = vpop.f32.mrb[0].mxu0
        %v2016 = vadd.f32 %v1483, %v2015
        %v2017 = vpop.f32.mrb[0].mxu0
        %v2018 = vpop.f32.mrb[0].mxu0
        %v2019 = vadd.f32 %v1483, %v2018
        %v2020 = vpop.f32.mrb[0].mxu0
        %2021 = vmatprep.mubr.bf16.mxu0 %v1307
        %2022 = vmatmul.mubr.bf16.gmra.mrb[0].mxu0 %v1289
        %v2023 = vpop.f32.mrb[0].mxu0
        %v2024 = vadd.f32 %v1483, %v2023
        %v2025 = vpop.f32.mrb[0].mxu0
        %v2026 = vpop.f32.mrb[0].mxu0
        %v2027 = vadd.f32 %v1483, %v2026
        %v2028 = vpop.f32.mrb[0].mxu0
        %2029 = vmatprep.mubr.bf16.mxu0 %v1308
        %2030 = vmatmul.mubr.bf16.gmra.mrb[0].mxu0 %v1290
        %v2031 = vpop.f32.mrb[0].mxu0
        %v2032 = vadd.f32 %v1483, %v2031
        %v2033 = vpop.f32.mrb[0].mxu0
        %v2034 = vpop.f32.mrb[0].mxu0
        %v2035 = vadd.f32 %v1483, %v2034
        %v2036 = vpop.f32.mrb[0].mxu0
        %2037 = vmatprep.mubr.bf16.mxu0 %v1309
        %2038 = vmatmul.mubr.bf16.gmra.mrb[0].mxu0 %v1291
        %v2039 = vpop.f32.mrb[0].mxu0
        %v2040 = vadd.f32 %v1483, %v2039
        %v2041 = vpop.f32.mrb[0].mxu0
        %v2042 = vpop.f32.mrb[0].mxu0
        %v2043 = vadd.f32 %v1483, %v2042
        %v2044 = vpop.f32.mrb[0].mxu0
        %2045 = vmatprep.mubr.bf16.mxu0 %v1310
        %2046 = vmatmul.mubr.bf16.gmra.mrb[0].mxu0 %v1292
        %v2047 = vpop.f32.mrb[0].mxu0
        %v2048 = vadd.f32 %v1483, %v2047
        %v2049 = vpop.f32.mrb[0].mxu0
        %v2050 = vpop.f32.mrb[0].mxu0
        %v2051 = vadd.f32 %v1483, %v2050
        %v2052 = vpop.f32.mrb[0].mxu0
        %2053 = vmatprep.mubr.bf16.mxu0 %v1311
        %2054 = vmatmul.mubr.bf16.gmra.mrb[0].mxu0 %v1293
        %v2055 = vpop.f32.mrb[0].mxu0
        %v2056 = vadd.f32 %v1483, %v2055
        %v2057 = vpop.f32.mrb[0].mxu0
        %v2058 = vpop.f32.mrb[0].mxu0
        %v2059 = vadd.f32 %v1483, %v2058
        %v2060 = vpop.f32.mrb[0].mxu0
        %2061 = vmatprep.mubr.bf16.mxu0 %v1312
        %2062 = vmatmul.mubr.bf16.gmra.mrb[0].mxu0 %v1294
        %v2063 = vpop.f32.mrb[0].mxu0
        %v2064 = vadd.f32 %v1483, %v2063
        %v2065 = vpop.f32.mrb[0].mxu0
        %v2066 = vpop.f32.mrb[0].mxu0
        %v2067 = vadd.f32 %v1483, %v2066
        %v2068 = vpop.f32.mrb[0].mxu0
        %2069 = vmatprep.mubr.bf16.mxu0 %v1313
        %2070 = vmatmul.mubr.bf16.gmra.mrb[0].mxu0 %v1295
        %v2071 = vpop.f32.mrb[0].mxu0
        %v2072 = vadd.f32 %v1483, %v2071
        %v2073 = vpop.f32.mrb[0].mxu0
        %v2074 = vpop.f32.mrb[0].mxu0
        %v2075 = vadd.f32 %v1483, %v2074
        %v2076 = vpop.f32.mrb[0].mxu0
        %2077 = vdwg.mxu0
        %2078 = vmatprep.subr.bf16.mxu0 0
        %2079 = vmatpush1.bf16.msra.mxu0 %v1789
        %2080 = vmatprep.subr.bf16.mxu0 0
        %2081 = vmatpush1.bf16.msra.mxu0 %v1790
        %2082 = vmatprep.subr.bf16.mxu0 0
        %2083 = vmatpush1.bf16.msra.mxu0 %v1791
        %2084 = vmatprep.subr.bf16.mxu0 0
        %2085 = vmatpush1.bf16.msra.mxu0 %v1792
        %2086 = vmatprep.subr.bf16.mxu0 0
        %2087 = vmatpush1.bf16.msra.mxu0 %v1793
        %2088 = vmatprep.subr.bf16.mxu0 0
        %2089 = vmatpush1.bf16.msra.mxu0 %v1794
        %2090 = vmatprep.subr.bf16.mxu0 0
        %2091 = vmatpush1.bf16.msra.mxu0 %v1795
        %2092 = vmatprep.subr.bf16.mxu0 0
        %2093 = vmatpush1.bf16.msra.mxu0 %v1796
        %2094 = vmatprep.subr.bf16.mxu0 0
        %2095 = vmatpush1.bf16.msra.mxu0 %v1797
        %2096 = vmatprep.subr.bf16.mxu0 0
        %2097 = vmatpush1.bf16.msra.mxu0 %v1798
        %2098 = vmatprep.subr.bf16.mxu0 0
        %2099 = vmatpush1.bf16.msra.mxu0 %v1799
        %2100 = vmatprep.subr.bf16.mxu0 0
        %2101 = vmatpush1.bf16.msra.mxu0 %v1800
        %2102 = vmatprep.subr.bf16.mxu0 0
        %2103 = vmatpush1.bf16.msra.mxu0 %v1801
        %2104 = vmatprep.subr.bf16.mxu0 0
        %2105 = vmatpush1.bf16.msra.mxu0 %v1802
        %2106 = vmatprep.subr.bf16.mxu0 0
        %2107 = vmatpush1.bf16.msra.mxu0 %v1803
        %2108 = vmatprep.subr.bf16.mxu0 0
        %2109 = vmatpush1.bf16.msra.mxu0 %v1804
        %2110 = vmatprep.mubr.bf16.mxu0 %v1281
        %2111 = vmatmul.mubr.bf16.gmra.mrb[0].mxu0 %v1316
        %v2112 = vpop.f32.mrb[0].mxu0
        %v2113 = vadd.f32 %v1952, %v2112
        %v2114 = vpop.f32.mrb[0].mxu0
        %v2115 = vpop.f32.mrb[0].mxu0
        %v2116 = vadd.f32 %v1955, %v2115
        %v2117 = vpop.f32.mrb[0].mxu0
        %2118 = vmatprep.mubr.bf16.mxu0 %v1282
        %2119 = vmatmul.mubr.bf16.gmra.mrb[0].mxu0 %v1317
        %v2120 = vpop.f32.mrb[0].mxu0
        %v2121 = vadd.f32 %v1960, %v2120
        %v2122 = vpop.f32.mrb[0].mxu0
        %v2123 = vpop.f32.mrb[0].mxu0
        %v2124 = vadd.f32 %v1963, %v2123
        %v2125 = vpop.f32.mrb[0].mxu0
        %2126 = vmatprep.mubr.bf16.mxu0 %v1283
        %2127 = vmatmul.mubr.bf16.gmra.mrb[0].mxu0 %v1318
        %v2128 = vpop.f32.mrb[0].mxu0
        %v2129 = vadd.f32 %v1968, %v2128
        %v2130 = vpop.f32.mrb[0].mxu0
        %v2131 = vpop.f32.mrb[0].mxu0
        %v2132 = vadd.f32 %v1971, %v2131
        %v2133 = vpop.f32.mrb[0].mxu0
        %2134 = vmatprep.mubr.bf16.mxu0 %v1284
        %2135 = vmatmul.mubr.bf16.gmra.mrb[0].mxu0 %v1319
        %v2136 = vpop.f32.mrb[0].mxu0
        %v2137 = vadd.f32 %v1976, %v2136
        %v2138 = vpop.f32.mrb[0].mxu0
        %v2139 = vpop.f32.mrb[0].mxu0
        %v2140 = vadd.f32 %v1979, %v2139
        %v2141 = vpop.f32.mrb[0].mxu0
        %2142 = vmatprep.mubr.bf16.mxu0 %v1285
        %2143 = vmatmul.mubr.bf16.gmra.mrb[0].mxu0 %v1320
        %v2144 = vpop.f32.mrb[0].mxu0
        %v2145 = vadd.f32 %v1984, %v2144
        %v2146 = vpop.f32.mrb[0].mxu0
        %v2147 = vpop.f32.mrb[0].mxu0
        %v2148 = vadd.f32 %v1987, %v2147
        %v2149 = vpop.f32.mrb[0].mxu0
        %2150 = vmatprep.mubr.bf16.mxu0 %v1286
        %2151 = vmatmul.mubr.bf16.gmra.mrb[0].mxu0 %v1321
        %v2152 = vpop.f32.mrb[0].mxu0
        %v2153 = vadd.f32 %v1992, %v2152
        %v2154 = vpop.f32.mrb[0].mxu0
        %v2155 = vpop.f32.mrb[0].mxu0
        %v2156 = vadd.f32 %v1995, %v2155
        %v2157 = vpop.f32.mrb[0].mxu0
        %2158 = vmatprep.mubr.bf16.mxu0 %v1287
        %2159 = vmatmul.mubr.bf16.gmra.mrb[0].mxu0 %v1322
        %v2160 = vpop.f32.mrb[0].mxu0
        %v2161 = vadd.f32 %v2000, %v2160
        %v2162 = vpop.f32.mrb[0].mxu0
        %v2163 = vpop.f32.mrb[0].mxu0
        %v2164 = vadd.f32 %v2003, %v2163
        %v2165 = vpop.f32.mrb[0].mxu0
        %2166 = vmatprep.mubr.bf16.mxu0 %v1288
        %2167 = vmatmul.mubr.bf16.gmra.mrb[0].mxu0 %v1323
        %v2168 = vpop.f32.mrb[0].mxu0
        %v2169 = vadd.f32 %v2008, %v2168
        %v2170 = vpop.f32.mrb[0].mxu0
        %v2171 = vpop.f32.mrb[0].mxu0
        %v2172 = vadd.f32 %v2011, %v2171
        %v2173 = vpop.f32.mrb[0].mxu0
        %2174 = vmatprep.mubr.bf16.mxu0 %v1289
        %2175 = vmatmul.mubr.bf16.gmra.mrb[0].mxu0 %v1324
        %v2176 = vpop.f32.mrb[0].mxu0
        %v2177 = vadd.f32 %v2016, %v2176
        %v2178 = vpop.f32.mrb[0].mxu0
        %v2179 = vpop.f32.mrb[0].mxu0
        %v2180 = vadd.f32 %v2019, %v2179
        %v2181 = vpop.f32.mrb[0].mxu0
        %2182 = vmatprep.mubr.bf16.mxu0 %v1290
        %2183 = vmatmul.mubr.bf16.gmra.mrb[0].mxu0 %v1325
        %v2184 = vpop.f32.mrb[0].mxu0
        %v2185 = vadd.f32 %v2024, %v2184
        %v2186 = vpop.f32.mrb[0].mxu0
        %v2187 = vpop.f32.mrb[0].mxu0
        %v2188 = vadd.f32 %v2027, %v2187
        %v2189 = vpop.f32.mrb[0].mxu0
        %2190 = vmatprep.mubr.bf16.mxu0 %v1291
        %2191 = vmatmul.mubr.bf16.gmra.mrb[0].mxu0 %v1326
        %v2192 = vpop.f32.mrb[0].mxu0
        %v2193 = vadd.f32 %v2032, %v2192
        %v2194 = vpop.f32.mrb[0].mxu0
        %v2195 = vpop.f32.mrb[0].mxu0
        %v2196 = vadd.f32 %v2035, %v2195
        %v2197 = vpop.f32.mrb[0].mxu0
        %2198 = vmatprep.mubr.bf16.mxu0 %v1292
        %2199 = vmatmul.mubr.bf16.gmra.mrb[0].mxu0 %v1327
        %v2200 = vpop.f32.mrb[0].mxu0
        %v2201 = vadd.f32 %v2040, %v2200
        %v2202 = vpop.f32.mrb[0].mxu0
        %v2203 = vpop.f32.mrb[0].mxu0
        %v2204 = vadd.f32 %v2043, %v2203
        %v2205 = vpop.f32.mrb[0].mxu0
        %2206 = vmatprep.mubr.bf16.mxu0 %v1293
        %2207 = vmatmul.mubr.bf16.gmra.mrb[0].mxu0 %v1328
        %v2208 = vpop.f32.mrb[0].mxu0
        %v2209 = vadd.f32 %v2048, %v2208
        %v2210 = vpop.f32.mrb[0].mxu0
        %v2211 = vpop.f32.mrb[0].mxu0
        %v2212 = vadd.f32 %v2051, %v2211
        %v2213 = vpop.f32.mrb[0].mxu0
        %2214 = vmatprep.mubr.bf16.mxu0 %v1294
        %2215 = vmatmul.mubr.bf16.gmra.mrb[0].mxu0 %v1329
        %v2216 = vpop.f32.mrb[0].mxu0
        %v2217 = vadd.f32 %v2056, %v2216
        %v2218 = vpop.f32.mrb[0].mxu0
        %v2219 = vpop.f32.mrb[0].mxu0
        %v2220 = vadd.f32 %v2059, %v2219
        %v2221 = vpop.f32.mrb[0].mxu0
        %2222 = vmatprep.mubr.bf16.mxu0 %v1295
        %2223 = vmatmul.mubr.bf16.gmra.mrb[0].mxu0 %v1330
        %v2224 = vpop.f32.mrb[0].mxu0
        %v2225 = vadd.f32 %v2064, %v2224
        %v2226 = vpop.f32.mrb[0].mxu0
        %v2227 = vpop.f32.mrb[0].mxu0
        %v2228 = vadd.f32 %v2067, %v2227
        %v2229 = vpop.f32.mrb[0].mxu0
        %2230 = vmatprep.mubr.bf16.mxu0 %v1296
        %2231 = vmatmul.mubr.bf16.gmra.mrb[0].mxu0 %v1331
        %v2232 = vpop.f32.mrb[0].mxu0
        %v2233 = vadd.f32 %v2072, %v2232
        %v2234 = vpop.f32.mrb[0].mxu0
        %v2235 = vpop.f32.mrb[0].mxu0
        %v2236 = vadd.f32 %v2075, %v2235
        %v2237 = vpop.f32.mrb[0].mxu0
        %2238 = vdwg.mxu0
        %2239 = vmatprep.subr.bf16.mxu0 0
        %2240 = vmatpush1.bf16.msra.mxu0 %v1805
        %2241 = vmatprep.subr.bf16.mxu0 0
        %2242 = vmatpush1.bf16.msra.mxu0 %v1806
        %2243 = vmatprep.subr.bf16.mxu0 0
        %2244 = vmatpush1.bf16.msra.mxu0 %v1807
        %2245 = vmatprep.subr.bf16.mxu0 0
        %2246 = vmatpush1.bf16.msra.mxu0 %v1808
        %2247 = vmatprep.subr.bf16.mxu0 0
        %2248 = vmatpush1.bf16.msra.mxu0 %v1809
        %2249 = vmatprep.subr.bf16.mxu0 0
        %2250 = vmatpush1.bf16.msra.mxu0 %v1810
        %2251 = vmatprep.subr.bf16.mxu0 0
        %2252 = vmatpush1.bf16.msra.mxu0 %v1811
        %2253 = vmatprep.subr.bf16.mxu0 0
        %2254 = vmatpush1.bf16.msra.mxu0 %v1812
        %2255 = vmatprep.subr.bf16.mxu0 0
        %2256 = vmatpush1.bf16.msra.mxu0 %v1813
        %2257 = vmatprep.subr.bf16.mxu0 0
        %2258 = vmatpush1.bf16.msra.mxu0 %v1814
        %2259 = vmatprep.subr.bf16.mxu0 0
        %2260 = vmatpush1.bf16.msra.mxu0 %v1815
        %2261 = vmatprep.subr.bf16.mxu0 0
        %2262 = vmatpush1.bf16.msra.mxu0 %v1816
        %2263 = vmatprep.subr.bf16.mxu0 0
        %2264 = vmatpush1.bf16.msra.mxu0 %v1817
        %2265 = vmatprep.subr.bf16.mxu0 0
        %2266 = vmatpush1.bf16.msra.mxu0 %v1818
        %2267 = vmatprep.subr.bf16.mxu0 0
        %2268 = vmatpush1.bf16.msra.mxu0 %v1819
        %2269 = vmatprep.subr.bf16.mxu0 0
        %2270 = vmatpush1.bf16.msra.mxu0 %v1820
        %2271 = vmatprep.mubr.bf16.mxu0 %v1317
        %2272 = vmatmul.mubr.bf16.gmra.mrb[0].mxu0 %v1299
        %v2273 = vpop.f32.mrb[0].mxu0
        %v2274 = vadd.f32 %v2113, %v2273
        %v2275 = vpop.f32.mrb[0].mxu0
        %v2276 = vpop.f32.mrb[0].mxu0
        %v2277 = vadd.f32 %v2116, %v2276
        %v2278 = vpop.f32.mrb[0].mxu0
        %2279 = vmatprep.mubr.bf16.mxu0 %v1318
        %2280 = vmatmul.mubr.bf16.gmra.mrb[0].mxu0 %v1300
        %v2281 = vpop.f32.mrb[0].mxu0
        %v2282 = vadd.f32 %v2121, %v2281
        %v2283 = vpop.f32.mrb[0].mxu0
        %v2284 = vpop.f32.mrb[0].mxu0
        %v2285 = vadd.f32 %v2124, %v2284
        %v2286 = vpop.f32.mrb[0].mxu0
        %2287 = vmatprep.mubr.bf16.mxu0 %v1319
        %2288 = vmatmul.mubr.bf16.gmra.mrb[0].mxu0 %v1301
        %v2289 = vpop.f32.mrb[0].mxu0
        %v2290 = vadd.f32 %v2129, %v2289
        %v2291 = vpop.f32.mrb[0].mxu0
        %v2292 = vpop.f32.mrb[0].mxu0
        %v2293 = vadd.f32 %v2132, %v2292
        %v2294 = vpop.f32.mrb[0].mxu0
        %2295 = vmatprep.mubr.bf16.mxu0 %v1320
        %2296 = vmatmul.mubr.bf16.gmra.mrb[0].mxu0 %v1302
        %v2297 = vpop.f32.mrb[0].mxu0
        %v2298 = vadd.f32 %v2137, %v2297
        %v2299 = vpop.f32.mrb[0].mxu0
        %v2300 = vpop.f32.mrb[0].mxu0
        %v2301 = vadd.f32 %v2140, %v2300
        %v2302 = vpop.f32.mrb[0].mxu0
        %2303 = vmatprep.mubr.bf16.mxu0 %v1321
        %2304 = vmatmul.mubr.bf16.gmra.mrb[0].mxu0 %v1303
        %v2305 = vpop.f32.mrb[0].mxu0
        %v2306 = vadd.f32 %v2145, %v2305
        %v2307 = vpop.f32.mrb[0].mxu0
        %v2308 = vpop.f32.mrb[0].mxu0
        %v2309 = vadd.f32 %v2148, %v2308
        %v2310 = vpop.f32.mrb[0].mxu0
        %2311 = vmatprep.mubr.bf16.mxu0 %v1322
        %2312 = vmatmul.mubr.bf16.gmra.mrb[0].mxu0 %v1304
        %v2313 = vpop.f32.mrb[0].mxu0
        %v2314 = vadd.f32 %v2153, %v2313
        %v2315 = vpop.f32.mrb[0].mxu0
        %v2316 = vpop.f32.mrb[0].mxu0
        %v2317 = vadd.f32 %v2156, %v2316
        %v2318 = vpop.f32.mrb[0].mxu0
        %2319 = vmatprep.mubr.bf16.mxu0 %v1323
        %2320 = vmatmul.mubr.bf16.gmra.mrb[0].mxu0 %v1305
        %v2321 = vpop.f32.mrb[0].mxu0
        %v2322 = vadd.f32 %v2161, %v2321
        %v2323 = vpop.f32.mrb[0].mxu0
        %v2324 = vpop.f32.mrb[0].mxu0
        %v2325 = vadd.f32 %v2164, %v2324
        %v2326 = vpop.f32.mrb[0].mxu0
        %2327 = vmatprep.mubr.bf16.mxu0 %v1324
        %2328 = vmatmul.mubr.bf16.gmra.mrb[0].mxu0 %v1306
        %v2329 = vpop.f32.mrb[0].mxu0
        %v2330 = vadd.f32 %v2169, %v2329
        %v2331 = vpop.f32.mrb[0].mxu0
        %v2332 = vpop.f32.mrb[0].mxu0
        %v2333 = vadd.f32 %v2172, %v2332
        %v2334 = vpop.f32.mrb[0].mxu0
        %2335 = vmatprep.mubr.bf16.mxu0 %v1325
        %2336 = vmatmul.mubr.bf16.gmra.mrb[0].mxu0 %v1307
        %v2337 = vpop.f32.mrb[0].mxu0
        %v2338 = vadd.f32 %v2177, %v2337
        %v2339 = vpop.f32.mrb[0].mxu0
        %v2340 = vpop.f32.mrb[0].mxu0
        %v2341 = vadd.f32 %v2180, %v2340
        %v2342 = vpop.f32.mrb[0].mxu0
        %2343 = vmatprep.mubr.bf16.mxu0 %v1326
        %2344 = vmatmul.mubr.bf16.gmra.mrb[0].mxu0 %v1308
        %v2345 = vpop.f32.mrb[0].mxu0
        %v2346 = vadd.f32 %v2185, %v2345
        %v2347 = vpop.f32.mrb[0].mxu0
        %v2348 = vpop.f32.mrb[0].mxu0
        %v2349 = vadd.f32 %v2188, %v2348
        %v2350 = vpop.f32.mrb[0].mxu0
        %2351 = vmatprep.mubr.bf16.mxu0 %v1327
        %2352 = vmatmul.mubr.bf16.gmra.mrb[0].mxu0 %v1309
        %v2353 = vpop.f32.mrb[0].mxu0
        %v2354 = vadd.f32 %v2193, %v2353
        %v2355 = vpop.f32.mrb[0].mxu0
        %v2356 = vpop.f32.mrb[0].mxu0
        %v2357 = vadd.f32 %v2196, %v2356
        %v2358 = vpop.f32.mrb[0].mxu0
        %2359 = vmatprep.mubr.bf16.mxu0 %v1328
        %2360 = vmatmul.mubr.bf16.gmra.mrb[0].mxu0 %v1310
        %v2361 = vpop.f32.mrb[0].mxu0
        %v2362 = vadd.f32 %v2201, %v2361
        %v2363 = vpop.f32.mrb[0].mxu0
        %v2364 = vpop.f32.mrb[0].mxu0
        %v2365 = vadd.f32 %v2204, %v2364
        %v2366 = vpop.f32.mrb[0].mxu0
        %2367 = vmatprep.mubr.bf16.mxu0 %v1329
        %2368 = vmatmul.mubr.bf16.gmra.mrb[0].mxu0 %v1311
        %v2369 = vpop.f32.mrb[0].mxu0
        %v2370 = vadd.f32 %v2209, %v2369
        %v2371 = vpop.f32.mrb[0].mxu0
        %v2372 = vpop.f32.mrb[0].mxu0
        %v2373 = vadd.f32 %v2212, %v2372
        %v2374 = vpop.f32.mrb[0].mxu0
        %2375 = vmatprep.mubr.bf16.mxu0 %v1330
        %2376 = vmatmul.mubr.bf16.gmra.mrb[0].mxu0 %v1312
        %v2377 = vpop.f32.mrb[0].mxu0
        %v2378 = vadd.f32 %v2217, %v2377
        %v2379 = vpop.f32.mrb[0].mxu0
        %v2380 = vpop.f32.mrb[0].mxu0
        %v2381 = vadd.f32 %v2220, %v2380
        %v2382 = vpop.f32.mrb[0].mxu0
        %2383 = vmatprep.mubr.bf16.mxu0 %v1331
        %2384 = vmatmul.mubr.bf16.gmra.mrb[0].mxu0 %v1313
        %v2385 = vpop.f32.mrb[0].mxu0
        %v2386 = vadd.f32 %v2225, %v2385
        %v2387 = vpop.f32.mrb[0].mxu0
        %v2388 = vpop.f32.mrb[0].mxu0
        %v2389 = vadd.f32 %v2228, %v2388
        %v2390 = vpop.f32.mrb[0].mxu0
        %2391 = vmatprep.mubr.bf16.mxu0 %v1332
        %2392 = vmatmul.mubr.bf16.gmra.mrb[0].mxu0 %v1314
        %v2393 = vpop.f32.mrb[0].mxu0
        %v2394 = vadd.f32 %v2233, %v2393
        %v2395 = vpop.f32.mrb[0].mxu0
        %v2396 = vpop.f32.mrb[0].mxu0
        %v2397 = vadd.f32 %v2236, %v2396
        %v2398 = vpop.f32.mrb[0].mxu0
        %2399 = vdwg.mxu0
        %2400 = vmatprep.subr.bf16.mxu0 0
        %2401 = vmatpush1.bf16.msra.mxu0 %v1821
        %2402 = vmatprep.subr.bf16.mxu0 0
        %2403 = vmatpush1.bf16.msra.mxu0 %v1822
        %2404 = vmatprep.subr.bf16.mxu0 0
        %2405 = vmatpush1.bf16.msra.mxu0 %v1823
        %2406 = vmatprep.subr.bf16.mxu0 0
        %2407 = vmatpush1.bf16.msra.mxu0 %v1824
        %2408 = vmatprep.subr.bf16.mxu0 0
        %2409 = vmatpush1.bf16.msra.mxu0 %v1825
        %2410 = vmatprep.subr.bf16.mxu0 0
        %2411 = vmatpush1.bf16.msra.mxu0 %v1826
        %2412 = vmatprep.subr.bf16.mxu0 0
        %2413 = vmatpush1.bf16.msra.mxu0 %v1827
        %2414 = vmatprep.subr.bf16.mxu0 0
        %2415 = vmatpush1.bf16.msra.mxu0 %v1828
        %2416 = vmatprep.subr.bf16.mxu0 0
        %2417 = vmatpush1.bf16.msra.mxu0 %v1829
        %2418 = vmatprep.subr.bf16.mxu0 0
        %2419 = vmatpush1.bf16.msra.mxu0 %v1830
        %2420 = vmatprep.subr.bf16.mxu0 0
        %2421 = vmatpush1.bf16.msra.mxu0 %v1831
        %2422 = vmatprep.subr.bf16.mxu0 0
        %2423 = vmatpush1.bf16.msra.mxu0 %v1832
        %2424 = vmatprep.subr.bf16.mxu0 0
        %2425 = vmatpush1.bf16.msra.mxu0 %v1833
        %2426 = vmatprep.subr.bf16.mxu0 0
        %2427 = vmatpush1.bf16.msra.mxu0 %v1834
        %2428 = vmatprep.subr.bf16.mxu0 0
        %2429 = vmatpush1.bf16.msra.mxu0 %v1835
        %2430 = vmatprep.subr.bf16.mxu0 0
        %2431 = vmatpush1.bf16.msra.mxu0 %v1836
        %2432 = vmatprep.mubr.bf16.mxu0 %v1300
        %2433 = vmatmul.mubr.bf16.gmra.mrb[0].mxu0 %v1282
        %v2434 = vpop.f32.mrb[0].mxu0
        %v2435 = vadd.f32 %v2274, %v2434
        %v2436 = vpop.f32.mrb[0].mxu0
        %v2437 = vpop.f32.mrb[0].mxu0
        %v2438 = vadd.f32 %v2277, %v2437
        %v2439 = vpop.f32.mrb[0].mxu0
        %2440 = vmatprep.mubr.bf16.mxu0 %v1301
        %2441 = vmatmul.mubr.bf16.gmra.mrb[0].mxu0 %v1283
        %v2442 = vpop.f32.mrb[0].mxu0
        %v2443 = vadd.f32 %v2282, %v2442
        %v2444 = vpop.f32.mrb[0].mxu0
        %v2445 = vpop.f32.mrb[0].mxu0
        %v2446 = vadd.f32 %v2285, %v2445
        %v2447 = vpop.f32.mrb[0].mxu0
        %2448 = vmatprep.mubr.bf16.mxu0 %v1302
        %2449 = vmatmul.mubr.bf16.gmra.mrb[0].mxu0 %v1284
        %v2450 = vpop.f32.mrb[0].mxu0
        %v2451 = vadd.f32 %v2290, %v2450
        %v2452 = vpop.f32.mrb[0].mxu0
        %v2453 = vpop.f32.mrb[0].mxu0
        %v2454 = vadd.f32 %v2293, %v2453
        %v2455 = vpop.f32.mrb[0].mxu0
        %2456 = vmatprep.mubr.bf16.mxu0 %v1303
        %2457 = vmatmul.mubr.bf16.gmra.mrb[0].mxu0 %v1285
        %v2458 = vpop.f32.mrb[0].mxu0
        %v2459 = vadd.f32 %v2298, %v2458
        %v2460 = vpop.f32.mrb[0].mxu0
        %v2461 = vpop.f32.mrb[0].mxu0
        %v2462 = vadd.f32 %v2301, %v2461
        %v2463 = vpop.f32.mrb[0].mxu0
        %2464 = vmatprep.mubr.bf16.mxu0 %v1304
        %2465 = vmatmul.mubr.bf16.gmra.mrb[0].mxu0 %v1286
        %v2466 = vpop.f32.mrb[0].mxu0
        %v2467 = vadd.f32 %v2306, %v2466
        %v2468 = vpop.f32.mrb[0].mxu0
        %v2469 = vpop.f32.mrb[0].mxu0
        %v2470 = vadd.f32 %v2309, %v2469
        %v2471 = vpop.f32.mrb[0].mxu0
        %2472 = vmatprep.mubr.bf16.mxu0 %v1305
        %2473 = vmatmul.mubr.bf16.gmra.mrb[0].mxu0 %v1287
        %v2474 = vpop.f32.mrb[0].mxu0
        %v2475 = vadd.f32 %v2314, %v2474
        %v2476 = vpop.f32.mrb[0].mxu0
        %v2477 = vpop.f32.mrb[0].mxu0
        %v2478 = vadd.f32 %v2317, %v2477
        %v2479 = vpop.f32.mrb[0].mxu0
        %2480 = vmatprep.mubr.bf16.mxu0 %v1306
        %2481 = vmatmul.mubr.bf16.gmra.mrb[0].mxu0 %v1288
        %v2482 = vpop.f32.mrb[0].mxu0
        %v2483 = vadd.f32 %v2322, %v2482
        %v2484 = vpop.f32.mrb[0].mxu0
        %v2485 = vpop.f32.mrb[0].mxu0
        %v2486 = vadd.f32 %v2325, %v2485
        %v2487 = vpop.f32.mrb[0].mxu0
        %2488 = vmatprep.mubr.bf16.mxu0 %v1307
        %2489 = vmatmul.mubr.bf16.gmra.mrb[0].mxu0 %v1289
        %v2490 = vpop.f32.mrb[0].mxu0
        %v2491 = vadd.f32 %v2330, %v2490
        %v2492 = vpop.f32.mrb[0].mxu0
        %v2493 = vpop.f32.mrb[0].mxu0
        %v2494 = vadd.f32 %v2333, %v2493
        %v2495 = vpop.f32.mrb[0].mxu0
        %2496 = vmatprep.mubr.bf16.mxu0 %v1308
        %2497 = vmatmul.mubr.bf16.gmra.mrb[0].mxu0 %v1290
        %v2498 = vpop.f32.mrb[0].mxu0
        %v2499 = vadd.f32 %v2338, %v2498
        %v2500 = vpop.f32.mrb[0].mxu0
        %v2501 = vpop.f32.mrb[0].mxu0
        %v2502 = vadd.f32 %v2341, %v2501
        %v2503 = vpop.f32.mrb[0].mxu0
        %2504 = vmatprep.mubr.bf16.mxu0 %v1309
        %2505 = vmatmul.mubr.bf16.gmra.mrb[0].mxu0 %v1291
        %v2506 = vpop.f32.mrb[0].mxu0
        %v2507 = vadd.f32 %v2346, %v2506
        %v2508 = vpop.f32.mrb[0].mxu0
        %v2509 = vpop.f32.mrb[0].mxu0
        %v2510 = vadd.f32 %v2349, %v2509
        %v2511 = vpop.f32.mrb[0].mxu0
        %2512 = vmatprep.mubr.bf16.mxu0 %v1310
        %2513 = vmatmul.mubr.bf16.gmra.mrb[0].mxu0 %v1292
        %v2514 = vpop.f32.mrb[0].mxu0
        %v2515 = vadd.f32 %v2354, %v2514
        %v2516 = vpop.f32.mrb[0].mxu0
        %v2517 = vpop.f32.mrb[0].mxu0
        %v2518 = vadd.f32 %v2357, %v2517
        %v2519 = vpop.f32.mrb[0].mxu0
        %2520 = vmatprep.mubr.bf16.mxu0 %v1311
        %2521 = vmatmul.mubr.bf16.gmra.mrb[0].mxu0 %v1293
        %v2522 = vpop.f32.mrb[0].mxu0
        %v2523 = vadd.f32 %v2362, %v2522
        %v2524 = vpop.f32.mrb[0].mxu0
        %v2525 = vpop.f32.mrb[0].mxu0
        %v2526 = vadd.f32 %v2365, %v2525
        %v2527 = vpop.f32.mrb[0].mxu0
        %2528 = vmatprep.mubr.bf16.mxu0 %v1312
        %2529 = vmatmul.mubr.bf16.gmra.mrb[0].mxu0 %v1294
        %v2530 = vpop.f32.mrb[0].mxu0
        %v2531 = vadd.f32 %v2370, %v2530
        %v2532 = vpop.f32.mrb[0].mxu0
        %v2533 = vpop.f32.mrb[0].mxu0
        %v2534 = vadd.f32 %v2373, %v2533
        %v2535 = vpop.f32.mrb[0].mxu0
        %2536 = vmatprep.mubr.bf16.mxu0 %v1313
        %2537 = vmatmul.mubr.bf16.gmra.mrb[0].mxu0 %v1295
        %v2538 = vpop.f32.mrb[0].mxu0
        %v2539 = vadd.f32 %v2378, %v2538
        %v2540 = vpop.f32.mrb[0].mxu0
        %v2541 = vpop.f32.mrb[0].mxu0
        %v2542 = vadd.f32 %v2381, %v2541
        %v2543 = vpop.f32.mrb[0].mxu0
        %2544 = vmatprep.mubr.bf16.mxu0 %v1314
        %2545 = vmatmul.mubr.bf16.gmra.mrb[0].mxu0 %v1296
        %v2546 = vpop.f32.mrb[0].mxu0
        %v2547 = vadd.f32 %v2386, %v2546
        %v2548 = vpop.f32.mrb[0].mxu0
        %v2549 = vpop.f32.mrb[0].mxu0
        %v2550 = vadd.f32 %v2389, %v2549
        %v2551 = vpop.f32.mrb[0].mxu0
        %2552 = vmatprep.mubr.bf16.mxu0 %v1315
        %2553 = vmatmul.mubr.bf16.gmra.mrb[0].mxu0 %v1297
        %v2554 = vpop.f32.mrb[0].mxu0
        %v2555 = vadd.f32 %v2394, %v2554
        %v2556 = vpop.f32.mrb[0].mxu0
        %v2557 = vpop.f32.mrb[0].mxu0
        %v2558 = vadd.f32 %v2397, %v2557
        %v2559 = vpop.f32.mrb[0].mxu0
        %2560 = vdwg.mxu0
        %2561 = vmatprep.subr.bf16.mxu0 0
        %2562 = vmatpush1.bf16.msra.mxu0 %v1837
        %2563 = vmatprep.subr.bf16.mxu0 0
        %2564 = vmatpush1.bf16.msra.mxu0 %v1838
        %2565 = vmatprep.subr.bf16.mxu0 0
        %2566 = vmatpush1.bf16.msra.mxu0 %v1839
        %2567 = vmatprep.subr.bf16.mxu0 0
        %2568 = vmatpush1.bf16.msra.mxu0 %v1840
        %2569 = vmatprep.subr.bf16.mxu0 0
        %2570 = vmatpush1.bf16.msra.mxu0 %v1841
        %2571 = vmatprep.subr.bf16.mxu0 0
        %2572 = vmatpush1.bf16.msra.mxu0 %v1842
        %2573 = vmatprep.subr.bf16.mxu0 0
        %2574 = vmatpush1.bf16.msra.mxu0 %v1843
        %2575 = vmatprep.subr.bf16.mxu0 0
        %2576 = vmatpush1.bf16.msra.mxu0 %v1844
        %2577 = vmatprep.subr.bf16.mxu0 0
        %2578 = vmatpush1.bf16.msra.mxu0 0
        %2579 = vmatprep.subr.bf16.mxu0 0
        %2580 = vmatpush1.bf16.msra.mxu0 0
        %2581 = vmatprep.subr.bf16.mxu0 0
        %2582 = vmatpush1.bf16.msra.mxu0 0
        %2583 = vmatprep.subr.bf16.mxu0 0
        %2584 = vmatpush1.bf16.msra.mxu0 0
        %2585 = vmatprep.subr.bf16.mxu0 0
        %2586 = vmatpush1.bf16.msra.mxu0 0
        %2587 = vmatprep.subr.bf16.mxu0 0
        %2588 = vmatpush1.bf16.msra.mxu0 0
        %2589 = vmatprep.subr.bf16.mxu0 0
        %2590 = vmatpush1.bf16.msra.mxu0 0
        %2591 = vmatprep.subr.bf16.mxu0 0
        %2592 = vmatpush1.bf16.msra.mxu0 0
        %2593 = vmatprep.mubr.bf16.mxu0 0
        %2594 = vmatmul.mubr.bf16.gmra.mrb[0].mxu0 %v1318
        %v2595 = vpop.f32.mrb[0].mxu0
        %v2596 = vadd.f32 %v2435, %v2595
        %v2597 = vpop.f32.mrb[0].mxu0
        %v2598 = vpop.f32.mrb[0].mxu0
        %v2599 = vadd.f32 %v2438, %v2598
        %v2600 = vpop.f32.mrb[0].mxu0
        %2601 = vmatprep.mubr.bf16.mxu0 0
        %2602 = vmatmul.mubr.bf16.gmra.mrb[0].mxu0 %v1319
        %v2603 = vpop.f32.mrb[0].mxu0
        %v2604 = vadd.f32 %v2443, %v2603
        %v2605 = vpop.f32.mrb[0].mxu0
        %v2606 = vpop.f32.mrb[0].mxu0
        %v2607 = vadd.f32 %v2446, %v2606
        %v2608 = vpop.f32.mrb[0].mxu0
        %2609 = vmatprep.mubr.bf16.mxu0 0
        %2610 = vmatmul.mubr.bf16.gmra.mrb[0].mxu0 %v1320
        %v2611 = vpop.f32.mrb[0].mxu0
        %v2612 = vadd.f32 %v2451, %v2611
        %v2613 = vpop.f32.mrb[0].mxu0
        %v2614 = vpop.f32.mrb[0].mxu0
        %v2615 = vadd.f32 %v2454, %v2614
        %v2616 = vpop.f32.mrb[0].mxu0
        %2617 = vmatprep.mubr.bf16.mxu0 0
        %2618 = vmatmul.mubr.bf16.gmra.mrb[0].mxu0 %v1321
        %v2619 = vpop.f32.mrb[0].mxu0
        %v2620 = vadd.f32 %v2459, %v2619
        %v2621 = vpop.f32.mrb[0].mxu0
        %v2622 = vpop.f32.mrb[0].mxu0
        %v2623 = vadd.f32 %v2462, %v2622
        %v2624 = vpop.f32.mrb[0].mxu0
        %2625 = vmatprep.mubr.bf16.mxu0 0
        %2626 = vmatmul.mubr.bf16.gmra.mrb[0].mxu0 %v1322
        %v2627 = vpop.f32.mrb[0].mxu0
        %v2628 = vadd.f32 %v2467, %v2627
        %v2629 = vpop.f32.mrb[0].mxu0
        %v2630 = vpop.f32.mrb[0].mxu0
        %v2631 = vadd.f32 %v2470, %v2630
        %v2632 = vpop.f32.mrb[0].mxu0
        %2633 = vmatprep.mubr.bf16.mxu0 0
        %2634 = vmatmul.mubr.bf16.gmra.mrb[0].mxu0 %v1323
        %v2635 = vpop.f32.mrb[0].mxu0
        %v2636 = vadd.f32 %v2475, %v2635
        %v2637 = vpop.f32.mrb[0].mxu0
        %v2638 = vpop.f32.mrb[0].mxu0
        %v2639 = vadd.f32 %v2478, %v2638
        %v2640 = vpop.f32.mrb[0].mxu0
        %2641 = vmatprep.mubr.bf16.mxu0 0
        %2642 = vmatmul.mubr.bf16.gmra.mrb[0].mxu0 %v1324
        %v2643 = vpop.f32.mrb[0].mxu0
        %v2644 = vadd.f32 %v2483, %v2643
        %v2645 = vpop.f32.mrb[0].mxu0
        %v2646 = vpop.f32.mrb[0].mxu0
        %v2647 = vadd.f32 %v2486, %v2646
        %v2648 = vpop.f32.mrb[0].mxu0
        %2649 = vmatprep.mubr.bf16.mxu0 0
        %2650 = vmatmul.mubr.bf16.gmra.mrb[0].mxu0 %v1325
        %v2651 = vpop.f32.mrb[0].mxu0
        %v2652 = vadd.f32 %v2491, %v2651
        %v2653 = vpop.f32.mrb[0].mxu0
        %v2654 = vpop.f32.mrb[0].mxu0
        %v2655 = vadd.f32 %v2494, %v2654
        %v2656 = vpop.f32.mrb[0].mxu0
        %2657 = vmatprep.mubr.bf16.mxu0 0
        %2658 = vmatmul.mubr.bf16.gmra.mrb[0].mxu0 %v1326
        %v2659 = vpop.f32.mrb[0].mxu0
        %v2660 = vadd.f32 %v2499, %v2659
        %v2661 = vpop.f32.mrb[0].mxu0
        %v2662 = vpop.f32.mrb[0].mxu0
        %v2663 = vadd.f32 %v2502, %v2662
        %v2664 = vpop.f32.mrb[0].mxu0
        %2665 = vmatprep.mubr.bf16.mxu0 0
        %2666 = vmatmul.mubr.bf16.gmra.mrb[0].mxu0 %v1327
        %v2667 = vpop.f32.mrb[0].mxu0
        %v2668 = vadd.f32 %v2507, %v2667
        %v2669 = vpop.f32.mrb[0].mxu0
        %v2670 = vpop.f32.mrb[0].mxu0
        %v2671 = vadd.f32 %v2510, %v2670
        %v2672 = vpop.f32.mrb[0].mxu0
        %2673 = vmatprep.mubr.bf16.mxu0 0
        %2674 = vmatmul.mubr.bf16.gmra.mrb[0].mxu0 %v1328
        %v2675 = vpop.f32.mrb[0].mxu0
        %v2676 = vadd.f32 %v2515, %v2675
        %v2677 = vpop.f32.mrb[0].mxu0
        %v2678 = vpop.f32.mrb[0].mxu0
        %v2679 = vadd.f32 %v2518, %v2678
        %v2680 = vpop.f32.mrb[0].mxu0
        %2681 = vmatprep.mubr.bf16.mxu0 0
        %2682 = vmatmul.mubr.bf16.gmra.mrb[0].mxu0 %v1329
        %v2683 = vpop.f32.mrb[0].mxu0
        %v2684 = vadd.f32 %v2523, %v2683
        %v2685 = vpop.f32.mrb[0].mxu0
        %v2686 = vpop.f32.mrb[0].mxu0
        %v2687 = vadd.f32 %v2526, %v2686
        %v2688 = vpop.f32.mrb[0].mxu0
        %2689 = vmatprep.mubr.bf16.mxu0 0
        %2690 = vmatmul.mubr.bf16.gmra.mrb[0].mxu0 %v1330
        %v2691 = vpop.f32.mrb[0].mxu0
        %v2692 = vadd.f32 %v2531, %v2691
        %v2693 = vpop.f32.mrb[0].mxu0
        %v2694 = vpop.f32.mrb[0].mxu0
        %v2695 = vadd.f32 %v2534, %v2694
        %v2696 = vpop.f32.mrb[0].mxu0
        %2697 = vmatprep.mubr.bf16.mxu0 0
        %2698 = vmatmul.mubr.bf16.gmra.mrb[0].mxu0 %v1331
        %v2699 = vpop.f32.mrb[0].mxu0
        %v2700 = vadd.f32 %v2539, %v2699
        %v2701 = vpop.f32.mrb[0].mxu0
        %v2702 = vpop.f32.mrb[0].mxu0
        %v2703 = vadd.f32 %v2542, %v2702
        %v2704 = vpop.f32.mrb[0].mxu0
        %2705 = vmatprep.mubr.bf16.mxu0 0
        %2706 = vmatmul.mubr.bf16.gmra.mrb[0].mxu0 %v1332
        %v2707 = vpop.f32.mrb[0].mxu0
        %v2708 = vadd.f32 %v2547, %v2707
        %v2709 = vpop.f32.mrb[0].mxu0
        %v2710 = vpop.f32.mrb[0].mxu0
        %v2711 = vadd.f32 %v2550, %v2710
        %v2712 = vpop.f32.mrb[0].mxu0
        %2713 = vmatprep.mubr.bf16.mxu0 0
        %2714 = vmatmul.mubr.bf16.gmra.mrb[0].mxu0 %v1333
        %v2715 = vpop.f32.mrb[0].mxu0
        %v2716 = vadd.f32 %v2555, %v2715
        %v2717 = vpop.f32.mrb[0].mxu0
        %v2718 = vpop.f32.mrb[0].mxu0
        %v2719 = vadd.f32 %v2558, %v2718
        %v2720 = vpop.f32.mrb[0].mxu0
        %2721 = vdwg.mxu0
        %v2722 = vmax.f32 %v2596, 0.0
        %v2723 = vmax.f32 %v2599, 0.0
        %v2724 = vmax.f32 %v2604, 0.0
        %v2725 = vmax.f32 %v2607, 0.0
        %v2726 = vmax.f32 %v2612, 0.0
        %v2727 = vmax.f32 %v2615, 0.0
        %v2728 = vmax.f32 %v2620, 0.0
        %v2729 = vmax.f32 %v2623, 0.0
        %v2730 = vmax.f32 %v2628, 0.0
        %v2731 = vmax.f32 %v2631, 0.0
        %v2732 = vmax.f32 %v2636, 0.0
        %v2733 = vmax.f32 %v2639, 0.0
        %v2734 = vmax.f32 %v2644, 0.0
        %v2735 = vmax.f32 %v2647, 0.0
        %v2736 = vmax.f32 %v2652, 0.0
        %v2737 = vmax.f32 %v2655, 0.0
        %v2738 = vmax.f32 %v2660, 0.0
        %v2739 = vmax.f32 %v2663, 0.0
        %v2740 = vmax.f32 %v2668, 0.0
        %v2741 = vmax.f32 %v2671, 0.0
        %v2742 = vmax.f32 %v2676, 0.0
        %v2743 = vmax.f32 %v2679, 0.0
        %v2744 = vmax.f32 %v2684, 0.0
        %v2745 = vmax.f32 %v2687, 0.0
        %v2746 = vmax.f32 %v2692, 0.0
        %v2747 = vmax.f32 %v2695, 0.0
        %v2748 = vmax.f32 %v2700, 0.0
        %v2749 = vmax.f32 %v2703, 0.0
        %v2750 = vmax.f32 %v2708, 0.0
        %v2751 = vmax.f32 %v2711, 0.0
        %v2752 = vmax.f32 %v2716, 0.0
        %v2753 = vmax.f32 %v2719, 0.0
        %v2754 = vpack.c.bf16 %v2723, %v2722
        %v2755 = vpack.c.bf16 %v2725, %v2724
        %v2756 = vpack.c.bf16 %v2727, %v2726
        %v2757 = vpack.c.bf16 %v2729, %v2728
        %v2758 = vpack.c.bf16 %v2731, %v2730
        %v2759 = vpack.c.bf16 %v2733, %v2732
        %v2760 = vpack.c.bf16 %v2735, %v2734
        %v2761 = vpack.c.bf16 %v2737, %v2736
        %v2762 = vpack.c.bf16 %v2739, %v2738
        %v2763 = vpack.c.bf16 %v2741, %v2740
        %v2764 = vpack.c.bf16 %v2743, %v2742
        %v2765 = vpack.c.bf16 %v2745, %v2744
        %v2766 = vpack.c.bf16 %v2747, %v2746
        %v2767 = vpack.c.bf16 %v2749, %v2748
        %v2768 = vpack.c.bf16 %v2751, %v2750
        %v2769 = vpack.c.bf16 %v2753, %v2752
        %v2770 = vld [vmem:[#allocation11] sm:$0xf]
        %v2771 = vld [vmem:[#allocation11 + $0x4] sm:$0xf]
        %v2772 = vld [vmem:[#allocation11 + $0x8] sm:$0xf]
        %v2773 = vld [vmem:[#allocation11 + $0xc] sm:$0xf]
        %v2774 = vld [vmem:[#allocation11 + $0x10] sm:$0xf]
        %v2775 = vld [vmem:[#allocation11 + $0x14] sm:$0xf]
        %v2776 = vld [vmem:[#allocation11 + $0x18] sm:$0xf]
        %v2777 = vld [vmem:[#allocation11 + $0x1c] sm:$0xf]
        %v2778 = vld [vmem:[#allocation11 + $0x20] sm:$0xf]
        %v2779 = vld [vmem:[#allocation11 + $0x24] sm:$0xf]
        %v2780 = vld [vmem:[#allocation11 + $0x28] sm:$0xf]
        %v2781 = vld [vmem:[#allocation11 + $0x2c] sm:$0xf]
        %v2782 = vld [vmem:[#allocation11 + $0x30] sm:$0xf]
        %v2783 = vld [vmem:[#allocation11 + $0x34] sm:$0xf]
        %v2784 = vld [vmem:[#allocation11 + $0x38] sm:$0xf]
        %v2785 = vld [vmem:[#allocation11 + $0x3c] sm:$0xf]
        %v2786 = vld [vmem:[#allocation11 + $0x40] sm:$0xf]
        %v2787 = vld [vmem:[#allocation11 + $0x44] sm:$0xf]
        %v2788 = vld [vmem:[#allocation11 + $0x48] sm:$0xf]
        %v2789 = vld [vmem:[#allocation11 + $0x4c] sm:$0xf]
        %v2790 = vld [vmem:[#allocation11 + $0x50] sm:$0xf]
        %v2791 = vld [vmem:[#allocation11 + $0x54] sm:$0xf]
        %v2792 = vld [vmem:[#allocation11 + $0x58] sm:$0xf]
        %v2793 = vld [vmem:[#allocation11 + $0x5c] sm:$0xf]
        %v2794 = vld [vmem:[#allocation11 + $0x60] sm:$0xf]
        %v2795 = vld [vmem:[#allocation11 + $0x64] sm:$0xf]
        %v2796 = vld [vmem:[#allocation11 + $0x68] sm:$0xf]
        %v2797 = vld [vmem:[#allocation11 + $0x6c] sm:$0xf]
        %v2798 = vld [vmem:[#allocation11 + $0x70] sm:$0xf]
        %v2799 = vld [vmem:[#allocation11 + $0x74] sm:$0xf]
        %v2800 = vld [vmem:[#allocation11 + $0x78] sm:$0xf]
        %v2801 = vld [vmem:[#allocation11 + $0x7c] sm:$0xf]
        %v2802 = vld [vmem:[#allocation16] sm:$0x1]
        %v2804 = vlaneseq
        %v2805 = vshrl.u32 %v2804, 7
        %v2806 = vsub.s32 0, %v2805
        %v2807 = vrot.slane %v2802, %v2806
        %v2841 = vunpack.c.l.b16 %v2770
        %v2842 = vunpack.c.l.b16 %v2771
        %v2843 = vunpack.c.l.b16 %v2772
        %v2844 = vunpack.c.l.b16 %v2773
        %v2845 = vunpack.c.l.b16 %v2774
        %v2846 = vunpack.c.l.b16 %v2775
        %v2847 = vunpack.c.l.b16 %v2776
        %v2848 = vunpack.c.l.b16 %v2777
        %v2849 = vunpack.c.l.b16 %v2778
        %v2850 = vunpack.c.l.b16 %v2779
        %v2851 = vunpack.c.l.b16 %v2780
        %v2852 = vunpack.c.l.b16 %v2781
        %v2853 = vunpack.c.l.b16 %v2782
        %v2854 = vunpack.c.l.b16 %v2783
        %v2855 = vunpack.c.l.b16 %v2784
        %v2856 = vunpack.c.l.b16 %v2785
        %v2857 = vunpack.c.l.b16 %v2786
        %v2858 = vunpack.c.l.b16 %v2787
        %v2859 = vunpack.c.l.b16 %v2788
        %v2860 = vunpack.c.l.b16 %v2789
        %v2861 = vunpack.c.l.b16 %v2790
        %v2862 = vunpack.c.l.b16 %v2791
        %v2863 = vunpack.c.l.b16 %v2792
        %v2864 = vunpack.c.l.b16 %v2793
        %v2865 = vunpack.c.l.b16 %v2794
        %v2866 = vunpack.c.l.b16 %v2795
        %v2867 = vunpack.c.l.b16 %v2796
        %v2868 = vunpack.c.l.b16 %v2797
        %v2869 = vunpack.c.l.b16 %v2798
        %v2870 = vunpack.c.l.b16 %v2799
        %v2871 = vunpack.c.l.b16 %v2800
        %v2872 = vunpack.c.l.b16 %v2801
        %v2873 = vpack.c.b16 %v2842, %v2841
        %v2874 = vpack.c.b16 %v2844, %v2843
        %v2875 = vpack.c.b16 %v2846, %v2845
        %v2876 = vpack.c.b16 %v2848, %v2847
        %v2877 = vpack.c.b16 %v2850, %v2849
        %v2878 = vpack.c.b16 %v2852, %v2851
        %v2879 = vpack.c.b16 %v2854, %v2853
        %v2880 = vpack.c.b16 %v2856, %v2855
        %v2881 = vpack.c.b16 %v2858, %v2857
        %v2882 = vpack.c.b16 %v2860, %v2859
        %v2883 = vpack.c.b16 %v2862, %v2861
        %v2884 = vpack.c.b16 %v2864, %v2863
        %v2885 = vpack.c.b16 %v2866, %v2865
        %v2886 = vpack.c.b16 %v2868, %v2867
        %v2887 = vpack.c.b16 %v2870, %v2869
        %v2888 = vpack.c.b16 %v2872, %v2871
        %2905 = vmatprep.subr.bf16.mxu0 0
        %2906 = vmatpush1.bf16.msra.mxu0 %v2873
        %2907 = vmatprep.subr.bf16.mxu0 0
        %2908 = vmatpush1.bf16.msra.mxu0 %v2874
        %2909 = vmatprep.subr.bf16.mxu0 0
        %2910 = vmatpush1.bf16.msra.mxu0 %v2875
        %2911 = vmatprep.subr.bf16.mxu0 0
        %2912 = vmatpush1.bf16.msra.mxu0 %v2876
        %2913 = vmatprep.subr.bf16.mxu0 0
        %2914 = vmatpush1.bf16.msra.mxu0 %v2877
        %2915 = vmatprep.subr.bf16.mxu0 0
        %2916 = vmatpush1.bf16.msra.mxu0 %v2878
        %2917 = vmatprep.subr.bf16.mxu0 0
        %2918 = vmatpush1.bf16.msra.mxu0 %v2879
        %2919 = vmatprep.subr.bf16.mxu0 0
        %2920 = vmatpush1.bf16.msra.mxu0 %v2880
        %2921 = vmatprep.subr.bf16.mxu0 0
        %2922 = vmatpush1.bf16.msra.mxu0 %v2881
        %2923 = vmatprep.subr.bf16.mxu0 0
        %2924 = vmatpush1.bf16.msra.mxu0 %v2882
        %2925 = vmatprep.subr.bf16.mxu0 0
        %2926 = vmatpush1.bf16.msra.mxu0 %v2883
        %2927 = vmatprep.subr.bf16.mxu0 0
        %2928 = vmatpush1.bf16.msra.mxu0 %v2884
        %2929 = vmatprep.subr.bf16.mxu0 0
        %2930 = vmatpush1.bf16.msra.mxu0 %v2885
        %2931 = vmatprep.subr.bf16.mxu0 0
        %2932 = vmatpush1.bf16.msra.mxu0 %v2886
        %2933 = vmatprep.subr.bf16.mxu0 0
        %2934 = vmatpush1.bf16.msra.mxu0 %v2887
        %2935 = vmatprep.subr.bf16.mxu0 0
        %2936 = vmatpush1.bf16.msra.mxu0 %v2888
        %2937 = vmatprep.mubr.bf16.mxu0 %v703
        %2938 = vmatmul.mubr.bf16.gmra.mrb[0].mxu0 %v2754
        %v2939 = vpop.f32.mrb[0].mxu0
        %v2940 = vadd.f32 %v2807, %v2939
        %v2941 = vpop.f32.mrb[0].mxu0
        %v2942 = vpop.f32.mrb[0].mxu0
        %v2943 = vadd.f32 %v2807, %v2942
        %v2944 = vpop.f32.mrb[0].mxu0
        %2945 = vmatprep.mubr.bf16.mxu0 %v704
        %2946 = vmatmul.mubr.bf16.gmra.mrb[0].mxu0 %v2755
        %v2947 = vpop.f32.mrb[0].mxu0
        %v2948 = vadd.f32 %v2807, %v2947
        %v2949 = vpop.f32.mrb[0].mxu0
        %v2950 = vpop.f32.mrb[0].mxu0
        %v2951 = vadd.f32 %v2807, %v2950
        %v2952 = vpop.f32.mrb[0].mxu0
        %2953 = vmatprep.mubr.bf16.mxu0 %v705
        %2954 = vmatmul.mubr.bf16.gmra.mrb[0].mxu0 %v2756
        %v2955 = vpop.f32.mrb[0].mxu0
        %v2956 = vadd.f32 %v2807, %v2955
        %v2957 = vpop.f32.mrb[0].mxu0
        %v2958 = vpop.f32.mrb[0].mxu0
        %v2959 = vadd.f32 %v2807, %v2958
        %v2960 = vpop.f32.mrb[0].mxu0
        %2961 = vmatprep.mubr.bf16.mxu0 %v706
        %2962 = vmatmul.mubr.bf16.gmra.mrb[0].mxu0 %v2757
        %v2963 = vpop.f32.mrb[0].mxu0
        %v2964 = vadd.f32 %v2807, %v2963
        %v2965 = vpop.f32.mrb[0].mxu0
        %v2966 = vpop.f32.mrb[0].mxu0
        %v2967 = vadd.f32 %v2807, %v2966
        %v2968 = vpop.f32.mrb[0].mxu0
        %2969 = vmatprep.mubr.bf16.mxu0 %v707
        %2970 = vmatmul.mubr.bf16.gmra.mrb[0].mxu0 %v2758
        %v2971 = vpop.f32.mrb[0].mxu0
        %v2972 = vadd.f32 %v2807, %v2971
        %v2973 = vpop.f32.mrb[0].mxu0
        %v2974 = vpop.f32.mrb[0].mxu0
        %v2975 = vadd.f32 %v2807, %v2974
        %v2976 = vpop.f32.mrb[0].mxu0
        %2977 = vmatprep.mubr.bf16.mxu0 %v708
        %2978 = vmatmul.mubr.bf16.gmra.mrb[0].mxu0 %v2759
        %v2979 = vpop.f32.mrb[0].mxu0
        %v2980 = vadd.f32 %v2807, %v2979
        %v2981 = vpop.f32.mrb[0].mxu0
        %v2982 = vpop.f32.mrb[0].mxu0
        %v2983 = vadd.f32 %v2807, %v2982
        %v2984 = vpop.f32.mrb[0].mxu0
        %2985 = vmatprep.mubr.bf16.mxu0 %v709
        %2986 = vmatmul.mubr.bf16.gmra.mrb[0].mxu0 %v2760
        %v2987 = vpop.f32.mrb[0].mxu0
        %v2988 = vadd.f32 %v2807, %v2987
        %v2989 = vpop.f32.mrb[0].mxu0
        %v2990 = vpop.f32.mrb[0].mxu0
        %v2991 = vadd.f32 %v2807, %v2990
        %v2992 = vpop.f32.mrb[0].mxu0
        %2993 = vmatprep.mubr.bf16.mxu0 %v710
        %2994 = vmatmul.mubr.bf16.gmra.mrb[0].mxu0 %v2761
        %v2995 = vpop.f32.mrb[0].mxu0
        %v2996 = vadd.f32 %v2807, %v2995
        %v2997 = vpop.f32.mrb[0].mxu0
        %v2998 = vpop.f32.mrb[0].mxu0
        %v2999 = vadd.f32 %v2807, %v2998
        %v3000 = vpop.f32.mrb[0].mxu0
        %3001 = vmatprep.mubr.bf16.mxu0 %v711
        %3002 = vmatmul.mubr.bf16.gmra.mrb[0].mxu0 %v2762
        %v3003 = vpop.f32.mrb[0].mxu0
        %v3004 = vadd.f32 %v2807, %v3003
        %v3005 = vpop.f32.mrb[0].mxu0
        %v3006 = vpop.f32.mrb[0].mxu0
        %v3007 = vadd.f32 %v2807, %v3006
        %v3008 = vpop.f32.mrb[0].mxu0
        %3009 = vmatprep.mubr.bf16.mxu0 %v712
        %3010 = vmatmul.mubr.bf16.gmra.mrb[0].mxu0 %v2763
        %v3011 = vpop.f32.mrb[0].mxu0
        %v3012 = vadd.f32 %v2807, %v3011
        %v3013 = vpop.f32.mrb[0].mxu0
        %v3014 = vpop.f32.mrb[0].mxu0
        %v3015 = vadd.f32 %v2807, %v3014
        %v3016 = vpop.f32.mrb[0].mxu0
        %3017 = vmatprep.mubr.bf16.mxu0 %v713
        %3018 = vmatmul.mubr.bf16.gmra.mrb[0].mxu0 %v2764
        %v3019 = vpop.f32.mrb[0].mxu0
        %v3020 = vadd.f32 %v2807, %v3019
        %v3021 = vpop.f32.mrb[0].mxu0
        %v3022 = vpop.f32.mrb[0].mxu0
        %v3023 = vadd.f32 %v2807, %v3022
        %v3024 = vpop.f32.mrb[0].mxu0
        %3025 = vmatprep.mubr.bf16.mxu0 %v714
        %3026 = vmatmul.mubr.bf16.gmra.mrb[0].mxu0 %v2765
        %v3027 = vpop.f32.mrb[0].mxu0
        %v3028 = vadd.f32 %v2807, %v3027
        %v3029 = vpop.f32.mrb[0].mxu0
        %v3030 = vpop.f32.mrb[0].mxu0
        %v3031 = vadd.f32 %v2807, %v3030
        %v3032 = vpop.f32.mrb[0].mxu0
        %3033 = vmatprep.mubr.bf16.mxu0 %v715
        %3034 = vmatmul.mubr.bf16.gmra.mrb[0].mxu0 %v2766
        %v3035 = vpop.f32.mrb[0].mxu0
        %v3036 = vadd.f32 %v2807, %v3035
        %v3037 = vpop.f32.mrb[0].mxu0
        %v3038 = vpop.f32.mrb[0].mxu0
        %v3039 = vadd.f32 %v2807, %v3038
        %v3040 = vpop.f32.mrb[0].mxu0
        %3041 = vmatprep.mubr.bf16.mxu0 %v716
        %3042 = vmatmul.mubr.bf16.gmra.mrb[0].mxu0 %v2767
        %v3043 = vpop.f32.mrb[0].mxu0
        %v3044 = vadd.f32 %v2807, %v3043
        %v3045 = vpop.f32.mrb[0].mxu0
        %v3046 = vpop.f32.mrb[0].mxu0
        %v3047 = vadd.f32 %v2807, %v3046
        %v3048 = vpop.f32.mrb[0].mxu0
        %3049 = vmatprep.mubr.bf16.mxu0 %v717
        %3050 = vmatmul.mubr.bf16.gmra.mrb[0].mxu0 %v2768
        %v3051 = vpop.f32.mrb[0].mxu0
        %v3052 = vadd.f32 %v2807, %v3051
        %v3053 = vpop.f32.mrb[0].mxu0
        %v3054 = vpop.f32.mrb[0].mxu0
        %v3055 = vadd.f32 %v2807, %v3054
        %v3056 = vpop.f32.mrb[0].mxu0
        %3057 = vmatprep.mubr.bf16.mxu0 %v718
        %3058 = vmatmul.mubr.bf16.gmra.mrb[0].mxu0 %v2769
        %v3059 = vpop.f32.mrb[0].mxu0
        %v3060 = vadd.f32 %v2807, %v3059
        %v3061 = vpop.f32.mrb[0].mxu0
        %v3062 = vpop.f32.mrb[0].mxu0
        %v3063 = vadd.f32 %v2807, %v3062
        %v3064 = vpop.f32.mrb[0].mxu0
        %3065 = vdwg.mxu0
        %v3066 = vmax.f32 %v2940, 0.0
        %v3067 = vmax.f32 %v2943, 0.0
        %v3068 = vmax.f32 %v2948, 0.0
        %v3069 = vmax.f32 %v2951, 0.0
        %v3070 = vmax.f32 %v2956, 0.0
        %v3071 = vmax.f32 %v2959, 0.0
        %v3072 = vmax.f32 %v2964, 0.0
        %v3073 = vmax.f32 %v2967, 0.0
        %v3074 = vmax.f32 %v2972, 0.0
        %v3075 = vmax.f32 %v2975, 0.0
        %v3076 = vmax.f32 %v2980, 0.0
        %v3077 = vmax.f32 %v2983, 0.0
        %v3078 = vmax.f32 %v2988, 0.0
        %v3079 = vmax.f32 %v2991, 0.0
        %v3080 = vmax.f32 %v2996, 0.0
        %v3081 = vmax.f32 %v2999, 0.0
        %v3082 = vmax.f32 %v3004, 0.0
        %v3083 = vmax.f32 %v3007, 0.0
        %v3084 = vmax.f32 %v3012, 0.0
        %v3085 = vmax.f32 %v3015, 0.0
        %v3086 = vmax.f32 %v3020, 0.0
        %v3087 = vmax.f32 %v3023, 0.0
        %v3088 = vmax.f32 %v3028, 0.0
        %v3089 = vmax.f32 %v3031, 0.0
        %v3090 = vmax.f32 %v3036, 0.0
        %v3091 = vmax.f32 %v3039, 0.0
        %v3092 = vmax.f32 %v3044, 0.0
        %v3093 = vmax.f32 %v3047, 0.0
        %v3094 = vmax.f32 %v3052, 0.0
        %v3095 = vmax.f32 %v3055, 0.0
        %v3096 = vmax.f32 %v3060, 0.0
        %v3097 = vmax.f32 %v3063, 0.0
        %v3098 = vpack.c.bf16 %v3067, %v3066
        %v3099 = vpack.c.bf16 %v3069, %v3068
        %v3100 = vpack.c.bf16 %v3071, %v3070
        %v3101 = vpack.c.bf16 %v3073, %v3072
        %v3102 = vpack.c.bf16 %v3075, %v3074
        %v3103 = vpack.c.bf16 %v3077, %v3076
        %v3104 = vpack.c.bf16 %v3079, %v3078
        %v3105 = vpack.c.bf16 %v3081, %v3080
        %v3106 = vpack.c.bf16 %v3083, %v3082
        %v3107 = vpack.c.bf16 %v3085, %v3084
        %v3108 = vpack.c.bf16 %v3087, %v3086
        %v3109 = vpack.c.bf16 %v3089, %v3088
        %v3110 = vpack.c.bf16 %v3091, %v3090
        %v3111 = vpack.c.bf16 %v3093, %v3092
        %v3112 = vpack.c.bf16 %v3095, %v3094
        %v3113 = vpack.c.bf16 %v3097, %v3096
        %v3130 = vunpack.c.l.b16 %v3098
        %v3131 = vunpack.c.h.b16 %v3098
        %v3132 = vunpack.c.l.b16 %v3099
        %v3133 = vunpack.c.h.b16 %v3099
        %v3134 = vunpack.c.l.b16 %v3100
        %v3135 = vunpack.c.h.b16 %v3100
        %v3136 = vunpack.c.l.b16 %v3101
        %v3137 = vunpack.c.h.b16 %v3101
        %v3138 = vunpack.c.l.b16 %v3102
        %v3139 = vunpack.c.h.b16 %v3102
        %v3140 = vunpack.c.l.b16 %v3103
        %v3141 = vunpack.c.h.b16 %v3103
        %v3142 = vunpack.c.l.b16 %v3104
        %v3143 = vunpack.c.h.b16 %v3104
        %v3144 = vunpack.c.l.b16 %v3105
        %v3145 = vunpack.c.h.b16 %v3105
        %v3146 = vunpack.c.l.b16 %v3106
        %v3147 = vunpack.c.h.b16 %v3106
        %v3148 = vunpack.c.l.b16 %v3107
        %v3149 = vunpack.c.h.b16 %v3107
        %v3150 = vunpack.c.l.b16 %v3108
        %v3151 = vunpack.c.h.b16 %v3108
        %v3152 = vunpack.c.l.b16 %v3109
        %v3153 = vunpack.c.h.b16 %v3109
        %v3154 = vunpack.c.l.b16 %v3110
        %v3155 = vunpack.c.h.b16 %v3110
        %v3156 = vunpack.c.l.b16 %v3111
        %v3157 = vunpack.c.h.b16 %v3111
        %v3158 = vunpack.c.l.b16 %v3112
        %v3159 = vunpack.c.h.b16 %v3112
        %v3160 = vunpack.c.l.b16 %v3113
        %v3161 = vunpack.c.h.b16 %v3113
        %v3162 = vpack.c.b16 %v3130, %v3130
        %v3163 = vpack.c.b16 %v3131, %v3131
        %v3164 = vpack.c.b16 %v3132, %v3132
        %v3165 = vpack.c.b16 %v3133, %v3133
        %v3166 = vpack.c.b16 %v3134, %v3134
        %v3167 = vpack.c.b16 %v3135, %v3135
        %v3168 = vpack.c.b16 %v3136, %v3136
        %v3169 = vpack.c.b16 %v3137, %v3137
        %v3170 = vpack.c.b16 %v3138, %v3138
        %v3171 = vpack.c.b16 %v3139, %v3139
        %v3172 = vpack.c.b16 %v3140, %v3140
        %v3173 = vpack.c.b16 %v3141, %v3141
        %v3174 = vpack.c.b16 %v3142, %v3142
        %v3175 = vpack.c.b16 %v3143, %v3143
        %v3176 = vpack.c.b16 %v3144, %v3144
        %v3177 = vpack.c.b16 %v3145, %v3145
        %v3178 = vpack.c.b16 %v3146, %v3146
        %v3179 = vpack.c.b16 %v3147, %v3147
        %v3180 = vpack.c.b16 %v3148, %v3148
        %v3181 = vpack.c.b16 %v3149, %v3149
        %v3182 = vpack.c.b16 %v3150, %v3150
        %v3183 = vpack.c.b16 %v3151, %v3151
        %v3184 = vpack.c.b16 %v3152, %v3152
        %v3185 = vpack.c.b16 %v3153, %v3153
        %v3186 = vpack.c.b16 %v3154, %v3154
        %v3187 = vpack.c.b16 %v3155, %v3155
        %v3188 = vpack.c.b16 %v3156, %v3156
        %v3189 = vpack.c.b16 %v3157, %v3157
        %v3190 = vpack.c.b16 %v3158, %v3158
        %v3191 = vpack.c.b16 %v3159, %v3159
        %v3192 = vpack.c.b16 %v3160, %v3160
        %v3193 = vpack.c.b16 %v3161, %v3161
        %3226 = vst [vmem:[%s559] sm:$0xf] %v3162
        %3227 = vst [vmem:[%s559 + $0x4] sm:$0xf] %v3163
        %3228 = vst [vmem:[%s559 + $0x8] sm:$0xf] %v3164
        %3229 = vst [vmem:[%s559 + $0xc] sm:$0xf] %v3165
        %3230 = vst [vmem:[%s559 + $0x10] sm:$0xf] %v3166
        %3231 = vst [vmem:[%s559 + $0x14] sm:$0xf] %v3167
        %3232 = vst [vmem:[%s559 + $0x18] sm:$0xf] %v3168
        %3233 = vst [vmem:[%s559 + $0x1c] sm:$0xf] %v3169
        %3234 = vst [vmem:[%s559 + $0x20] sm:$0xf] %v3170
        %3235 = vst [vmem:[%s559 + $0x24] sm:$0xf] %v3171
        %3236 = vst [vmem:[%s559 + $0x28] sm:$0xf] %v3172
        %3237 = vst [vmem:[%s559 + $0x2c] sm:$0xf] %v3173
        %3238 = vst [vmem:[%s559 + $0x30] sm:$0xf] %v3174
        %3239 = vst [vmem:[%s559 + $0x34] sm:$0xf] %v3175
        %3240 = vst [vmem:[%s559 + $0x38] sm:$0xf] %v3176
        %3241 = vst [vmem:[%s559 + $0x3c] sm:$0xf] %v3177
        %3242 = vst [vmem:[%s559 + $0x40] sm:$0xf] %v3178
        %3243 = vst [vmem:[%s559 + $0x44] sm:$0xf] %v3179
        %3244 = vst [vmem:[%s559 + $0x48] sm:$0xf] %v3180
        %3245 = vst [vmem:[%s559 + $0x4c] sm:$0xf] %v3181
        %3246 = vst [vmem:[%s559 + $0x50] sm:$0xf] %v3182
        %3247 = vst [vmem:[%s559 + $0x54] sm:$0xf] %v3183
        %3248 = vst [vmem:[%s559 + $0x58] sm:$0xf] %v3184
        %3249 = vst [vmem:[%s559 + $0x5c] sm:$0xf] %v3185
        %3250 = vst [vmem:[%s559 + $0x60] sm:$0xf] %v3186
        %3251 = vst [vmem:[%s559 + $0x64] sm:$0xf] %v3187
        %3252 = vst [vmem:[%s559 + $0x68] sm:$0xf] %v3188
        %3253 = vst [vmem:[%s559 + $0x6c] sm:$0xf] %v3189
        %3254 = vst [vmem:[%s559 + $0x70] sm:$0xf] %v3190
        %3255 = vst [vmem:[%s559 + $0x74] sm:$0xf] %v3191
        %3256 = vst [vmem:[%s559 + $0x78] sm:$0xf] %v3192
        %3257 = vst [vmem:[%s559 + $0x7c] sm:$0xf] %v3193
        %s3258 = sand.u32 %s280, 1
        %s3259 = scalar_lea.sflag [#allocation4], %s3258
        %s3260 = sand.u32 %s280, 1
        %s3261 = smul.addr %s3260, 128
        %s3262 = scalar_lea.vmem [#allocation17], %s3261
        // Predicated region
        $region93: #{tpu_custom_call.1} parent=55 // pred_check
          %p3263 = pneg %p290
        $region94: #{tpu_custom_call.1} parent=55 // pred_check_branch
          %3265 = sbr.rel (%p3263) target = $region96
        $region95: #{tpu_custom_call.1} parent=55 // pred_region
          %s3266 = smul.u32 16, %s37
          %s3268 = ssub.s32 2048, 2048
          %3269 = vsyncadd %s3259, %s3268
          %s3270 = smul.addr %s3266, 2
          %s3271 = smul.addr %s36, 32
          %s3272 = sadd.s32 %s3270, %s3271
          %s3273 = smul.addr %s3272, 64
          %s3274 = scalar_lea.hbm %s9, %s3273
          %s3275 = sshll.u32 %s3262, 4
          %s3276 = int_to_ptr.vmem [resolvable:$true] %s3275
          %3281 = dma.vmem_to_hbm [thread:$0]  %s3276, 2048, %s3274, %s3259, 64, 64, 4
        $region96: #{tpu_custom_call.1} parent=55 // pred_fallthru
          _
      $region56: #{tpu_custom_call.1} parent=5 // pred_fallthru
        _
      %p3282 = scmp.le.s32.totalorder 2, %s27
      // Predicated region
      $region97: #{tpu_custom_call.1} parent=5 // pred_check
        %p3283 = pneg %p3282
      $region98: #{tpu_custom_call.1} parent=5 // pred_check_branch
        %3285 = sbr.rel (%p3283) target = $region100
      $region99: #{tpu_custom_call.1} parent=5 // pred_region
        %s3286 = ssub.s32 %s27, 2
        // Predicated region
        $region101: #{tpu_custom_call.1} parent=99 // pred_check
          %p3287 = pneg %p296
        $region102: #{tpu_custom_call.1} parent=99 // pred_check_branch
          %3289 = sbr.rel (%p3287) target = $region104
        $region103: #{tpu_custom_call.1} parent=99 // pred_region
          %s3290 = sand.u32 %s281, 1
          %s3291 = scalar_lea.sflag [#allocation4], %s3290
          %s3292 = sand.u32 %s281, 1
          %s3293 = smul.addr %s3292, 128
          %s3294 = scalar_lea.vmem [#allocation17], %s3293
          %3295 = dma.done %s3291, 2048
        $region104: #{tpu_custom_call.1} parent=99 // pred_fallthru
          _
      $region100: #{tpu_custom_call.1} parent=5 // pred_fallthru
        _
    $region6: #{tpu_custom_call.1} parent=1 // loop_footer
      %s31 = sadd.s32 1, %s27
    $region7: #{tpu_custom_call.1} parent=1 // loop_footer_branch
      %26 = sbr.rel target = $region3
    $region8: #{tpu_custom_call.1} parent=1 // loop_exit
      _
    %3296 = vsyncpa [#allocation3], 1
    %s3297 = scalar_lea.sflag [#allocation3], 1
    %3298 = vsyncpa %s3297, 1
    %3299 = vsyncpa [#allocation6], 1
    %s3300 = scalar_lea.sflag [#allocation6], 1
    %3301 = vsyncpa %s3300, 1
    %3302 = vsyncpa [#allocation9], 1
    %3303 = vsyncpa [#allocation12], 1
    %3304 = vsyncpa [#allocation15], 1
    %3305 = vsyncpa [#allocation4], 1
    %s3306 = scalar_lea.sflag [#allocation4], 1
    %3307 = vsyncpa %s3306, 1

</llo_original>
